<compile_context>
chip_gen: v5e
topology: v5e:2x2
jax: 0.10.0
libtpu: 0.0.40
codegen_flags: <defaults>
</compile_context>

<pallas_src>
import jax
import jax.numpy as jnp
from jax.experimental import pallas as pl
from jax.experimental.pallas import tpu as pltpu

# ---- configuration mirroring DeepFM.__init__ ----
B = 256               # batch (multiple of TILE_B)
TILE_B = 128          # rows per grid step (MXU-native on v5e, one tile per TC on v7x at B=256)
NUM_DIM = 1024        # concatenated number-feature width (hardcoded in the module)
E = 16                # embedding_size
N_CAT = 3             # number of category features
N_SEQ = 2             # number of sequence features
SEQ_LEN = 8
F = N_CAT + N_SEQ     # total embedded fields
FE = F * E            # 80: lane-dense flattened embedding width
LIN_HIDDEN = 256      # linear_hidden = [256]
HID1, HID2 = 96, 32   # hidden_layers = [96, 32]
OUT = 1               # num_classes==2 and sigmoid -> output_size = 1
VOCAB = 50


def deepfm_kernel(x_num_ref, emb_ref,
                  w_lin_ref, b_lin_ref,
                  wd1n_ref, wd1e_ref, bd1_ref,
                  wd2_ref, bd2_ref,
                  wf_lin_ref, wf_deep_ref,
                  wf_fm_ref, bf_ref,
                  out_ref):
    x_bf = x_num_ref[...]                                     # (T, 1024) bf16 (producer feeds bf16)
    emb_flat = emb_ref[...]                                   # (T, 80) f32, pooled + lane-concat

    # ---- FM second-order interaction ----
    # Field views are free static lane slices of emb_flat; only one copy lives in vregs.
    # 0.5 * [ (sum_f v_f)^2 - sum_f ||v_f||^2 ] summed over the emb dim.
    s = emb_flat[:, 0:E]
    for f in range(1, F):
        s = s + emb_flat[:, f * E:(f + 1) * E]                # cheap VPU filler
    fm_out = 0.5 * (jnp.sum(s * s, axis=1, keepdims=True)
                    - jnp.sum(emb_flat * emb_flat, axis=1, keepdims=True))   # (T, 1)

    # ---- linear branch: MLP(1024 -> 256), ReLU (bf16 operands, f32 accumulate) ----
    lin = jnp.dot(x_bf, w_lin_ref[...],
                  preferred_element_type=jnp.float32) + b_lin_ref[...]
    lin = jnp.maximum(lin, 0.0)                               # (T, 256)

    # ---- deep branch: MLP(1024 + F*E -> 96 -> 32), ReLU ----
    # concat(number_inputs + [emb_flat]) @ Wd1 expressed as one big bf16 K=1024 dot plus one
    # fused K=80 dot over all fields.
    h1 = (jnp.dot(x_bf, wd1n_ref[...], preferred_element_type=jnp.float32)
          + jnp.dot(emb_flat, wd1e_ref[...], preferred_element_type=jnp.float32)
          + bd1_ref[...])
    h1 = jnp.maximum(h1, 0.0)                                 # (T, 96)
    h2 = jnp.dot(h1, wd2_ref[...],
                 preferred_element_type=jnp.float32) + bd2_ref[...]
    h2 = jnp.maximum(h2, 0.0)                                 # (T, 32)

    # ---- final layer over concat([linear, fm, deep]) + sigmoid ----
    # N=1 matmuls replaced by VPU multiply + lane (XLU) reductions; wf_fm / bias are SMEM scalars.
    logit = (jnp.sum(lin * wf_lin_ref[...], axis=1, keepdims=True)
             + fm_out * wf_fm_ref[0]
             + jnp.sum(h2 * wf_deep_ref[...], axis=1, keepdims=True)
             + bf_ref[0])                                     # (T, 1)
    out_ref[...] = jax.nn.sigmoid(logit)


def init_params(key):
    ks = jax.random.split(key, 16)
    s = 0.05
    p = {
        "cat_tables": [jax.random.normal(ks[i], (VOCAB, E), jnp.float32) * s
                       for i in range(N_CAT)],
        "seq_tables": [jax.random.normal(ks[3 + i], (VOCAB, E), jnp.float32) * s
                       for i in range(N_SEQ)],
        # big weights stored bf16 (HBM-bound kernel: halves weight bytes, MXU-native)
        "w_lin":  (jax.random.normal(ks[5], (NUM_DIM, LIN_HIDDEN), jnp.float32) * s
                   ).astype(jnp.bfloat16),
        "b_lin":  jnp.zeros((1, LIN_HIDDEN), jnp.float32),
        "wd1n":   (jax.random.normal(ks[6], (NUM_DIM, HID1), jnp.float32) * s
                   ).astype(jnp.bfloat16),
        # embedding part of the first deep layer, pre-flattened to (F*E, HID1)
        "wd1e":   jax.random.normal(ks[7], (FE, HID1), jnp.float32) * s,
        "bd1":    jnp.zeros((1, HID1), jnp.float32),
        "wd2":    jax.random.normal(ks[8], (HID1, HID2), jnp.float32) * s,
        "bd2":    jnp.zeros((1, HID2), jnp.float32),
        # final-layer weights stored as row vectors for the VPU+reduce path
        "wf_lin": jax.random.normal(ks[9], (1, LIN_HIDDEN), jnp.float32) * s,
        "wf_deep": jax.random.normal(ks[11], (1, HID2), jnp.float32) * s,
        # SMEM scalars
        "wf_fm":  jax.random.normal(ks[10], (1,), jnp.float32) * s,
        "bf":     jnp.zeros((1,), jnp.float32),
    }
    return p


def build_emb_flat(cat_ids, seq_ids, params):
    """Glue: embedding gathers + sequence max-pool + lane concat (fused by XLA).

    Produces a single lane-dense (B, F*E) slab so the kernel sees no sub-(8,128) blocks
    and needs no in-kernel lane-concat."""
    cat_emb = [params["cat_tables"][f][cat_ids[:, f]] for f in range(N_CAT)]          # (B, E) x3
    seq_pooled = [jnp.max(params["seq_tables"][f][seq_ids[:, f]], axis=1)
                  for f in range(N_SEQ)]                                              # (B, E) x2
    return jnp.concatenate(cat_emb + seq_pooled, axis=1)                              # (B, 80)


def deepfm_forward(x_num, cat_ids, seq_ids, params):
    assert x_num.shape[0] % TILE_B == 0, "batch must be a multiple of TILE_B"
    batch = x_num.shape[0]

    # feed the kernel bf16 activations (its MXU path is bf16 anyway)
    x_num_bf = x_num if x_num.dtype == jnp.bfloat16 else x_num.astype(jnp.bfloat16)
    emb_flat = build_emb_flat(cat_ids, seq_ids, params)        # (B, 80) f32, lane-dense

    inputs = (x_num_bf, emb_flat,
              params["w_lin"], params["b_lin"],
              params["wd1n"], params["wd1e"], params["bd1"],
              params["wd2"], params["bd2"],
              params["wf_lin"], params["wf_deep"],
              params["wf_fm"], params["bf"])

    def resident(arr):
        # weights: same block every grid step -> stay resident in VMEM (no re-DMA per tile)
        nd = arr.ndim
        return pl.BlockSpec(arr.shape, lambda i, _nd=nd: (0,) * _nd)

    smem_scalar = pl.BlockSpec((1,), lambda i: (0,),
                               memory_space=pltpu.MemorySpace.SMEM)

    in_specs = [
        pl.BlockSpec((TILE_B, NUM_DIM), lambda i: (i, 0)),     # x_num (row-tiled, bf16)
        pl.BlockSpec((TILE_B, FE), lambda i: (i, 0)),          # emb_flat (row-tiled, lane-dense)
        resident(params["w_lin"]), resident(params["b_lin"]),
        resident(params["wd1n"]), resident(params["wd1e"]), resident(params["bd1"]),
        resident(params["wd2"]), resident(params["bd2"]),
        resident(params["wf_lin"]), resident(params["wf_deep"]),
        smem_scalar, smem_scalar,
    ]
    out_specs = pl.BlockSpec((TILE_B, OUT), lambda i: (i, 0))

    flops = 2 * batch * (NUM_DIM * LIN_HIDDEN + NUM_DIM * HID1 + FE * HID1
                         + HID1 * HID2 + LIN_HIDDEN + HID2 + FE)
    bytes_accessed = int(sum(a.size * jnp.dtype(a.dtype).itemsize for a in inputs)
                         + batch * OUT * 4)

    return pl.pallas_call(
        deepfm_kernel,
        out_shape=jax.ShapeDtypeStruct((batch, OUT), jnp.float32),
        grid=(batch // TILE_B,),
        in_specs=in_specs,
        out_specs=out_specs,
        compiler_params=pltpu.CompilerParams(
            dimension_semantics=("parallel",)),                # v7x: 2 TCs split the batch tiles
        cost_estimate=pl.CostEstimate(
            flops=flops, transcendentals=batch, bytes_accessed=bytes_accessed),
    )(*inputs)


def deepfm_reference(x_num, cat_ids, seq_ids, params):
    """Pure-JAX reference mirroring the PyTorch forward (same bf16 storage / f32 accumulation)."""
    cat_emb = jnp.stack(
        [params["cat_tables"][f][cat_ids[:, f]] for f in range(N_CAT)], axis=1)
    seq_emb = jnp.stack(
        [params["seq_tables"][f][seq_ids[:, f]] for f in range(N_SEQ)], axis=1)
    seq_pooled = jnp.max(seq_emb, axis=2)                      # (B, N_SEQ, E)
    emb = jnp.concatenate([cat_emb, seq_pooled], axis=1)       # (B, F, E)

    fm = 0.5 * jnp.sum(jnp.square(jnp.sum(emb, axis=1)) - jnp.sum(jnp.square(emb), axis=1),
                       axis=1, keepdims=True)

    x_bf = x_num.astype(jnp.bfloat16)
    lin = jnp.maximum(
        jnp.dot(x_bf, params["w_lin"], preferred_element_type=jnp.float32)
        + params["b_lin"], 0.0)

    emb_flat = emb.reshape(emb.shape[0], FE)
    h1 = jnp.maximum(
        jnp.dot(x_bf, params["wd1n"], preferred_element_type=jnp.float32)
        + jnp.dot(emb_flat, params["wd1e"], preferred_element_type=jnp.float32)
        + params["bd1"], 0.0)
    h2 = jnp.maximum(
        jnp.dot(h1, params["wd2"], preferred_element_type=jnp.float32) + params["bd2"], 0.0)

    logit = (jnp.sum(lin * params["wf_lin"], axis=1, keepdims=True)
             + fm * params["wf_fm"][0]
             + jnp.sum(h2 * params["wf_deep"], axis=1, keepdims=True)
             + params["bf"][0])
    return jax.nn.sigmoid(logit)


if __name__ == "__main__":
    key = jax.random.PRNGKey(0)
    k_par, k_num, k_cat, k_seq = jax.random.split(key, 4)

    params = init_params(k_par)
    x_num = jax.random.normal(k_num, (B, NUM_DIM), jnp.float32)
    cat_ids = jax.random.randint(k_cat, (B, N_CAT), 0, VOCAB)
    seq_ids = jax.random.randint(k_seq, (B, N_SEQ, SEQ_LEN), 0, VOCAB)

    out = deepfm_forward(x_num, cat_ids, seq_ids, params)
    out = jax.block_until_ready(out)

    ref = deepfm_reference(x_num, cat_ids, seq_ids, params)
    assert out.shape == (B, OUT)
    assert jnp.allclose(out, ref, rtol=5e-3, atol=1e-3), (out, ref)

    print("KERNEL_OK")
</pallas_src>

<mosaic_0001>
module attributes {stable_mosaic.version = 11 : i64} {
  func.func @deepfm_kernel(%arg0: i32, %arg1: memref<128x1024xbf16, #tpu.memory_space<vmem>>, %arg2: memref<128x80xf32, #tpu.memory_space<vmem>>, %arg3: memref<1024x256xbf16, #tpu.memory_space<vmem>>, %arg4: memref<1x256xf32, #tpu.memory_space<vmem>>, %arg5: memref<1024x96xbf16, #tpu.memory_space<vmem>>, %arg6: memref<80x96xf32, #tpu.memory_space<vmem>>, %arg7: memref<1x96xf32, #tpu.memory_space<vmem>>, %arg8: memref<96x32xf32, #tpu.memory_space<vmem>>, %arg9: memref<1x32xf32, #tpu.memory_space<vmem>>, %arg10: memref<1x256xf32, #tpu.memory_space<vmem>>, %arg11: memref<1x32xf32, #tpu.memory_space<vmem>>, %arg12: memref<1xf32, #tpu.memory_space<smem>>, %arg13: memref<1xf32, #tpu.memory_space<smem>>, %arg14: memref<128x1xf32, #tpu.memory_space<vmem>>) attributes {dimension_semantics = [#tpu.dimension_semantics<parallel>], iteration_bounds = array<i64: 2>, scalar_prefetch = 0 : i64, scratch_operands = 0 : i64, tpu.core_type = #tpu.core_type<tc>, window_params = [{transform_indices = @transform_0, window_bounds = array<i64: 128, 1024>}, {transform_indices = @transform_1, window_bounds = array<i64: 128, 80>}, {pipeline_mode = #tpu.pipeline_mode<synchronous>, transform_indices = @transform_2, window_bounds = array<i64: 1024, 256>}, {pipeline_mode = #tpu.pipeline_mode<synchronous>, transform_indices = @transform_3, window_bounds = array<i64: 1, 256>}, {pipeline_mode = #tpu.pipeline_mode<synchronous>, transform_indices = @transform_4, window_bounds = array<i64: 1024, 96>}, {pipeline_mode = #tpu.pipeline_mode<synchronous>, transform_indices = @transform_5, window_bounds = array<i64: 80, 96>}, {pipeline_mode = #tpu.pipeline_mode<synchronous>, transform_indices = @transform_6, window_bounds = array<i64: 1, 96>}, {pipeline_mode = #tpu.pipeline_mode<synchronous>, transform_indices = @transform_7, window_bounds = array<i64: 96, 32>}, {pipeline_mode = #tpu.pipeline_mode<synchronous>, transform_indices = @transform_8, window_bounds = array<i64: 1, 32>}, {pipeline_mode = #tpu.pipeline_mode<synchronous>, transform_indices = @transform_9, window_bounds = array<i64: 1, 256>}, {pipeline_mode = #tpu.pipeline_mode<synchronous>, transform_indices = @transform_10, window_bounds = array<i64: 1, 32>}, {transform_indices = @transform_11, window_bounds = array<i64: 1>}, {transform_indices = @transform_12, window_bounds = array<i64: 1>}, {transform_indices = @transform_13, window_bounds = array<i64: 128, 1>}]} {
    %c0 = arith.constant 0 : index
    %c0_0 = arith.constant 0 : index
    %0 = vector.load %arg1[%c0, %c0_0] : memref<128x1024xbf16, #tpu.memory_space<vmem>>, vector<128x1024xbf16>
    %c0_1 = arith.constant 0 : index
    %c0_2 = arith.constant 0 : index
    %1 = vector.load %arg2[%c0_1, %c0_2] : memref<128x80xf32, #tpu.memory_space<vmem>>, vector<128x80xf32>
    %2 = vector.extract_strided_slice %1 {offsets = [0, 0], sizes = [128, 16], strides = [1, 1]} : vector<128x80xf32> to vector<128x16xf32>
    %3 = vector.extract_strided_slice %1 {offsets = [0, 16], sizes = [128, 16], strides = [1, 1]} : vector<128x80xf32> to vector<128x16xf32>
    %4 = arith.addf %2, %3 : vector<128x16xf32>
    %5 = vector.extract_strided_slice %1 {offsets = [0, 32], sizes = [128, 16], strides = [1, 1]} : vector<128x80xf32> to vector<128x16xf32>
    %6 = arith.addf %4, %5 : vector<128x16xf32>
    %7 = vector.extract_strided_slice %1 {offsets = [0, 48], sizes = [128, 16], strides = [1, 1]} : vector<128x80xf32> to vector<128x16xf32>
    %8 = arith.addf %6, %7 : vector<128x16xf32>
    %9 = vector.extract_strided_slice %1 {offsets = [0, 64], sizes = [128, 16], strides = [1, 1]} : vector<128x80xf32> to vector<128x16xf32>
    %10 = arith.addf %8, %9 : vector<128x16xf32>
    %11 = arith.mulf %10, %10 : vector<128x16xf32>
    %cst = arith.constant dense<0.000000e+00> : vector<128xf32>
    %12 = vector.multi_reduction <add>, %11, %cst [1] : vector<128x16xf32> to vector<128xf32>
    %13 = vector.shape_cast %12 : vector<128xf32> to vector<128x1xf32>
    %14 = arith.mulf %1, %1 : vector<128x80xf32>
    %cst_3 = arith.constant dense<0.000000e+00> : vector<128xf32>
    %15 = vector.multi_reduction <add>, %14, %cst_3 [1] : vector<128x80xf32> to vector<128xf32>
    %16 = vector.shape_cast %15 : vector<128xf32> to vector<128x1xf32>
    %17 = arith.subf %13, %16 : vector<128x1xf32>
    %cst_4 = arith.constant 5.000000e-01 : f32
    %18 = vector.broadcast %cst_4 : f32 to vector<128x1xf32>
    %19 = arith.mulf %18, %17 : vector<128x1xf32>
    %c0_5 = arith.constant 0 : index
    %c0_6 = arith.constant 0 : index
    %20 = vector.load %arg3[%c0_5, %c0_6] : memref<1024x256xbf16, #tpu.memory_space<vmem>>, vector<1024x256xbf16>
    %cst_7 = arith.constant dense<0.000000e+00> : vector<128x256xf32>
    %21 = tpu.matmul %0, %20, %cst_7 {dimension_numbers = #tpu.dot_dimension_numbers<[1], [0], [0], [1], [0, 0, 1, 1], [], []>} : vector<128x1024xbf16>, vector<1024x256xbf16>, vector<128x256xf32> -> vector<128x256xf32>
    %c0_8 = arith.constant 0 : index
    %c0_9 = arith.constant 0 : index
    %22 = vector.load %arg4[%c0_8, %c0_9] : memref<1x256xf32, #tpu.memory_space<vmem>>, vector<1x256xf32>
    %23 = vector.broadcast %22 : vector<1x256xf32> to vector<128x256xf32>
    %24 = arith.addf %21, %23 : vector<128x256xf32>
    %cst_10 = arith.constant 0.000000e+00 : f32
    %25 = vector.broadcast %cst_10 : f32 to vector<128x256xf32>
    %26 = arith.maximumf %24, %25 : vector<128x256xf32>
    %c0_11 = arith.constant 0 : index
    %c0_12 = arith.constant 0 : index
    %27 = vector.load %arg5[%c0_11, %c0_12] : memref<1024x96xbf16, #tpu.memory_space<vmem>>, vector<1024x96xbf16>
    %cst_13 = arith.constant dense<0.000000e+00> : vector<128x96xf32>
    %28 = tpu.matmul %0, %27, %cst_13 {dimension_numbers = #tpu.dot_dimension_numbers<[1], [0], [0], [1], [0, 0, 1, 1], [], []>} : vector<128x1024xbf16>, vector<1024x96xbf16>, vector<128x96xf32> -> vector<128x96xf32>
    %c0_14 = arith.constant 0 : index
    %c0_15 = arith.constant 0 : index
    %29 = vector.load %arg6[%c0_14, %c0_15] : memref<80x96xf32, #tpu.memory_space<vmem>>, vector<80x96xf32>
    %cst_16 = arith.constant dense<0.000000e+00> : vector<128x96xf32>
    %30 = tpu.matmul %1, %29, %cst_16 {dimension_numbers = #tpu.dot_dimension_numbers<[1], [0], [0], [1], [0, 0, 1, 1], [], []>} : vector<128x80xf32>, vector<80x96xf32>, vector<128x96xf32> -> vector<128x96xf32>
    %31 = arith.addf %28, %30 : vector<128x96xf32>
    %c0_17 = arith.constant 0 : index
    %c0_18 = arith.constant 0 : index
    %32 = vector.load %arg7[%c0_17, %c0_18] : memref<1x96xf32, #tpu.memory_space<vmem>>, vector<1x96xf32>
    %33 = vector.broadcast %32 : vector<1x96xf32> to vector<128x96xf32>
    %34 = arith.addf %31, %33 : vector<128x96xf32>
    %cst_19 = arith.constant 0.000000e+00 : f32
    %35 = vector.broadcast %cst_19 : f32 to vector<128x96xf32>
    %36 = arith.maximumf %34, %35 : vector<128x96xf32>
    %c0_20 = arith.constant 0 : index
    %c0_21 = arith.constant 0 : index
    %37 = vector.load %arg8[%c0_20, %c0_21] : memref<96x32xf32, #tpu.memory_space<vmem>>, vector<96x32xf32>
    %cst_22 = arith.constant dense<0.000000e+00> : vector<128x32xf32>
    %38 = tpu.matmul %36, %37, %cst_22 {dimension_numbers = #tpu.dot_dimension_numbers<[1], [0], [0], [1], [0, 0, 1, 1], [], []>} : vector<128x96xf32>, vector<96x32xf32>, vector<128x32xf32> -> vector<128x32xf32>
    %c0_23 = arith.constant 0 : index
    %c0_24 = arith.constant 0 : index
    %39 = vector.load %arg9[%c0_23, %c0_24] : memref<1x32xf32, #tpu.memory_space<vmem>>, vector<1x32xf32>
    %40 = vector.broadcast %39 : vector<1x32xf32> to vector<128x32xf32>
    %41 = arith.addf %38, %40 : vector<128x32xf32>
    %cst_25 = arith.constant 0.000000e+00 : f32
    %42 = vector.broadcast %cst_25 : f32 to vector<128x32xf32>
    %43 = arith.maximumf %41, %42 : vector<128x32xf32>
    %c0_26 = arith.constant 0 : index
    %c0_27 = arith.constant 0 : index
    %44 = vector.load %arg10[%c0_26, %c0_27] : memref<1x256xf32, #tpu.memory_space<vmem>>, vector<1x256xf32>
    %45 = vector.broadcast %44 : vector<1x256xf32> to vector<128x256xf32>
    %46 = arith.mulf %26, %45 : vector<128x256xf32>
    %cst_28 = arith.constant dense<0.000000e+00> : vector<128xf32>
    %47 = vector.multi_reduction <add>, %46, %cst_28 [1] : vector<128x256xf32> to vector<128xf32>
    %48 = vector.shape_cast %47 : vector<128xf32> to vector<128x1xf32>
    %c0_29 = arith.constant 0 : index
    %49 = memref.load %arg12[%c0_29] : memref<1xf32, #tpu.memory_space<smem>>
    %50 = vector.broadcast %49 : f32 to vector<128x1xf32>
    %51 = arith.mulf %19, %50 : vector<128x1xf32>
    %52 = arith.addf %48, %51 : vector<128x1xf32>
    %c0_30 = arith.constant 0 : index
    %c0_31 = arith.constant 0 : index
    %53 = vector.load %arg11[%c0_30, %c0_31] : memref<1x32xf32, #tpu.memory_space<vmem>>, vector<1x32xf32>
    %54 = vector.broadcast %53 : vector<1x32xf32> to vector<128x32xf32>
    %55 = arith.mulf %43, %54 : vector<128x32xf32>
    %cst_32 = arith.constant dense<0.000000e+00> : vector<128xf32>
    %56 = vector.multi_reduction <add>, %55, %cst_32 [1] : vector<128x32xf32> to vector<128xf32>
    %57 = vector.shape_cast %56 : vector<128xf32> to vector<128x1xf32>
    %58 = arith.addf %52, %57 : vector<128x1xf32>
    %c0_33 = arith.constant 0 : index
    %59 = memref.load %arg13[%c0_33] : memref<1xf32, #tpu.memory_space<smem>>
    %60 = vector.broadcast %59 : f32 to vector<128x1xf32>
    %61 = arith.addf %58, %60 : vector<128x1xf32>
    %62 = arith.negf %61 : vector<128x1xf32>
    %63 = math.exp %62 : vector<128x1xf32>
    %cst_34 = arith.constant 1.000000e+00 : f32
    %64 = vector.broadcast %cst_34 : f32 to vector<128x1xf32>
    %65 = arith.addf %64, %63 : vector<128x1xf32>
    %66 = arith.divf %64, %65 : vector<128x1xf32>
    %c0_35 = arith.constant 0 : index
    %c0_36 = arith.constant 0 : index
    %67 = vector.load %arg14[%c0_35, %c0_36] : memref<128x1xf32, #tpu.memory_space<vmem>>, vector<128x1xf32>
    tpu.vector_store %arg14[%c0_35, %c0_36], %66 {strides = array<i32>} : memref<128x1xf32, #tpu.memory_space<vmem>>, vector<128x1xf32>,
    return
  }
  func.func @transform_0(%arg0: i32) -> (i32, i32) {
    %c0_i32 = arith.constant 0 : i32
    %c0_i32_0 = arith.constant 0 : i32
    return %arg0, %c0_i32 : i32, i32
  }
  func.func @transform_1(%arg0: i32) -> (i32, i32) {
    %c0_i32 = arith.constant 0 : i32
    %c0_i32_0 = arith.constant 0 : i32
    return %arg0, %c0_i32 : i32, i32
  }
  func.func @transform_2(%arg0: i32) -> (i32, i32) {
    %c0_i32 = arith.constant 0 : i32
    %c0_i32_0 = arith.constant 0 : i32
    %c0_i32_1 = arith.constant 0 : i32
    return %c0_i32, %c0_i32_0 : i32, i32
  }
  func.func @transform_3(%arg0: i32) -> (i32, i32) {
    %c0_i32 = arith.constant 0 : i32
    %c0_i32_0 = arith.constant 0 : i32
    %c0_i32_1 = arith.constant 0 : i32
    return %c0_i32, %c0_i32_0 : i32, i32
  }
  func.func @transform_4(%arg0: i32) -> (i32, i32) {
    %c0_i32 = arith.constant 0 : i32
    %c0_i32_0 = arith.constant 0 : i32
    %c0_i32_1 = arith.constant 0 : i32
    return %c0_i32, %c0_i32_0 : i32, i32
  }
  func.func @transform_5(%arg0: i32) -> (i32, i32) {
    %c0_i32 = arith.constant 0 : i32
    %c0_i32_0 = arith.constant 0 : i32
    %c0_i32_1 = arith.constant 0 : i32
    return %c0_i32, %c0_i32_0 : i32, i32
  }
  func.func @transform_6(%arg0: i32) -> (i32, i32) {
    %c0_i32 = arith.constant 0 : i32
    %c0_i32_0 = arith.constant 0 : i32
    %c0_i32_1 = arith.constant 0 : i32
    return %c0_i32, %c0_i32_0 : i32, i32
  }
  func.func @transform_7(%arg0: i32) -> (i32, i32) {
    %c0_i32 = arith.constant 0 : i32
    %c0_i32_0 = arith.constant 0 : i32
    %c0_i32_1 = arith.constant 0 : i32
    return %c0_i32, %c0_i32_0 : i32, i32
  }
  func.func @transform_8(%arg0: i32) -> (i32, i32) {
    %c0_i32 = arith.constant 0 : i32
    %c0_i32_0 = arith.constant 0 : i32
    %c0_i32_1 = arith.constant 0 : i32
    return %c0_i32, %c0_i32_0 : i32, i32
  }
  func.func @transform_9(%arg0: i32) -> (i32, i32) {
    %c0_i32 = arith.constant 0 : i32
    %c0_i32_0 = arith.constant 0 : i32
    %c0_i32_1 = arith.constant 0 : i32
    return %c0_i32, %c0_i32_0 : i32, i32
  }
  func.func @transform_10(%arg0: i32) -> (i32, i32) {
    %c0_i32 = arith.constant 0 : i32
    %c0_i32_0 = arith.constant 0 : i32
    %c0_i32_1 = arith.constant 0 : i32
    return %c0_i32, %c0_i32_0 : i32, i32
  }
  func.func @transform_11(%arg0: i32) -> i32 {
    %c0_i32 = arith.constant 0 : i32
    %c0_i32_0 = arith.constant 0 : i32
    return %c0_i32 : i32
  }
  func.func @transform_12(%arg0: i32) -> i32 {
    %c0_i32 = arith.constant 0 : i32
    %c0_i32_0 = arith.constant 0 : i32
    return %c0_i32 : i32
  }
  func.func @transform_13(%arg0: i32) -> (i32, i32) {
    %c0_i32 = arith.constant 0 : i32
    %c0_i32_0 = arith.constant 0 : i32
    return %arg0, %c0_i32 : i32, i32
  }
}

</mosaic_0001>

<llo_original>
// kernel: tpu_custom_call.1
$region0: #{tpu_custom_call.1}
  #allocation0 [shape = 'u32[]', space=smem, size = 0x4, offset = 0x4, fixed_abs, tag = 'smem constant byte address 0x4 - core index']
  #allocation1 [shape = 'u32[72,128]{1,0:T(1,128)}', space=vmem, size = 0x9000, scoped, tag = 'internal scratch']
  #allocation2 [shape = 'f32[1]{0:T(128)S(6)}', space=smem, size = 0x200, scoped, tag = 'scoped memory for tpu_custom_call.1']
  #allocation3 [shape = 'f32[1]{0:T(128)S(6)}', space=smem, size = 0x200, scoped, tag = 'scoped memory for tpu_custom_call.1']
  %s0 = inlined_call_operand.vmem [shape: bf16[256,1024], index: 0, kind: input, shape index: {}]
  %s1 = inlined_call_operand.vmem [shape: f32[256,80], index: 1, kind: input, shape index: {}]
  %s2 = inlined_call_operand.hbm [shape: bf16[1024,256], index: 2, kind: input, shape index: {}]
  %s3 = inlined_call_operand.vmem [shape: f32[1,256], index: 3, kind: input, shape index: {}]
  %s4 = inlined_call_operand.vmem [shape: bf16[1024,96], index: 4, kind: input, shape index: {}]
  %s5 = inlined_call_operand.hbm [shape: f32[80,96], index: 5, kind: input, shape index: {}]
  %s6 = inlined_call_operand.vmem [shape: f32[1,96], index: 6, kind: input, shape index: {}]
  %s7 = inlined_call_operand.vmem [shape: f32[96,32], index: 7, kind: input, shape index: {}]
  %s8 = inlined_call_operand.vmem [shape: f32[1,32], index: 8, kind: input, shape index: {}]
  %s9 = inlined_call_operand.vmem [shape: f32[1,256], index: 9, kind: input, shape index: {}]
  %s10 = inlined_call_operand.vmem [shape: f32[1,32], index: 10, kind: input, shape index: {}]
  %s11 = inlined_call_operand.<no memory space> [shape: f32[1], index: 11, kind: input, shape index: {}]
  %s12 = inlined_call_operand.<no memory space> [shape: f32[1], index: 12, kind: input, shape index: {}]
  %s13 = inlined_call_operand.vmem [shape: f32[256,1], index: 13, kind: output, shape index: {}]
  %s14 = sld [smem:[#allocation0]]
  $region93: #{tpu_custom_call.1} parent=0
    _
  %s16 = ssub.s32 1, %s14
  %s17 = scalar_select 0, %s16, %s14
  %18 = sst [smem:[#allocation2]] %s11
  %19 = sst [smem:[#allocation3]] %s12
  $region1: #{tpu_custom_call.1} parent=0
    #allocation4 [shape = 'u8[524288]{0}', space=vmem, size = 0x80000, scoped, tag = 'input window, operand 2, single buffered']
    #allocation5 [shape = 's32[2]{0}', space=sflag, size = 0x8, scoped, tag = 'scoped memory for tpu_custom_call.1']
    #allocation6 [shape = 'u8[40960]{0}', space=vmem, size = 0xa000, scoped, tag = 'input window, operand 5, single buffered']
    #allocation7 [shape = 's32[1]{0}', space=sflag, size = 0x4, scoped, tag = 'scoped memory for tpu_custom_call.1']
    %20 = vsyncpa [#allocation5], 0
    %21 = vsyncpa [#allocation7], 0
    loop: start=0, step=1, limit=4
    $region2: #{tpu_custom_call.1} parent=1 // loop_pre_header
      _
    $region3: #{tpu_custom_call.1} parent=1 // loop_header
      %s23 = sphi 0, %s27
      %p24 = scmp.ge.s32.totalorder %s23, 4
      %s33 = sphi 0, %s35
      %s36 = sphi 0, %s33
      %s37 = sphi 0, %s36
      %s53 = sphi 0, %s37
      %s59 = sphi 0, %s61
      %s62 = sphi 0, %s59
      %s63 = sphi 0, %s62
      %s79 = sphi 0, %s63
      %s83 = sphi 0, %s83
      %s85 = sphi 0, %s83
      %s86 = sphi 0, %s85
      %s100 = sphi 0, %s86
      %s104 = sphi 0, %s104
      %s106 = sphi 0, %s104
      %s107 = sphi 0, %s106
      %s121 = sphi 0, %s107
      %s125 = sphi 0, %s125
      %s127 = sphi 0, %s125
      %s128 = sphi 0, %s127
      %s142 = sphi 0, %s128
      %s146 = sphi 0, %s146
      %s148 = sphi 0, %s146
      %s149 = sphi 0, %s148
      %s163 = sphi 0, %s149
      %s167 = sphi 0, %s167
      %s169 = sphi 0, %s167
      %s170 = sphi 0, %s169
      %s184 = sphi 0, %s170
      %s188 = sphi 0, %s188
      %s190 = sphi 0, %s188
      %s191 = sphi 0, %s190
      %s205 = sphi 0, %s191
      %s209 = sphi 0, %s209
      %s211 = sphi 0, %s209
      %s212 = sphi 0, %s211
      %s226 = sphi 0, %s212
      %s230 = sphi 0, %s230
      %s232 = sphi 0, %s230
      %s233 = sphi 0, %s232
      %s247 = sphi 0, %s233
      %s251 = sphi 0, %s251
      %s253 = sphi 0, %s251
      %s254 = sphi 0, %s253
      %s268 = sphi 0, %s254
      %s272 = sphi 0, %s272
      %s274 = sphi 0, %s272
      %s275 = sphi 0, %s274
      %s289 = sphi 0, %s275
      %s293 = sphi 0, %s293
      %s295 = sphi 0, %s293
      %s296 = sphi 0, %s295
      %s310 = sphi 0, %s296
      %s316 = sphi 0, %s318
      %s319 = sphi 0, %s316
      %s320 = sphi 0, %s319
      %s336 = sphi 0, %s320
    $region4: #{tpu_custom_call.1} parent=1 // loop_header_branch
      %26 = sbr.rel (%p24) target = $region8
    $region5: #{tpu_custom_call.1} parent=1 // loop_body
      %s28 = ssub.s32 %s23, 1
      %s29 = ssub.s32 %s23, 2
      %s30 = sadd.s32 %s23, 1
      %s31 = ssub.s32 %s23, %s30
      %p32 = scmp.eq.s32.totalorder %s31, 0
      %s34 = sadd.s32 %s33, 1
      %s35 = scalar_select %p32, %s33, %s34
      %p38 = pneg %p32
      %p39 = scmp.eq.s32.totalorder %s23, 1
      %p40 = por %p38, %p39
      %p41 = scmp.ne.s32.totalorder %s33, %s36
      %p42 = scmp.eq.s32.totalorder %s23, 0
      %p43 = por %p41, %p42
      %p44 = scmp.ne.s32.totalorder %s33, %s36
      %p45 = scmp.eq.s32.totalorder %s28, 1
      %p46 = por %p44, %p45
      %p47 = scmp.ne.s32.totalorder %s36, %s37
      %p48 = scmp.eq.s32.totalorder %s28, 0
      %p49 = por %p47, %p48
      %p50 = scmp.ne.s32.totalorder %s36, %s37
      %p51 = scmp.eq.s32.totalorder %s29, 1
      %p52 = por %p50, %p51
      %p54 = scmp.ne.s32.totalorder %s37, %s53
      %p55 = scmp.eq.s32.totalorder %s29, 0
      %p56 = por %p54, %p55
      %s57 = ssub.s32 %s23, %s30
      %p58 = scmp.eq.s32.totalorder %s57, 0
      %s60 = sadd.s32 %s59, 1
      %s61 = scalar_select %p58, %s59, %s60
      %p64 = pneg %p58
      %p65 = scmp.eq.s32.totalorder %s23, 1
      %p66 = por %p64, %p65
      %p67 = scmp.ne.s32.totalorder %s59, %s62
      %p68 = scmp.eq.s32.totalorder %s23, 0
      %p69 = por %p67, %p68
      %p70 = scmp.ne.s32.totalorder %s59, %s62
      %p71 = scmp.eq.s32.totalorder %s28, 1
      %p72 = por %p70, %p71
      %p73 = scmp.ne.s32.totalorder %s62, %s63
      %p74 = scmp.eq.s32.totalorder %s28, 0
      %p75 = por %p73, %p74
      %p76 = scmp.ne.s32.totalorder %s62, %s63
      %p77 = scmp.eq.s32.totalorder %s29, 1
      %p78 = por %p76, %p77
      %p80 = scmp.ne.s32.totalorder %s63, %s79
      %p81 = scmp.eq.s32.totalorder %s29, 0
      %p82 = por %p80, %p81
      %s84 = sadd.s32 %s83, 1
      %p87 = scmp.eq.s32.totalorder %s23, 1
      %p88 = scmp.ne.s32.totalorder %s83, %s85
      %p89 = scmp.eq.s32.totalorder %s23, 0
      %p90 = por %p88, %p89
      %p91 = scmp.ne.s32.totalorder %s83, %s85
      %p92 = scmp.eq.s32.totalorder %s28, 1
      %p93 = por %p91, %p92
      %p94 = scmp.ne.s32.totalorder %s85, %s86
      %p95 = scmp.eq.s32.totalorder %s28, 0
      %p96 = por %p94, %p95
      %p97 = scmp.ne.s32.totalorder %s85, %s86
      %p98 = scmp.eq.s32.totalorder %s29, 1
      %p99 = por %p97, %p98
      %p101 = scmp.ne.s32.totalorder %s86, %s100
      %p102 = scmp.eq.s32.totalorder %s29, 0
      %p103 = por %p101, %p102
      %s105 = sadd.s32 %s104, 1
      %p108 = scmp.eq.s32.totalorder %s23, 1
      %p109 = scmp.ne.s32.totalorder %s104, %s106
      %p110 = scmp.eq.s32.totalorder %s23, 0
      %p111 = por %p109, %p110
      %p112 = scmp.ne.s32.totalorder %s104, %s106
      %p113 = scmp.eq.s32.totalorder %s28, 1
      %p114 = por %p112, %p113
      %p115 = scmp.ne.s32.totalorder %s106, %s107
      %p116 = scmp.eq.s32.totalorder %s28, 0
      %p117 = por %p115, %p116
      %p118 = scmp.ne.s32.totalorder %s106, %s107
      %p119 = scmp.eq.s32.totalorder %s29, 1
      %p120 = por %p118, %p119
      %p122 = scmp.ne.s32.totalorder %s107, %s121
      %p123 = scmp.eq.s32.totalorder %s29, 0
      %p124 = por %p122, %p123
      %s126 = sadd.s32 %s125, 1
      %p129 = scmp.eq.s32.totalorder %s23, 1
      %p130 = scmp.ne.s32.totalorder %s125, %s127
      %p131 = scmp.eq.s32.totalorder %s23, 0
      %p132 = por %p130, %p131
      %p133 = scmp.ne.s32.totalorder %s125, %s127
      %p134 = scmp.eq.s32.totalorder %s28, 1
      %p135 = por %p133, %p134
      %p136 = scmp.ne.s32.totalorder %s127, %s128
      %p137 = scmp.eq.s32.totalorder %s28, 0
      %p138 = por %p136, %p137
      %p139 = scmp.ne.s32.totalorder %s127, %s128
      %p140 = scmp.eq.s32.totalorder %s29, 1
      %p141 = por %p139, %p140
      %p143 = scmp.ne.s32.totalorder %s128, %s142
      %p144 = scmp.eq.s32.totalorder %s29, 0
      %p145 = por %p143, %p144
      %s147 = sadd.s32 %s146, 1
      %p150 = scmp.eq.s32.totalorder %s23, 1
      %p151 = scmp.ne.s32.totalorder %s146, %s148
      %p152 = scmp.eq.s32.totalorder %s23, 0
      %p153 = por %p151, %p152
      %p154 = scmp.ne.s32.totalorder %s146, %s148
      %p155 = scmp.eq.s32.totalorder %s28, 1
      %p156 = por %p154, %p155
      %p157 = scmp.ne.s32.totalorder %s148, %s149
      %p158 = scmp.eq.s32.totalorder %s28, 0
      %p159 = por %p157, %p158
      %p160 = scmp.ne.s32.totalorder %s148, %s149
      %p161 = scmp.eq.s32.totalorder %s29, 1
      %p162 = por %p160, %p161
      %p164 = scmp.ne.s32.totalorder %s149, %s163
      %p165 = scmp.eq.s32.totalorder %s29, 0
      %p166 = por %p164, %p165
      %s168 = sadd.s32 %s167, 1
      %p171 = scmp.eq.s32.totalorder %s23, 1
      %p172 = scmp.ne.s32.totalorder %s167, %s169
      %p173 = scmp.eq.s32.totalorder %s23, 0
      %p174 = por %p172, %p173
      %p175 = scmp.ne.s32.totalorder %s167, %s169
      %p176 = scmp.eq.s32.totalorder %s28, 1
      %p177 = por %p175, %p176
      %p178 = scmp.ne.s32.totalorder %s169, %s170
      %p179 = scmp.eq.s32.totalorder %s28, 0
      %p180 = por %p178, %p179
      %p181 = scmp.ne.s32.totalorder %s169, %s170
      %p182 = scmp.eq.s32.totalorder %s29, 1
      %p183 = por %p181, %p182
      %p185 = scmp.ne.s32.totalorder %s170, %s184
      %p186 = scmp.eq.s32.totalorder %s29, 0
      %p187 = por %p185, %p186
      %s189 = sadd.s32 %s188, 1
      %p192 = scmp.eq.s32.totalorder %s23, 1
      %p193 = scmp.ne.s32.totalorder %s188, %s190
      %p194 = scmp.eq.s32.totalorder %s23, 0
      %p195 = por %p193, %p194
      %p196 = scmp.ne.s32.totalorder %s188, %s190
      %p197 = scmp.eq.s32.totalorder %s28, 1
      %p198 = por %p196, %p197
      %p199 = scmp.ne.s32.totalorder %s190, %s191
      %p200 = scmp.eq.s32.totalorder %s28, 0
      %p201 = por %p199, %p200
      %p202 = scmp.ne.s32.totalorder %s190, %s191
      %p203 = scmp.eq.s32.totalorder %s29, 1
      %p204 = por %p202, %p203
      %p206 = scmp.ne.s32.totalorder %s191, %s205
      %p207 = scmp.eq.s32.totalorder %s29, 0
      %p208 = por %p206, %p207
      %s210 = sadd.s32 %s209, 1
      %p213 = scmp.eq.s32.totalorder %s23, 1
      %p214 = scmp.ne.s32.totalorder %s209, %s211
      %p215 = scmp.eq.s32.totalorder %s23, 0
      %p216 = por %p214, %p215
      %p217 = scmp.ne.s32.totalorder %s209, %s211
      %p218 = scmp.eq.s32.totalorder %s28, 1
      %p219 = por %p217, %p218
      %p220 = scmp.ne.s32.totalorder %s211, %s212
      %p221 = scmp.eq.s32.totalorder %s28, 0
      %p222 = por %p220, %p221
      %p223 = scmp.ne.s32.totalorder %s211, %s212
      %p224 = scmp.eq.s32.totalorder %s29, 1
      %p225 = por %p223, %p224
      %p227 = scmp.ne.s32.totalorder %s212, %s226
      %p228 = scmp.eq.s32.totalorder %s29, 0
      %p229 = por %p227, %p228
      %s231 = sadd.s32 %s230, 1
      %p234 = scmp.eq.s32.totalorder %s23, 1
      %p235 = scmp.ne.s32.totalorder %s230, %s232
      %p236 = scmp.eq.s32.totalorder %s23, 0
      %p237 = por %p235, %p236
      %p238 = scmp.ne.s32.totalorder %s230, %s232
      %p239 = scmp.eq.s32.totalorder %s28, 1
      %p240 = por %p238, %p239
      %p241 = scmp.ne.s32.totalorder %s232, %s233
      %p242 = scmp.eq.s32.totalorder %s28, 0
      %p243 = por %p241, %p242
      %p244 = scmp.ne.s32.totalorder %s232, %s233
      %p245 = scmp.eq.s32.totalorder %s29, 1
      %p246 = por %p244, %p245
      %p248 = scmp.ne.s32.totalorder %s233, %s247
      %p249 = scmp.eq.s32.totalorder %s29, 0
      %p250 = por %p248, %p249
      %s252 = sadd.s32 %s251, 1
      %p255 = scmp.eq.s32.totalorder %s23, 1
      %p256 = scmp.ne.s32.totalorder %s251, %s253
      %p257 = scmp.eq.s32.totalorder %s23, 0
      %p258 = por %p256, %p257
      %p259 = scmp.ne.s32.totalorder %s251, %s253
      %p260 = scmp.eq.s32.totalorder %s28, 1
      %p261 = por %p259, %p260
      %p262 = scmp.ne.s32.totalorder %s253, %s254
      %p263 = scmp.eq.s32.totalorder %s28, 0
      %p264 = por %p262, %p263
      %p265 = scmp.ne.s32.totalorder %s253, %s254
      %p266 = scmp.eq.s32.totalorder %s29, 1
      %p267 = por %p265, %p266
      %p269 = scmp.ne.s32.totalorder %s254, %s268
      %p270 = scmp.eq.s32.totalorder %s29, 0
      %p271 = por %p269, %p270
      %s273 = sadd.s32 %s272, 1
      %p276 = scmp.eq.s32.totalorder %s23, 1
      %p277 = scmp.ne.s32.totalorder %s272, %s274
      %p278 = scmp.eq.s32.totalorder %s23, 0
      %p279 = por %p277, %p278
      %p280 = scmp.ne.s32.totalorder %s272, %s274
      %p281 = scmp.eq.s32.totalorder %s28, 1
      %p282 = por %p280, %p281
      %p283 = scmp.ne.s32.totalorder %s274, %s275
      %p284 = scmp.eq.s32.totalorder %s28, 0
      %p285 = por %p283, %p284
      %p286 = scmp.ne.s32.totalorder %s274, %s275
      %p287 = scmp.eq.s32.totalorder %s29, 1
      %p288 = por %p286, %p287
      %p290 = scmp.ne.s32.totalorder %s275, %s289
      %p291 = scmp.eq.s32.totalorder %s29, 0
      %p292 = por %p290, %p291
      %s294 = sadd.s32 %s293, 1
      %p297 = scmp.eq.s32.totalorder %s23, 1
      %p298 = scmp.ne.s32.totalorder %s293, %s295
      %p299 = scmp.eq.s32.totalorder %s23, 0
      %p300 = por %p298, %p299
      %p301 = scmp.ne.s32.totalorder %s293, %s295
      %p302 = scmp.eq.s32.totalorder %s28, 1
      %p303 = por %p301, %p302
      %p304 = scmp.ne.s32.totalorder %s295, %s296
      %p305 = scmp.eq.s32.totalorder %s28, 0
      %p306 = por %p304, %p305
      %p307 = scmp.ne.s32.totalorder %s295, %s296
      %p308 = scmp.eq.s32.totalorder %s29, 1
      %p309 = por %p307, %p308
      %p311 = scmp.ne.s32.totalorder %s296, %s310
      %p312 = scmp.eq.s32.totalorder %s29, 0
      %p313 = por %p311, %p312
      %s314 = ssub.s32 %s23, %s30
      %p315 = scmp.eq.s32.totalorder %s314, 0
      %s317 = sadd.s32 %s316, 1
      %s318 = scalar_select %p315, %s316, %s317
      %p321 = pneg %p315
      %p322 = scmp.eq.s32.totalorder %s23, 1
      %p323 = por %p321, %p322
      %p324 = scmp.ne.s32.totalorder %s316, %s319
      %p325 = scmp.eq.s32.totalorder %s23, 0
      %p326 = por %p324, %p325
      %p327 = scmp.ne.s32.totalorder %s316, %s319
      %p328 = scmp.eq.s32.totalorder %s28, 1
      %p329 = por %p327, %p328
      %p330 = scmp.ne.s32.totalorder %s319, %s320
      %p331 = scmp.eq.s32.totalorder %s28, 0
      %p332 = por %p330, %p331
      %p333 = scmp.ne.s32.totalorder %s319, %s320
      %p334 = scmp.eq.s32.totalorder %s29, 1
      %p335 = por %p333, %p334
      %p337 = scmp.ne.s32.totalorder %s320, %s336
      %p338 = scmp.eq.s32.totalorder %s29, 0
      %p339 = por %p337, %p338
      %p340 = scmp.le.s32.totalorder 1, %s23
      %p341 = scmp.lt.s32.totalorder %s23, 3
      %p342 = pnand %p340, %p341
      %p343 = pneg %p342
      // Predicated region
      $region9: #{tpu_custom_call.1} parent=5 // pred_check
        _
      $region10: #{tpu_custom_call.1} parent=5 // pred_check_branch
        %345 = sbr.rel (%p342) target = $region12
      $region11: #{tpu_custom_call.1} parent=5 // pred_region
        %s346 = ssub.s32 %s23, 1
        // Predicated region
        $region13: #{tpu_custom_call.1} parent=11 // pred_check
          %p347 = pneg %p96
        $region14: #{tpu_custom_call.1} parent=11 // pred_check_branch
          %349 = sbr.rel (%p347) target = $region16
        $region15: #{tpu_custom_call.1} parent=11 // pred_region
          %351 = vsyncadd [#allocation5], 0
          %s352 = sshll.u32 %s2, 4
          %s353 = int_to_ptr.hbm [resolvable:$true] %s352
          %s354 = sshll.u32 [#allocation4], 4
          %s355 = int_to_ptr.vmem [resolvable:$true] %s354
          %360 = dma.hbm_to_vmem [thread:$0]  %s353, 16384, %s355, [#allocation5], 128, 128, 8
        $region16: #{tpu_custom_call.1} parent=11 // pred_fallthru
          _
        // Predicated region
        $region17: #{tpu_custom_call.1} parent=11 // pred_check
          %p361 = pneg %p117
        $region18: #{tpu_custom_call.1} parent=11 // pred_check_branch
          %363 = sbr.rel (%p361) target = $region20
        $region19: #{tpu_custom_call.1} parent=11 // pred_region
          _
        $region20: #{tpu_custom_call.1} parent=11 // pred_fallthru
          _
        // Predicated region
        $region21: #{tpu_custom_call.1} parent=11 // pred_check
          %p364 = pneg %p138
        $region22: #{tpu_custom_call.1} parent=11 // pred_check_branch
          %366 = sbr.rel (%p364) target = $region24
        $region23: #{tpu_custom_call.1} parent=11 // pred_region
          _
        $region24: #{tpu_custom_call.1} parent=11 // pred_fallthru
          _
        // Predicated region
        $region25: #{tpu_custom_call.1} parent=11 // pred_check
          %p367 = pneg %p159
        $region26: #{tpu_custom_call.1} parent=11 // pred_check_branch
          %369 = sbr.rel (%p367) target = $region28
        $region27: #{tpu_custom_call.1} parent=11 // pred_region
          %371 = vsyncadd [#allocation7], 0
          %s372 = sshll.u32 %s5, 4
          %s373 = int_to_ptr.hbm [resolvable:$true] %s372
          %s374 = sshll.u32 [#allocation6], 4
          %s375 = int_to_ptr.vmem [resolvable:$true] %s374
          %380 = dma.hbm_to_vmem [thread:$0]  %s373, 1280, %s375, [#allocation7], 128, 128, 8
        $region28: #{tpu_custom_call.1} parent=11 // pred_fallthru
          _
        // Predicated region
        $region29: #{tpu_custom_call.1} parent=11 // pred_check
          %p381 = pneg %p180
        $region30: #{tpu_custom_call.1} parent=11 // pred_check_branch
          %383 = sbr.rel (%p381) target = $region32
        $region31: #{tpu_custom_call.1} parent=11 // pred_region
          _
        $region32: #{tpu_custom_call.1} parent=11 // pred_fallthru
          _
        // Predicated region
        $region33: #{tpu_custom_call.1} parent=11 // pred_check
          %p384 = pneg %p201
        $region34: #{tpu_custom_call.1} parent=11 // pred_check_branch
          %386 = sbr.rel (%p384) target = $region36
        $region35: #{tpu_custom_call.1} parent=11 // pred_region
          _
        $region36: #{tpu_custom_call.1} parent=11 // pred_fallthru
          _
        // Predicated region
        $region37: #{tpu_custom_call.1} parent=11 // pred_check
          %p387 = pneg %p222
        $region38: #{tpu_custom_call.1} parent=11 // pred_check_branch
          %389 = sbr.rel (%p387) target = $region40
        $region39: #{tpu_custom_call.1} parent=11 // pred_region
          _
        $region40: #{tpu_custom_call.1} parent=11 // pred_fallthru
          _
        // Predicated region
        $region41: #{tpu_custom_call.1} parent=11 // pred_check
          %p390 = pneg %p243
        $region42: #{tpu_custom_call.1} parent=11 // pred_check_branch
          %392 = sbr.rel (%p390) target = $region44
        $region43: #{tpu_custom_call.1} parent=11 // pred_region
          _
        $region44: #{tpu_custom_call.1} parent=11 // pred_fallthru
          _
        // Predicated region
        $region45: #{tpu_custom_call.1} parent=11 // pred_check
          %p393 = pneg %p264
        $region46: #{tpu_custom_call.1} parent=11 // pred_check_branch
          %395 = sbr.rel (%p393) target = $region48
        $region47: #{tpu_custom_call.1} parent=11 // pred_region
          _
        $region48: #{tpu_custom_call.1} parent=11 // pred_fallthru
          _
        // Predicated region
        $region49: #{tpu_custom_call.1} parent=11 // pred_check
          %p396 = pneg %p285
        $region50: #{tpu_custom_call.1} parent=11 // pred_check_branch
          %398 = sbr.rel (%p396) target = $region52
        $region51: #{tpu_custom_call.1} parent=11 // pred_region
          _
        $region52: #{tpu_custom_call.1} parent=11 // pred_fallthru
          _
        // Predicated region
        $region53: #{tpu_custom_call.1} parent=11 // pred_check
          %p399 = pneg %p306
        $region54: #{tpu_custom_call.1} parent=11 // pred_check_branch
          %401 = sbr.rel (%p399) target = $region56
        $region55: #{tpu_custom_call.1} parent=11 // pred_region
          _
        $region56: #{tpu_custom_call.1} parent=11 // pred_fallthru
          _
      $region12: #{tpu_custom_call.1} parent=5 // pred_fallthru
        _
      %p402 = scmp.lt.s32.totalorder %s23, 2
      // Predicated region
      $region57: #{tpu_custom_call.1} parent=5 // pred_check
        %p403 = pneg %p402
      $region58: #{tpu_custom_call.1} parent=5 // pred_check_branch
        %405 = sbr.rel (%p403) target = $region60
      $region59: #{tpu_custom_call.1} parent=5 // pred_region
        // Predicated region
        $region61: #{tpu_custom_call.1} parent=59 // pred_check
          %p406 = pneg %p43
        $region62: #{tpu_custom_call.1} parent=59 // pred_check_branch
          %408 = sbr.rel (%p406) target = $region64
        $region63: #{tpu_custom_call.1} parent=59 // pred_region
          %s409 = smul.u32 16, %s23
          %p410 = scmp.lt.s32.totalorder %s409, 31
          %s411 = scalar_select %p410, %s409, 31
          %s412 = smul.addr %s411, 8
          %s413 = smul.addr %s412, 4
          %s414 = scalar_lea.vmem %s0, %s413
          %s415 = smul.u32 16, %s23
        $region64: #{tpu_custom_call.1} parent=59 // pred_fallthru
          _
        // Predicated region
        $region65: #{tpu_custom_call.1} parent=59 // pred_check
          %p416 = pneg %p69
        $region66: #{tpu_custom_call.1} parent=59 // pred_check_branch
          %418 = sbr.rel (%p416) target = $region68
        $region67: #{tpu_custom_call.1} parent=59 // pred_region
          %s419 = smul.u32 16, %s23
          %p420 = scmp.lt.s32.totalorder %s419, 31
          %s421 = scalar_select %p420, %s419, 31
          %s422 = smul.addr %s421, 8
          %s423 = scalar_lea.vmem %s1, %s422
          %s424 = smul.u32 16, %s23
        $region68: #{tpu_custom_call.1} parent=59 // pred_fallthru
          _
      $region60: #{tpu_custom_call.1} parent=5 // pred_fallthru
        _
      %p425 = scmp.le.s32.totalorder 1, %s23
      %p426 = scmp.lt.s32.totalorder %s23, 3
      %p427 = pnand %p425, %p426
      %p428 = pneg %p427
      // Predicated region
      $region69: #{tpu_custom_call.1} parent=5 // pred_check
        _
      $region70: #{tpu_custom_call.1} parent=5 // pred_check_branch
        %430 = sbr.rel (%p427) target = $region72
      $region71: #{tpu_custom_call.1} parent=5 // pred_region
        %s431 = ssub.s32 %s23, 1
        // Predicated region
        $region73: #{tpu_custom_call.1} parent=71 // pred_check
          %p432 = pneg %p96
        $region74: #{tpu_custom_call.1} parent=71 // pred_check_branch
          %434 = sbr.rel (%p432) target = $region76
        $region75: #{tpu_custom_call.1} parent=71 // pred_region
          %436 = dma.done [#allocation5], 16384
        $region76: #{tpu_custom_call.1} parent=71 // pred_fallthru
          _
        // Predicated region
        $region77: #{tpu_custom_call.1} parent=71 // pred_check
          %p437 = pneg %p159
        $region78: #{tpu_custom_call.1} parent=71 // pred_check_branch
          %439 = sbr.rel (%p437) target = $region80
        $region79: #{tpu_custom_call.1} parent=71 // pred_region
          %441 = dma.done [#allocation7], 1280
        $region80: #{tpu_custom_call.1} parent=71 // pred_fallthru
          _
        %s442 = smul.u32 16, %s28
        %p443 = scmp.lt.s32.totalorder %s442, 31
        %s444 = scalar_select %p443, %s442, 31
        %s445 = smul.addr %s444, 8
        %s446 = smul.addr %s445, 4
        %s447 = scalar_lea.vmem %s0, %s446
        %p448 = pneg %p49
        %p449 = pneg %p46
        %s450 = smul.u32 16, %s28
        %p451 = scmp.lt.s32.totalorder %s450, 31
        %s452 = scalar_select %p451, %s450, 31
        %s453 = smul.addr %s452, 8
        %s454 = scalar_lea.vmem %s1, %s453
        %p455 = pneg %p75
        %p456 = pneg %p72
        %p457 = pneg %p96
        %p458 = pneg %p93
        %p459 = pneg %p117
        %p460 = pneg %p114
        %p461 = pneg %p138
        %p462 = pneg %p135
        %p463 = pneg %p159
        %p464 = pneg %p156
        %p465 = pneg %p180
        %p466 = pneg %p177
        %p467 = pneg %p201
        %p468 = pneg %p198
        %p469 = pneg %p222
        %p470 = pneg %p219
        %p471 = pneg %p243
        %p472 = pneg %p240
        %p473 = pneg %p264
        %p474 = pneg %p261
        %p475 = pneg %p285
        %p476 = pneg %p282
        %p477 = pneg %p306
        %p478 = pneg %p303
        %p479 = pneg %p332
        %p480 = pneg %p329
        %s481 = smul.u32 16, %s28
        %p482 = scmp.lt.s32.totalorder %s481, 31
        %s483 = scalar_select %p482, %s481, 31
        %s484 = smul.addr %s483, 8
        %s485 = scalar_lea.vmem %s13, %s484
        %s486 = smul.u32 16, %s28
        %p487 = scmp.lt.s32.totalorder %s486, 31
        %s488 = scalar_select %p487, %s486, 31
        %s489 = smul.addr %s488, 8
        %s490 = smul.addr %s489, 4
        %s491 = scalar_lea.vmem %s0, %s490
        %s492 = smul.u32 16, %s28
        %s493 = smul.u32 16, %s28
        %p494 = scmp.lt.s32.totalorder %s493, 31
        %s495 = scalar_select %p494, %s493, 31
        %s496 = smul.addr %s495, 8
        %s497 = scalar_lea.vmem %s1, %s496
        %s498 = smul.u32 16, %s28
        %s499 = smul.u32 16, %s28
        %p500 = scmp.lt.s32.totalorder %s499, 31
        %s501 = scalar_select %p500, %s499, 31
        %s502 = smul.addr %s501, 8
        %s503 = scalar_lea.vmem %s13, %s502
        %s504 = smul.u32 16, %s28
        %v505 = vld [vmem:[%s491] sm:$0xff]
        %v506 = vld [vmem:[%s491 + $0x8] sm:$0xff]
        %v507 = vld [vmem:[%s491 + $0x10] sm:$0xff]
        %v508 = vld [vmem:[%s491 + $0x18] sm:$0xff]
        %v509 = vld [vmem:[%s491 + $0x20] sm:$0xff]
        %v510 = vld [vmem:[%s491 + $0x28] sm:$0xff]
        %v511 = vld [vmem:[%s491 + $0x30] sm:$0xff]
        %v512 = vld [vmem:[%s491 + $0x38] sm:$0xff]
        %v513 = vld [vmem:[%s491 + $0x40] sm:$0xff]
        %v514 = vld [vmem:[%s491 + $0x48] sm:$0xff]
        %v515 = vld [vmem:[%s491 + $0x50] sm:$0xff]
        %v516 = vld [vmem:[%s491 + $0x58] sm:$0xff]
        %v517 = vld [vmem:[%s491 + $0x60] sm:$0xff]
        %v518 = vld [vmem:[%s491 + $0x68] sm:$0xff]
        %v519 = vld [vmem:[%s491 + $0x70] sm:$0xff]
        %v520 = vld [vmem:[%s491 + $0x78] sm:$0xff]
        %v521 = vld [vmem:[%s491 + $0x80] sm:$0xff]
        %v522 = vld [vmem:[%s491 + $0x88] sm:$0xff]
        %v523 = vld [vmem:[%s491 + $0x90] sm:$0xff]
        %v524 = vld [vmem:[%s491 + $0x98] sm:$0xff]
        %v525 = vld [vmem:[%s491 + $0xa0] sm:$0xff]
        %v526 = vld [vmem:[%s491 + $0xa8] sm:$0xff]
        %v527 = vld [vmem:[%s491 + $0xb0] sm:$0xff]
        %v528 = vld [vmem:[%s491 + $0xb8] sm:$0xff]
        %v529 = vld [vmem:[%s491 + $0xc0] sm:$0xff]
        %v530 = vld [vmem:[%s491 + $0xc8] sm:$0xff]
        %v531 = vld [vmem:[%s491 + $0xd0] sm:$0xff]
        %v532 = vld [vmem:[%s491 + $0xd8] sm:$0xff]
        %v533 = vld [vmem:[%s491 + $0xe0] sm:$0xff]
        %v534 = vld [vmem:[%s491 + $0xe8] sm:$0xff]
        %v535 = vld [vmem:[%s491 + $0xf0] sm:$0xff]
        %v536 = vld [vmem:[%s491 + $0xf8] sm:$0xff]
        %v537 = vld [vmem:[%s491 + $0x100] sm:$0xff]
        %v538 = vld [vmem:[%s491 + $0x108] sm:$0xff]
        %v539 = vld [vmem:[%s491 + $0x110] sm:$0xff]
        %v540 = vld [vmem:[%s491 + $0x118] sm:$0xff]
        %v541 = vld [vmem:[%s491 + $0x120] sm:$0xff]
        %v542 = vld [vmem:[%s491 + $0x128] sm:$0xff]
        %v543 = vld [vmem:[%s491 + $0x130] sm:$0xff]
        %v544 = vld [vmem:[%s491 + $0x138] sm:$0xff]
        %v545 = vld [vmem:[%s491 + $0x140] sm:$0xff]
        %v546 = vld [vmem:[%s491 + $0x148] sm:$0xff]
        %v547 = vld [vmem:[%s491 + $0x150] sm:$0xff]
        %v548 = vld [vmem:[%s491 + $0x158] sm:$0xff]
        %v549 = vld [vmem:[%s491 + $0x160] sm:$0xff]
        %v550 = vld [vmem:[%s491 + $0x168] sm:$0xff]
        %v551 = vld [vmem:[%s491 + $0x170] sm:$0xff]
        %v552 = vld [vmem:[%s491 + $0x178] sm:$0xff]
        %v553 = vld [vmem:[%s491 + $0x180] sm:$0xff]
        %v554 = vld [vmem:[%s491 + $0x188] sm:$0xff]
        %v555 = vld [vmem:[%s491 + $0x190] sm:$0xff]
        %v556 = vld [vmem:[%s491 + $0x198] sm:$0xff]
        %v557 = vld [vmem:[%s491 + $0x1a0] sm:$0xff]
        %v558 = vld [vmem:[%s491 + $0x1a8] sm:$0xff]
        %v559 = vld [vmem:[%s491 + $0x1b0] sm:$0xff]
        %v560 = vld [vmem:[%s491 + $0x1b8] sm:$0xff]
        %v561 = vld [vmem:[%s491 + $0x1c0] sm:$0xff]
        %v562 = vld [vmem:[%s491 + $0x1c8] sm:$0xff]
        %v563 = vld [vmem:[%s491 + $0x1d0] sm:$0xff]
        %v564 = vld [vmem:[%s491 + $0x1d8] sm:$0xff]
        %v565 = vld [vmem:[%s491 + $0x1e0] sm:$0xff]
        %v566 = vld [vmem:[%s491 + $0x1e8] sm:$0xff]
        %v567 = vld [vmem:[%s491 + $0x1f0] sm:$0xff]
        %v568 = vld [vmem:[%s491 + $0x1f8] sm:$0xff]
        %v569 = vld [vmem:[%s497] sm:$0xff]
        %v570 = vld [vmem:[%s497 + $0x8] sm:$0xff]
        %v571 = vld [vmem:[%s497 + $0x10] sm:$0xff]
        %v572 = vld [vmem:[%s497 + $0x18] sm:$0xff]
        %v573 = vld [vmem:[%s497 + $0x20] sm:$0xff]
        %v574 = vld [vmem:[%s497 + $0x28] sm:$0xff]
        %v575 = vld [vmem:[%s497 + $0x30] sm:$0xff]
        %v576 = vld [vmem:[%s497 + $0x38] sm:$0xff]
        %v577 = vld [vmem:[%s497 + $0x40] sm:$0xff]
        %v578 = vld [vmem:[%s497 + $0x48] sm:$0xff]
        %v579 = vld [vmem:[%s497 + $0x50] sm:$0xff]
        %v580 = vld [vmem:[%s497 + $0x58] sm:$0xff]
        %v581 = vld [vmem:[%s497 + $0x60] sm:$0xff]
        %v582 = vld [vmem:[%s497 + $0x68] sm:$0xff]
        %v583 = vld [vmem:[%s497 + $0x70] sm:$0xff]
        %v584 = vld [vmem:[%s497 + $0x78] sm:$0xff]
        %601 = vrot.lane.b32.xlu0 %v569, 112
        %v602 = vpop.permute.xlu0 %601
        %603 = vrot.lane.b32.xlu0 %v570, 112
        %v604 = vpop.permute.xlu0 %603
        %605 = vrot.lane.b32.xlu0 %v571, 112
        %v606 = vpop.permute.xlu0 %605
        %607 = vrot.lane.b32.xlu0 %v572, 112
        %v608 = vpop.permute.xlu0 %607
        %609 = vrot.lane.b32.xlu0 %v573, 112
        %v610 = vpop.permute.xlu0 %609
        %611 = vrot.lane.b32.xlu0 %v574, 112
        %v612 = vpop.permute.xlu0 %611
        %613 = vrot.lane.b32.xlu0 %v575, 112
        %v614 = vpop.permute.xlu0 %613
        %615 = vrot.lane.b32.xlu0 %v576, 112
        %v616 = vpop.permute.xlu0 %615
        %617 = vrot.lane.b32.xlu0 %v577, 112
        %v618 = vpop.permute.xlu0 %617
        %619 = vrot.lane.b32.xlu0 %v578, 112
        %v620 = vpop.permute.xlu0 %619
        %621 = vrot.lane.b32.xlu0 %v579, 112
        %v622 = vpop.permute.xlu0 %621
        %623 = vrot.lane.b32.xlu0 %v580, 112
        %v624 = vpop.permute.xlu0 %623
        %625 = vrot.lane.b32.xlu0 %v581, 112
        %v626 = vpop.permute.xlu0 %625
        %627 = vrot.lane.b32.xlu0 %v582, 112
        %v628 = vpop.permute.xlu0 %627
        %629 = vrot.lane.b32.xlu0 %v583, 112
        %v630 = vpop.permute.xlu0 %629
        %631 = vrot.lane.b32.xlu0 %v584, 112
        %v632 = vpop.permute.xlu0 %631
        %v649 = vadd.f32 %v569, %v602
        %v650 = vadd.f32 %v570, %v604
        %v651 = vadd.f32 %v571, %v606
        %v652 = vadd.f32 %v572, %v608
        %v653 = vadd.f32 %v573, %v610
        %v654 = vadd.f32 %v574, %v612
        %v655 = vadd.f32 %v575, %v614
        %v656 = vadd.f32 %v576, %v616
        %v657 = vadd.f32 %v577, %v618
        %v658 = vadd.f32 %v578, %v620
        %v659 = vadd.f32 %v579, %v622
        %v660 = vadd.f32 %v580, %v624
        %v661 = vadd.f32 %v581, %v626
        %v662 = vadd.f32 %v582, %v628
        %v663 = vadd.f32 %v583, %v630
        %v664 = vadd.f32 %v584, %v632
        %665 = vrot.lane.b32.xlu0 %v569, 96
        %v666 = vpop.permute.xlu0 %665
        %667 = vrot.lane.b32.xlu0 %v570, 96
        %v668 = vpop.permute.xlu0 %667
        %669 = vrot.lane.b32.xlu0 %v571, 96
        %v670 = vpop.permute.xlu0 %669
        %671 = vrot.lane.b32.xlu0 %v572, 96
        %v672 = vpop.permute.xlu0 %671
        %673 = vrot.lane.b32.xlu0 %v573, 96
        %v674 = vpop.permute.xlu0 %673
        %675 = vrot.lane.b32.xlu0 %v574, 96
        %v676 = vpop.permute.xlu0 %675
        %677 = vrot.lane.b32.xlu0 %v575, 96
        %v678 = vpop.permute.xlu0 %677
        %679 = vrot.lane.b32.xlu0 %v576, 96
        %v680 = vpop.permute.xlu0 %679
        %681 = vrot.lane.b32.xlu0 %v577, 96
        %v682 = vpop.permute.xlu0 %681
        %683 = vrot.lane.b32.xlu0 %v578, 96
        %v684 = vpop.permute.xlu0 %683
        %685 = vrot.lane.b32.xlu0 %v579, 96
        %v686 = vpop.permute.xlu0 %685
        %687 = vrot.lane.b32.xlu0 %v580, 96
        %v688 = vpop.permute.xlu0 %687
        %689 = vrot.lane.b32.xlu0 %v581, 96
        %v690 = vpop.permute.xlu0 %689
        %691 = vrot.lane.b32.xlu0 %v582, 96
        %v692 = vpop.permute.xlu0 %691
        %693 = vrot.lane.b32.xlu0 %v583, 96
        %v694 = vpop.permute.xlu0 %693
        %695 = vrot.lane.b32.xlu0 %v584, 96
        %v696 = vpop.permute.xlu0 %695
        %v713 = vadd.f32 %v649, %v666
        %v714 = vadd.f32 %v650, %v668
        %v715 = vadd.f32 %v651, %v670
        %v716 = vadd.f32 %v652, %v672
        %v717 = vadd.f32 %v653, %v674
        %v718 = vadd.f32 %v654, %v676
        %v719 = vadd.f32 %v655, %v678
        %v720 = vadd.f32 %v656, %v680
        %v721 = vadd.f32 %v657, %v682
        %v722 = vadd.f32 %v658, %v684
        %v723 = vadd.f32 %v659, %v686
        %v724 = vadd.f32 %v660, %v688
        %v725 = vadd.f32 %v661, %v690
        %v726 = vadd.f32 %v662, %v692
        %v727 = vadd.f32 %v663, %v694
        %v728 = vadd.f32 %v664, %v696
        %729 = vrot.lane.b32.xlu0 %v569, 80
        %v730 = vpop.permute.xlu0 %729
        %731 = vrot.lane.b32.xlu0 %v570, 80
        %v732 = vpop.permute.xlu0 %731
        %733 = vrot.lane.b32.xlu0 %v571, 80
        %v734 = vpop.permute.xlu0 %733
        %735 = vrot.lane.b32.xlu0 %v572, 80
        %v736 = vpop.permute.xlu0 %735
        %737 = vrot.lane.b32.xlu0 %v573, 80
        %v738 = vpop.permute.xlu0 %737
        %739 = vrot.lane.b32.xlu0 %v574, 80
        %v740 = vpop.permute.xlu0 %739
        %741 = vrot.lane.b32.xlu0 %v575, 80
        %v742 = vpop.permute.xlu0 %741
        %743 = vrot.lane.b32.xlu0 %v576, 80
        %v744 = vpop.permute.xlu0 %743
        %745 = vrot.lane.b32.xlu0 %v577, 80
        %v746 = vpop.permute.xlu0 %745
        %747 = vrot.lane.b32.xlu0 %v578, 80
        %v748 = vpop.permute.xlu0 %747
        %749 = vrot.lane.b32.xlu0 %v579, 80
        %v750 = vpop.permute.xlu0 %749
        %751 = vrot.lane.b32.xlu0 %v580, 80
        %v752 = vpop.permute.xlu0 %751
        %753 = vrot.lane.b32.xlu0 %v581, 80
        %v754 = vpop.permute.xlu0 %753
        %755 = vrot.lane.b32.xlu0 %v582, 80
        %v756 = vpop.permute.xlu0 %755
        %757 = vrot.lane.b32.xlu0 %v583, 80
        %v758 = vpop.permute.xlu0 %757
        %759 = vrot.lane.b32.xlu0 %v584, 80
        %v760 = vpop.permute.xlu0 %759
        %v777 = vadd.f32 %v713, %v730
        %v778 = vadd.f32 %v714, %v732
        %v779 = vadd.f32 %v715, %v734
        %v780 = vadd.f32 %v716, %v736
        %v781 = vadd.f32 %v717, %v738
        %v782 = vadd.f32 %v718, %v740
        %v783 = vadd.f32 %v719, %v742
        %v784 = vadd.f32 %v720, %v744
        %v785 = vadd.f32 %v721, %v746
        %v786 = vadd.f32 %v722, %v748
        %v787 = vadd.f32 %v723, %v750
        %v788 = vadd.f32 %v724, %v752
        %v789 = vadd.f32 %v725, %v754
        %v790 = vadd.f32 %v726, %v756
        %v791 = vadd.f32 %v727, %v758
        %v792 = vadd.f32 %v728, %v760
        %793 = vrot.lane.b32.xlu0 %v569, 64
        %v794 = vpop.permute.xlu0 %793
        %795 = vrot.lane.b32.xlu0 %v570, 64
        %v796 = vpop.permute.xlu0 %795
        %797 = vrot.lane.b32.xlu0 %v571, 64
        %v798 = vpop.permute.xlu0 %797
        %799 = vrot.lane.b32.xlu0 %v572, 64
        %v800 = vpop.permute.xlu0 %799
        %801 = vrot.lane.b32.xlu0 %v573, 64
        %v802 = vpop.permute.xlu0 %801
        %803 = vrot.lane.b32.xlu0 %v574, 64
        %v804 = vpop.permute.xlu0 %803
        %805 = vrot.lane.b32.xlu0 %v575, 64
        %v806 = vpop.permute.xlu0 %805
        %807 = vrot.lane.b32.xlu0 %v576, 64
        %v808 = vpop.permute.xlu0 %807
        %809 = vrot.lane.b32.xlu0 %v577, 64
        %v810 = vpop.permute.xlu0 %809
        %811 = vrot.lane.b32.xlu0 %v578, 64
        %v812 = vpop.permute.xlu0 %811
        %813 = vrot.lane.b32.xlu0 %v579, 64
        %v814 = vpop.permute.xlu0 %813
        %815 = vrot.lane.b32.xlu0 %v580, 64
        %v816 = vpop.permute.xlu0 %815
        %817 = vrot.lane.b32.xlu0 %v581, 64
        %v818 = vpop.permute.xlu0 %817
        %819 = vrot.lane.b32.xlu0 %v582, 64
        %v820 = vpop.permute.xlu0 %819
        %821 = vrot.lane.b32.xlu0 %v583, 64
        %v822 = vpop.permute.xlu0 %821
        %823 = vrot.lane.b32.xlu0 %v584, 64
        %v824 = vpop.permute.xlu0 %823
        %v841 = vadd.f32 %v777, %v794
        %v842 = vadd.f32 %v778, %v796
        %v843 = vadd.f32 %v779, %v798
        %v844 = vadd.f32 %v780, %v800
        %v845 = vadd.f32 %v781, %v802
        %v846 = vadd.f32 %v782, %v804
        %v847 = vadd.f32 %v783, %v806
        %v848 = vadd.f32 %v784, %v808
        %v849 = vadd.f32 %v785, %v810
        %v850 = vadd.f32 %v786, %v812
        %v851 = vadd.f32 %v787, %v814
        %v852 = vadd.f32 %v788, %v816
        %v853 = vadd.f32 %v789, %v818
        %v854 = vadd.f32 %v790, %v820
        %v855 = vadd.f32 %v791, %v822
        %v856 = vadd.f32 %v792, %v824
        %v857 = vmul.f32 %v841, %v841
        %v858 = vmul.f32 %v842, %v842
        %v859 = vmul.f32 %v843, %v843
        %v860 = vmul.f32 %v844, %v844
        %v861 = vmul.f32 %v845, %v845
        %v862 = vmul.f32 %v846, %v846
        %v863 = vmul.f32 %v847, %v847
        %v864 = vmul.f32 %v848, %v848
        %v865 = vmul.f32 %v849, %v849
        %v866 = vmul.f32 %v850, %v850
        %v867 = vmul.f32 %v851, %v851
        %v868 = vmul.f32 %v852, %v852
        %v869 = vmul.f32 %v853, %v853
        %v870 = vmul.f32 %v854, %v854
        %v871 = vmul.f32 %v855, %v855
        %v872 = vmul.f32 %v856, %v856
        %vm873 = vcmask 130048
        %v874 = vsel %vm873, %v857, 0.0
        %875 = vadd.xlane.f32.xlu0 %v874
        %v876 = vpop.xlane.xlu0 %875
        %v877 = vsel %vm873, %v858, 0.0
        %878 = vadd.xlane.f32.xlu0 %v877
        %v879 = vpop.xlane.xlu0 %878
        %v880 = vsel %vm873, %v859, 0.0
        %881 = vadd.xlane.f32.xlu0 %v880
        %v882 = vpop.xlane.xlu0 %881
        %v883 = vsel %vm873, %v860, 0.0
        %884 = vadd.xlane.f32.xlu0 %v883
        %v885 = vpop.xlane.xlu0 %884
        %v886 = vsel %vm873, %v861, 0.0
        %887 = vadd.xlane.f32.xlu0 %v886
        %v888 = vpop.xlane.xlu0 %887
        %v889 = vsel %vm873, %v862, 0.0
        %890 = vadd.xlane.f32.xlu0 %v889
        %v891 = vpop.xlane.xlu0 %890
        %v892 = vsel %vm873, %v863, 0.0
        %893 = vadd.xlane.f32.xlu0 %v892
        %v894 = vpop.xlane.xlu0 %893
        %v895 = vsel %vm873, %v864, 0.0
        %896 = vadd.xlane.f32.xlu0 %v895
        %v897 = vpop.xlane.xlu0 %896
        %v898 = vsel %vm873, %v865, 0.0
        %899 = vadd.xlane.f32.xlu0 %v898
        %v900 = vpop.xlane.xlu0 %899
        %v901 = vsel %vm873, %v866, 0.0
        %902 = vadd.xlane.f32.xlu0 %v901
        %v903 = vpop.xlane.xlu0 %902
        %v904 = vsel %vm873, %v867, 0.0
        %905 = vadd.xlane.f32.xlu0 %v904
        %v906 = vpop.xlane.xlu0 %905
        %v907 = vsel %vm873, %v868, 0.0
        %908 = vadd.xlane.f32.xlu0 %v907
        %v909 = vpop.xlane.xlu0 %908
        %v910 = vsel %vm873, %v869, 0.0
        %911 = vadd.xlane.f32.xlu0 %v910
        %v912 = vpop.xlane.xlu0 %911
        %v913 = vsel %vm873, %v870, 0.0
        %914 = vadd.xlane.f32.xlu0 %v913
        %v915 = vpop.xlane.xlu0 %914
        %v916 = vsel %vm873, %v871, 0.0
        %917 = vadd.xlane.f32.xlu0 %v916
        %v918 = vpop.xlane.xlu0 %917
        %v919 = vsel %vm873, %v872, 0.0
        %920 = vadd.xlane.f32.xlu0 %v919
        %v921 = vpop.xlane.xlu0 %920
        %v922 = vmul.f32 %v569, %v569
        %v923 = vmul.f32 %v570, %v570
        %v924 = vmul.f32 %v571, %v571
        %v925 = vmul.f32 %v572, %v572
        %v926 = vmul.f32 %v573, %v573
        %v927 = vmul.f32 %v574, %v574
        %v928 = vmul.f32 %v575, %v575
        %v929 = vmul.f32 %v576, %v576
        %v930 = vmul.f32 %v577, %v577
        %v931 = vmul.f32 %v578, %v578
        %v932 = vmul.f32 %v579, %v579
        %v933 = vmul.f32 %v580, %v580
        %v934 = vmul.f32 %v581, %v581
        %v935 = vmul.f32 %v582, %v582
        %v936 = vmul.f32 %v583, %v583
        %v937 = vmul.f32 %v584, %v584
        %vm938 = vcmask 654336
        %v939 = vsel %vm938, %v922, 0.0
        %940 = vadd.xlane.f32.xlu0 %v939
        %v941 = vpop.xlane.xlu0 %940
        %v942 = vsel %vm938, %v923, 0.0
        %943 = vadd.xlane.f32.xlu0 %v942
        %v944 = vpop.xlane.xlu0 %943
        %v945 = vsel %vm938, %v924, 0.0
        %946 = vadd.xlane.f32.xlu0 %v945
        %v947 = vpop.xlane.xlu0 %946
        %v948 = vsel %vm938, %v925, 0.0
        %949 = vadd.xlane.f32.xlu0 %v948
        %v950 = vpop.xlane.xlu0 %949
        %v951 = vsel %vm938, %v926, 0.0
        %952 = vadd.xlane.f32.xlu0 %v951
        %v953 = vpop.xlane.xlu0 %952
        %v954 = vsel %vm938, %v927, 0.0
        %955 = vadd.xlane.f32.xlu0 %v954
        %v956 = vpop.xlane.xlu0 %955
        %v957 = vsel %vm938, %v928, 0.0
        %958 = vadd.xlane.f32.xlu0 %v957
        %v959 = vpop.xlane.xlu0 %958
        %v960 = vsel %vm938, %v929, 0.0
        %961 = vadd.xlane.f32.xlu0 %v960
        %v962 = vpop.xlane.xlu0 %961
        %v963 = vsel %vm938, %v930, 0.0
        %964 = vadd.xlane.f32.xlu0 %v963
        %v965 = vpop.xlane.xlu0 %964
        %v966 = vsel %vm938, %v931, 0.0
        %967 = vadd.xlane.f32.xlu0 %v966
        %v968 = vpop.xlane.xlu0 %967
        %v969 = vsel %vm938, %v932, 0.0
        %970 = vadd.xlane.f32.xlu0 %v969
        %v971 = vpop.xlane.xlu0 %970
        %v972 = vsel %vm938, %v933, 0.0
        %973 = vadd.xlane.f32.xlu0 %v972
        %v974 = vpop.xlane.xlu0 %973
        %v975 = vsel %vm938, %v934, 0.0
        %976 = vadd.xlane.f32.xlu0 %v975
        %v977 = vpop.xlane.xlu0 %976
        %v978 = vsel %vm938, %v935, 0.0
        %979 = vadd.xlane.f32.xlu0 %v978
        %v980 = vpop.xlane.xlu0 %979
        %v981 = vsel %vm938, %v936, 0.0
        %982 = vadd.xlane.f32.xlu0 %v981
        %v983 = vpop.xlane.xlu0 %982
        %v984 = vsel %vm938, %v937, 0.0
        %985 = vadd.xlane.f32.xlu0 %v984
        %v986 = vpop.xlane.xlu0 %985
        %v987 = vsub.f32 %v876, %v941
        %v988 = vsub.f32 %v879, %v944
        %v989 = vsub.f32 %v882, %v947
        %v990 = vsub.f32 %v885, %v950
        %v991 = vsub.f32 %v888, %v953
        %v992 = vsub.f32 %v891, %v956
        %v993 = vsub.f32 %v894, %v959
        %v994 = vsub.f32 %v897, %v962
        %v995 = vsub.f32 %v900, %v965
        %v996 = vsub.f32 %v903, %v968
        %v997 = vsub.f32 %v906, %v971
        %v998 = vsub.f32 %v909, %v974
        %v999 = vsub.f32 %v912, %v977
        %v1000 = vsub.f32 %v915, %v980
        %v1001 = vsub.f32 %v918, %v983
        %v1002 = vsub.f32 %v921, %v986
        %v1003 = vmul.f32 %v987, 0.5
        %v1004 = vmul.f32 %v988, 0.5
        %v1005 = vmul.f32 %v989, 0.5
        %v1006 = vmul.f32 %v990, 0.5
        %v1007 = vmul.f32 %v991, 0.5
        %v1008 = vmul.f32 %v992, 0.5
        %v1009 = vmul.f32 %v993, 0.5
        %v1010 = vmul.f32 %v994, 0.5
        %v1011 = vmul.f32 %v995, 0.5
        %v1012 = vmul.f32 %v996, 0.5
        %v1013 = vmul.f32 %v997, 0.5
        %v1014 = vmul.f32 %v998, 0.5
        %v1015 = vmul.f32 %v999, 0.5
        %v1016 = vmul.f32 %v1000, 0.5
        %v1017 = vmul.f32 %v1001, 0.5
        %v1018 = vmul.f32 %v1002, 0.5
        %v1019 = vld [vmem:[#allocation4] sm:$0xff]
        %v1020 = vld [vmem:[#allocation4 + $0x8] sm:$0xff]
        %v1021 = vld [vmem:[#allocation4 + $0x10] sm:$0xff]
        %v1022 = vld [vmem:[#allocation4 + $0x18] sm:$0xff]
        %v1023 = vld [vmem:[#allocation4 + $0x20] sm:$0xff]
        %v1024 = vld [vmem:[#allocation4 + $0x28] sm:$0xff]
        %v1025 = vld [vmem:[#allocation4 + $0x30] sm:$0xff]
        %v1026 = vld [vmem:[#allocation4 + $0x38] sm:$0xff]
        %v1027 = vld [vmem:[#allocation4 + $0x40] sm:$0xff]
        %v1028 = vld [vmem:[#allocation4 + $0x48] sm:$0xff]
        %v1029 = vld [vmem:[#allocation4 + $0x50] sm:$0xff]
        %v1030 = vld [vmem:[#allocation4 + $0x58] sm:$0xff]
        %v1031 = vld [vmem:[#allocation4 + $0x60] sm:$0xff]
        %v1032 = vld [vmem:[#allocation4 + $0x68] sm:$0xff]
        %v1033 = vld [vmem:[#allocation4 + $0x70] sm:$0xff]
        %v1034 = vld [vmem:[#allocation4 + $0x78] sm:$0xff]
        %v1035 = vld [vmem:[#allocation4 + $0x80] sm:$0xff]
        %v1036 = vld [vmem:[#allocation4 + $0x88] sm:$0xff]
        %v1037 = vld [vmem:[#allocation4 + $0x90] sm:$0xff]
        %v1038 = vld [vmem:[#allocation4 + $0x98] sm:$0xff]
        %v1039 = vld [vmem:[#allocation4 + $0xa0] sm:$0xff]
        %v1040 = vld [vmem:[#allocation4 + $0xa8] sm:$0xff]
        %v1041 = vld [vmem:[#allocation4 + $0xb0] sm:$0xff]
        %v1042 = vld [vmem:[#allocation4 + $0xb8] sm:$0xff]
        %v1043 = vld [vmem:[#allocation4 + $0xc0] sm:$0xff]
        %v1044 = vld [vmem:[#allocation4 + $0xc8] sm:$0xff]
        %v1045 = vld [vmem:[#allocation4 + $0xd0] sm:$0xff]
        %v1046 = vld [vmem:[#allocation4 + $0xd8] sm:$0xff]
        %v1047 = vld [vmem:[#allocation4 + $0xe0] sm:$0xff]
        %v1048 = vld [vmem:[#allocation4 + $0xe8] sm:$0xff]
        %v1049 = vld [vmem:[#allocation4 + $0xf0] sm:$0xff]
        %v1050 = vld [vmem:[#allocation4 + $0xf8] sm:$0xff]
        %v1051 = vld [vmem:[#allocation4 + $0x100] sm:$0xff]
        %v1052 = vld [vmem:[#allocation4 + $0x108] sm:$0xff]
        %v1053 = vld [vmem:[#allocation4 + $0x110] sm:$0xff]
        %v1054 = vld [vmem:[#allocation4 + $0x118] sm:$0xff]
        %v1055 = vld [vmem:[#allocation4 + $0x120] sm:$0xff]
        %v1056 = vld [vmem:[#allocation4 + $0x128] sm:$0xff]
        %v1057 = vld [vmem:[#allocation4 + $0x130] sm:$0xff]
        %v1058 = vld [vmem:[#allocation4 + $0x138] sm:$0xff]
        %v1059 = vld [vmem:[#allocation4 + $0x140] sm:$0xff]
        %v1060 = vld [vmem:[#allocation4 + $0x148] sm:$0xff]
        %v1061 = vld [vmem:[#allocation4 + $0x150] sm:$0xff]
        %v1062 = vld [vmem:[#allocation4 + $0x158] sm:$0xff]
        %v1063 = vld [vmem:[#allocation4 + $0x160] sm:$0xff]
        %v1064 = vld [vmem:[#allocation4 + $0x168] sm:$0xff]
        %v1065 = vld [vmem:[#allocation4 + $0x170] sm:$0xff]
        %v1066 = vld [vmem:[#allocation4 + $0x178] sm:$0xff]
        %v1067 = vld [vmem:[#allocation4 + $0x180] sm:$0xff]
        %v1068 = vld [vmem:[#allocation4 + $0x188] sm:$0xff]
        %v1069 = vld [vmem:[#allocation4 + $0x190] sm:$0xff]
        %v1070 = vld [vmem:[#allocation4 + $0x198] sm:$0xff]
        %v1071 = vld [vmem:[#allocation4 + $0x1a0] sm:$0xff]
        %v1072 = vld [vmem:[#allocation4 + $0x1a8] sm:$0xff]
        %v1073 = vld [vmem:[#allocation4 + $0x1b0] sm:$0xff]
        %v1074 = vld [vmem:[#allocation4 + $0x1b8] sm:$0xff]
        %v1075 = vld [vmem:[#allocation4 + $0x1c0] sm:$0xff]
        %v1076 = vld [vmem:[#allocation4 + $0x1c8] sm:$0xff]
        %v1077 = vld [vmem:[#allocation4 + $0x1d0] sm:$0xff]
        %v1078 = vld [vmem:[#allocation4 + $0x1d8] sm:$0xff]
        %v1079 = vld [vmem:[#allocation4 + $0x1e0] sm:$0xff]
        %v1080 = vld [vmem:[#allocation4 + $0x1e8] sm:$0xff]
        %v1081 = vld [vmem:[#allocation4 + $0x1f0] sm:$0xff]
        %v1082 = vld [vmem:[#allocation4 + $0x1f8] sm:$0xff]
        %v1083 = vld [vmem:[#allocation4 + $0x200] sm:$0xff]
        %v1084 = vld [vmem:[#allocation4 + $0x208] sm:$0xff]
        %v1085 = vld [vmem:[#allocation4 + $0x210] sm:$0xff]
        %v1086 = vld [vmem:[#allocation4 + $0x218] sm:$0xff]
        %v1087 = vld [vmem:[#allocation4 + $0x220] sm:$0xff]
        %v1088 = vld [vmem:[#allocation4 + $0x228] sm:$0xff]
        %v1089 = vld [vmem:[#allocation4 + $0x230] sm:$0xff]
        %v1090 = vld [vmem:[#allocation4 + $0x238] sm:$0xff]
        %v1091 = vld [vmem:[#allocation4 + $0x240] sm:$0xff]
        %v1092 = vld [vmem:[#allocation4 + $0x248] sm:$0xff]
        %v1093 = vld [vmem:[#allocation4 + $0x250] sm:$0xff]
        %v1094 = vld [vmem:[#allocation4 + $0x258] sm:$0xff]
        %v1095 = vld [vmem:[#allocation4 + $0x260] sm:$0xff]
        %v1096 = vld [vmem:[#allocation4 + $0x268] sm:$0xff]
        %v1097 = vld [vmem:[#allocation4 + $0x270] sm:$0xff]
        %v1098 = vld [vmem:[#allocation4 + $0x278] sm:$0xff]
        %v1099 = vld [vmem:[#allocation4 + $0x280] sm:$0xff]
        %v1100 = vld [vmem:[#allocation4 + $0x288] sm:$0xff]
        %v1101 = vld [vmem:[#allocation4 + $0x290] sm:$0xff]
        %v1102 = vld [vmem:[#allocation4 + $0x298] sm:$0xff]
        %v1103 = vld [vmem:[#allocation4 + $0x2a0] sm:$0xff]
        %v1104 = vld [vmem:[#allocation4 + $0x2a8] sm:$0xff]
        %v1105 = vld [vmem:[#allocation4 + $0x2b0] sm:$0xff]
        %v1106 = vld [vmem:[#allocation4 + $0x2b8] sm:$0xff]
        %v1107 = vld [vmem:[#allocation4 + $0x2c0] sm:$0xff]
        %v1108 = vld [vmem:[#allocation4 + $0x2c8] sm:$0xff]
        %v1109 = vld [vmem:[#allocation4 + $0x2d0] sm:$0xff]
        %v1110 = vld [vmem:[#allocation4 + $0x2d8] sm:$0xff]
        %v1111 = vld [vmem:[#allocation4 + $0x2e0] sm:$0xff]
        %v1112 = vld [vmem:[#allocation4 + $0x2e8] sm:$0xff]
        %v1113 = vld [vmem:[#allocation4 + $0x2f0] sm:$0xff]
        %v1114 = vld [vmem:[#allocation4 + $0x2f8] sm:$0xff]
        %v1115 = vld [vmem:[#allocation4 + $0x300] sm:$0xff]
        %v1116 = vld [vmem:[#allocation4 + $0x308] sm:$0xff]
        %v1117 = vld [vmem:[#allocation4 + $0x310] sm:$0xff]
        %v1118 = vld [vmem:[#allocation4 + $0x318] sm:$0xff]
        %v1119 = vld [vmem:[#allocation4 + $0x320] sm:$0xff]
        %v1120 = vld [vmem:[#allocation4 + $0x328] sm:$0xff]
        %v1121 = vld [vmem:[#allocation4 + $0x330] sm:$0xff]
        %v1122 = vld [vmem:[#allocation4 + $0x338] sm:$0xff]
        %v1123 = vld [vmem:[#allocation4 + $0x340] sm:$0xff]
        %v1124 = vld [vmem:[#allocation4 + $0x348] sm:$0xff]
        %v1125 = vld [vmem:[#allocation4 + $0x350] sm:$0xff]
        %v1126 = vld [vmem:[#allocation4 + $0x358] sm:$0xff]
        %v1127 = vld [vmem:[#allocation4 + $0x360] sm:$0xff]
        %v1128 = vld [vmem:[#allocation4 + $0x368] sm:$0xff]
        %v1129 = vld [vmem:[#allocation4 + $0x370] sm:$0xff]
        %v1130 = vld [vmem:[#allocation4 + $0x378] sm:$0xff]
        %v1131 = vld [vmem:[#allocation4 + $0x380] sm:$0xff]
        %v1132 = vld [vmem:[#allocation4 + $0x388] sm:$0xff]
        %v1133 = vld [vmem:[#allocation4 + $0x390] sm:$0xff]
        %v1134 = vld [vmem:[#allocation4 + $0x398] sm:$0xff]
        %v1135 = vld [vmem:[#allocation4 + $0x3a0] sm:$0xff]
        %v1136 = vld [vmem:[#allocation4 + $0x3a8] sm:$0xff]
        %v1137 = vld [vmem:[#allocation4 + $0x3b0] sm:$0xff]
        %v1138 = vld [vmem:[#allocation4 + $0x3b8] sm:$0xff]
        %v1139 = vld [vmem:[#allocation4 + $0x3c0] sm:$0xff]
        %v1140 = vld [vmem:[#allocation4 + $0x3c8] sm:$0xff]
        %v1141 = vld [vmem:[#allocation4 + $0x3d0] sm:$0xff]
        %v1142 = vld [vmem:[#allocation4 + $0x3d8] sm:$0xff]
        %v1143 = vld [vmem:[#allocation4 + $0x3e0] sm:$0xff]
        %v1144 = vld [vmem:[#allocation4 + $0x3e8] sm:$0xff]
        %v1145 = vld [vmem:[#allocation4 + $0x3f0] sm:$0xff]
        %v1146 = vld [vmem:[#allocation4 + $0x3f8] sm:$0xff]
        %v1147 = vld [vmem:[%s3] sm:$0x3]
        %v1149 = vperm.slane %v1147, 0
        %v1150 = vperm.slane %v1147, 1
        %v1217 = vunpack.c.l.b16 %v505
        %v1218 = vunpack.c.h.b16 %v505
        %v1219 = vunpack.c.l.b16 %v506
        %v1220 = vunpack.c.h.b16 %v506
        %v1221 = vunpack.c.l.b16 %v507
        %v1222 = vunpack.c.h.b16 %v507
        %v1223 = vunpack.c.l.b16 %v508
        %v1224 = vunpack.c.h.b16 %v508
        %v1225 = vunpack.c.l.b16 %v509
        %v1226 = vunpack.c.h.b16 %v509
        %v1227 = vunpack.c.l.b16 %v510
        %v1228 = vunpack.c.h.b16 %v510
        %v1229 = vunpack.c.l.b16 %v511
        %v1230 = vunpack.c.h.b16 %v511
        %v1231 = vunpack.c.l.b16 %v512
        %v1232 = vunpack.c.h.b16 %v512
        %v1233 = vunpack.c.l.b16 %v513
        %v1234 = vunpack.c.h.b16 %v513
        %v1235 = vunpack.c.l.b16 %v514
        %v1236 = vunpack.c.h.b16 %v514
        %v1237 = vunpack.c.l.b16 %v515
        %v1238 = vunpack.c.h.b16 %v515
        %v1239 = vunpack.c.l.b16 %v516
        %v1240 = vunpack.c.h.b16 %v516
        %v1241 = vunpack.c.l.b16 %v517
        %v1242 = vunpack.c.h.b16 %v517
        %v1243 = vunpack.c.l.b16 %v518
        %v1244 = vunpack.c.h.b16 %v518
        %v1245 = vunpack.c.l.b16 %v519
        %v1246 = vunpack.c.h.b16 %v519
        %v1247 = vunpack.c.l.b16 %v520
        %v1248 = vunpack.c.h.b16 %v520
        %v1249 = vunpack.c.l.b16 %v521
        %v1250 = vunpack.c.h.b16 %v521
        %v1251 = vunpack.c.l.b16 %v522
        %v1252 = vunpack.c.h.b16 %v522
        %v1253 = vunpack.c.l.b16 %v523
        %v1254 = vunpack.c.h.b16 %v523
        %v1255 = vunpack.c.l.b16 %v524
        %v1256 = vunpack.c.h.b16 %v524
        %v1257 = vunpack.c.l.b16 %v525
        %v1258 = vunpack.c.h.b16 %v525
        %v1259 = vunpack.c.l.b16 %v526
        %v1260 = vunpack.c.h.b16 %v526
        %v1261 = vunpack.c.l.b16 %v527
        %v1262 = vunpack.c.h.b16 %v527
        %v1263 = vunpack.c.l.b16 %v528
        %v1264 = vunpack.c.h.b16 %v528
        %v1265 = vunpack.c.l.b16 %v529
        %v1266 = vunpack.c.h.b16 %v529
        %v1267 = vunpack.c.l.b16 %v530
        %v1268 = vunpack.c.h.b16 %v530
        %v1269 = vunpack.c.l.b16 %v531
        %v1270 = vunpack.c.h.b16 %v531
        %v1271 = vunpack.c.l.b16 %v532
        %v1272 = vunpack.c.h.b16 %v532
        %v1273 = vunpack.c.l.b16 %v533
        %v1274 = vunpack.c.h.b16 %v533
        %v1275 = vunpack.c.l.b16 %v534
        %v1276 = vunpack.c.h.b16 %v534
        %v1277 = vunpack.c.l.b16 %v535
        %v1278 = vunpack.c.h.b16 %v535
        %v1279 = vunpack.c.l.b16 %v536
        %v1280 = vunpack.c.h.b16 %v536
        %v1281 = vunpack.c.l.b16 %v537
        %v1282 = vunpack.c.h.b16 %v537
        %v1283 = vunpack.c.l.b16 %v538
        %v1284 = vunpack.c.h.b16 %v538
        %v1285 = vunpack.c.l.b16 %v539
        %v1286 = vunpack.c.h.b16 %v539
        %v1287 = vunpack.c.l.b16 %v540
        %v1288 = vunpack.c.h.b16 %v540
        %v1289 = vunpack.c.l.b16 %v541
        %v1290 = vunpack.c.h.b16 %v541
        %v1291 = vunpack.c.l.b16 %v542
        %v1292 = vunpack.c.h.b16 %v542
        %v1293 = vunpack.c.l.b16 %v543
        %v1294 = vunpack.c.h.b16 %v543
        %v1295 = vunpack.c.l.b16 %v544
        %v1296 = vunpack.c.h.b16 %v544
        %v1297 = vunpack.c.l.b16 %v545
        %v1298 = vunpack.c.h.b16 %v545
        %v1299 = vunpack.c.l.b16 %v546
        %v1300 = vunpack.c.h.b16 %v546
        %v1301 = vunpack.c.l.b16 %v547
        %v1302 = vunpack.c.h.b16 %v547
        %v1303 = vunpack.c.l.b16 %v548
        %v1304 = vunpack.c.h.b16 %v548
        %v1305 = vunpack.c.l.b16 %v549
        %v1306 = vunpack.c.h.b16 %v549
        %v1307 = vunpack.c.l.b16 %v550
        %v1308 = vunpack.c.h.b16 %v550
        %v1309 = vunpack.c.l.b16 %v551
        %v1310 = vunpack.c.h.b16 %v551
        %v1311 = vunpack.c.l.b16 %v552
        %v1312 = vunpack.c.h.b16 %v552
        %v1313 = vunpack.c.l.b16 %v553
        %v1314 = vunpack.c.h.b16 %v553
        %v1315 = vunpack.c.l.b16 %v554
        %v1316 = vunpack.c.h.b16 %v554
        %v1317 = vunpack.c.l.b16 %v555
        %v1318 = vunpack.c.h.b16 %v555
        %v1319 = vunpack.c.l.b16 %v556
        %v1320 = vunpack.c.h.b16 %v556
        %v1321 = vunpack.c.l.b16 %v557
        %v1322 = vunpack.c.h.b16 %v557
        %v1323 = vunpack.c.l.b16 %v558
        %v1324 = vunpack.c.h.b16 %v558
        %v1325 = vunpack.c.l.b16 %v559
        %v1326 = vunpack.c.h.b16 %v559
        %v1327 = vunpack.c.l.b16 %v560
        %v1328 = vunpack.c.h.b16 %v560
        %v1329 = vunpack.c.l.b16 %v561
        %v1330 = vunpack.c.h.b16 %v561
        %v1331 = vunpack.c.l.b16 %v562
        %v1332 = vunpack.c.h.b16 %v562
        %v1333 = vunpack.c.l.b16 %v563
        %v1334 = vunpack.c.h.b16 %v563
        %v1335 = vunpack.c.l.b16 %v564
        %v1336 = vunpack.c.h.b16 %v564
        %v1337 = vunpack.c.l.b16 %v565
        %v1338 = vunpack.c.h.b16 %v565
        %v1339 = vunpack.c.l.b16 %v566
        %v1340 = vunpack.c.h.b16 %v566
        %v1341 = vunpack.c.l.b16 %v567
        %v1342 = vunpack.c.h.b16 %v567
        %v1343 = vunpack.c.l.b16 %v568
        %v1344 = vunpack.c.h.b16 %v568
        %v1345 = vpack.c.b16 %v1225, %v1217
        %v1346 = vpack.c.b16 %v1226, %v1218
        %v1347 = vpack.c.b16 %v1227, %v1219
        %v1348 = vpack.c.b16 %v1228, %v1220
        %v1349 = vpack.c.b16 %v1229, %v1221
        %v1350 = vpack.c.b16 %v1230, %v1222
        %v1351 = vpack.c.b16 %v1231, %v1223
        %v1352 = vpack.c.b16 %v1232, %v1224
        %v1353 = vpack.c.b16 %v1241, %v1233
        %v1354 = vpack.c.b16 %v1242, %v1234
        %v1355 = vpack.c.b16 %v1243, %v1235
        %v1356 = vpack.c.b16 %v1244, %v1236
        %v1357 = vpack.c.b16 %v1245, %v1237
        %v1358 = vpack.c.b16 %v1246, %v1238
        %v1359 = vpack.c.b16 %v1247, %v1239
        %v1360 = vpack.c.b16 %v1248, %v1240
        %v1361 = vpack.c.b16 %v1257, %v1249
        %v1362 = vpack.c.b16 %v1258, %v1250
        %v1363 = vpack.c.b16 %v1259, %v1251
        %v1364 = vpack.c.b16 %v1260, %v1252
        %v1365 = vpack.c.b16 %v1261, %v1253
        %v1366 = vpack.c.b16 %v1262, %v1254
        %v1367 = vpack.c.b16 %v1263, %v1255
        %v1368 = vpack.c.b16 %v1264, %v1256
        %v1369 = vpack.c.b16 %v1273, %v1265
        %v1370 = vpack.c.b16 %v1274, %v1266
        %v1371 = vpack.c.b16 %v1275, %v1267
        %v1372 = vpack.c.b16 %v1276, %v1268
        %v1373 = vpack.c.b16 %v1277, %v1269
        %v1374 = vpack.c.b16 %v1278, %v1270
        %v1375 = vpack.c.b16 %v1279, %v1271
        %v1376 = vpack.c.b16 %v1280, %v1272
        %v1377 = vpack.c.b16 %v1289, %v1281
        %v1378 = vpack.c.b16 %v1290, %v1282
        %v1379 = vpack.c.b16 %v1291, %v1283
        %v1380 = vpack.c.b16 %v1292, %v1284
        %v1381 = vpack.c.b16 %v1293, %v1285
        %v1382 = vpack.c.b16 %v1294, %v1286
        %v1383 = vpack.c.b16 %v1295, %v1287
        %v1384 = vpack.c.b16 %v1296, %v1288
        %v1385 = vpack.c.b16 %v1305, %v1297
        %v1386 = vpack.c.b16 %v1306, %v1298
        %v1387 = vpack.c.b16 %v1307, %v1299
        %v1388 = vpack.c.b16 %v1308, %v1300
        %v1389 = vpack.c.b16 %v1309, %v1301
        %v1390 = vpack.c.b16 %v1310, %v1302
        %v1391 = vpack.c.b16 %v1311, %v1303
        %v1392 = vpack.c.b16 %v1312, %v1304
        %v1393 = vpack.c.b16 %v1321, %v1313
        %v1394 = vpack.c.b16 %v1322, %v1314
        %v1395 = vpack.c.b16 %v1323, %v1315
        %v1396 = vpack.c.b16 %v1324, %v1316
        %v1397 = vpack.c.b16 %v1325, %v1317
        %v1398 = vpack.c.b16 %v1326, %v1318
        %v1399 = vpack.c.b16 %v1327, %v1319
        %v1400 = vpack.c.b16 %v1328, %v1320
        %v1401 = vpack.c.b16 %v1337, %v1329
        %v1402 = vpack.c.b16 %v1338, %v1330
        %v1403 = vpack.c.b16 %v1339, %v1331
        %v1404 = vpack.c.b16 %v1340, %v1332
        %v1405 = vpack.c.b16 %v1341, %v1333
        %v1406 = vpack.c.b16 %v1342, %v1334
        %v1407 = vpack.c.b16 %v1343, %v1335
        %v1408 = vpack.c.b16 %v1344, %v1336
        %v1601 = vunpack.c.l.b16 %v1019
        %v1602 = vunpack.c.h.b16 %v1019
        %v1603 = vunpack.c.l.b16 %v1020
        %v1604 = vunpack.c.h.b16 %v1020
        %v1605 = vunpack.c.l.b16 %v1021
        %v1606 = vunpack.c.h.b16 %v1021
        %v1607 = vunpack.c.l.b16 %v1022
        %v1608 = vunpack.c.h.b16 %v1022
        %v1609 = vunpack.c.l.b16 %v1023
        %v1610 = vunpack.c.h.b16 %v1023
        %v1611 = vunpack.c.l.b16 %v1024
        %v1612 = vunpack.c.h.b16 %v1024
        %v1613 = vunpack.c.l.b16 %v1025
        %v1614 = vunpack.c.h.b16 %v1025
        %v1615 = vunpack.c.l.b16 %v1026
        %v1616 = vunpack.c.h.b16 %v1026
        %v1617 = vunpack.c.l.b16 %v1027
        %v1618 = vunpack.c.h.b16 %v1027
        %v1619 = vunpack.c.l.b16 %v1028
        %v1620 = vunpack.c.h.b16 %v1028
        %v1621 = vunpack.c.l.b16 %v1029
        %v1622 = vunpack.c.h.b16 %v1029
        %v1623 = vunpack.c.l.b16 %v1030
        %v1624 = vunpack.c.h.b16 %v1030
        %v1625 = vunpack.c.l.b16 %v1031
        %v1626 = vunpack.c.h.b16 %v1031
        %v1627 = vunpack.c.l.b16 %v1032
        %v1628 = vunpack.c.h.b16 %v1032
        %v1629 = vunpack.c.l.b16 %v1033
        %v1630 = vunpack.c.h.b16 %v1033
        %v1631 = vunpack.c.l.b16 %v1034
        %v1632 = vunpack.c.h.b16 %v1034
        %v1633 = vunpack.c.l.b16 %v1035
        %v1634 = vunpack.c.h.b16 %v1035
        %v1635 = vunpack.c.l.b16 %v1036
        %v1636 = vunpack.c.h.b16 %v1036
        %v1637 = vunpack.c.l.b16 %v1037
        %v1638 = vunpack.c.h.b16 %v1037
        %v1639 = vunpack.c.l.b16 %v1038
        %v1640 = vunpack.c.h.b16 %v1038
        %v1641 = vunpack.c.l.b16 %v1039
        %v1642 = vunpack.c.h.b16 %v1039
        %v1643 = vunpack.c.l.b16 %v1040
        %v1644 = vunpack.c.h.b16 %v1040
        %v1645 = vunpack.c.l.b16 %v1041
        %v1646 = vunpack.c.h.b16 %v1041
        %v1647 = vunpack.c.l.b16 %v1042
        %v1648 = vunpack.c.h.b16 %v1042
        %v1649 = vunpack.c.l.b16 %v1043
        %v1650 = vunpack.c.h.b16 %v1043
        %v1651 = vunpack.c.l.b16 %v1044
        %v1652 = vunpack.c.h.b16 %v1044
        %v1653 = vunpack.c.l.b16 %v1045
        %v1654 = vunpack.c.h.b16 %v1045
        %v1655 = vunpack.c.l.b16 %v1046
        %v1656 = vunpack.c.h.b16 %v1046
        %v1657 = vunpack.c.l.b16 %v1047
        %v1658 = vunpack.c.h.b16 %v1047
        %v1659 = vunpack.c.l.b16 %v1048
        %v1660 = vunpack.c.h.b16 %v1048
        %v1661 = vunpack.c.l.b16 %v1049
        %v1662 = vunpack.c.h.b16 %v1049
        %v1663 = vunpack.c.l.b16 %v1050
        %v1664 = vunpack.c.h.b16 %v1050
        %v1665 = vunpack.c.l.b16 %v1051
        %v1666 = vunpack.c.h.b16 %v1051
        %v1667 = vunpack.c.l.b16 %v1052
        %v1668 = vunpack.c.h.b16 %v1052
        %v1669 = vunpack.c.l.b16 %v1053
        %v1670 = vunpack.c.h.b16 %v1053
        %v1671 = vunpack.c.l.b16 %v1054
        %v1672 = vunpack.c.h.b16 %v1054
        %v1673 = vunpack.c.l.b16 %v1055
        %v1674 = vunpack.c.h.b16 %v1055
        %v1675 = vunpack.c.l.b16 %v1056
        %v1676 = vunpack.c.h.b16 %v1056
        %v1677 = vunpack.c.l.b16 %v1057
        %v1678 = vunpack.c.h.b16 %v1057
        %v1679 = vunpack.c.l.b16 %v1058
        %v1680 = vunpack.c.h.b16 %v1058
        %v1681 = vunpack.c.l.b16 %v1059
        %v1682 = vunpack.c.h.b16 %v1059
        %v1683 = vunpack.c.l.b16 %v1060
        %v1684 = vunpack.c.h.b16 %v1060
        %v1685 = vunpack.c.l.b16 %v1061
        %v1686 = vunpack.c.h.b16 %v1061
        %v1687 = vunpack.c.l.b16 %v1062
        %v1688 = vunpack.c.h.b16 %v1062
        %v1689 = vunpack.c.l.b16 %v1063
        %v1690 = vunpack.c.h.b16 %v1063
        %v1691 = vunpack.c.l.b16 %v1064
        %v1692 = vunpack.c.h.b16 %v1064
        %v1693 = vunpack.c.l.b16 %v1065
        %v1694 = vunpack.c.h.b16 %v1065
        %v1695 = vunpack.c.l.b16 %v1066
        %v1696 = vunpack.c.h.b16 %v1066
        %v1697 = vunpack.c.l.b16 %v1067
        %v1698 = vunpack.c.h.b16 %v1067
        %v1699 = vunpack.c.l.b16 %v1068
        %v1700 = vunpack.c.h.b16 %v1068
        %v1701 = vunpack.c.l.b16 %v1069
        %v1702 = vunpack.c.h.b16 %v1069
        %v1703 = vunpack.c.l.b16 %v1070
        %v1704 = vunpack.c.h.b16 %v1070
        %v1705 = vunpack.c.l.b16 %v1071
        %v1706 = vunpack.c.h.b16 %v1071
        %v1707 = vunpack.c.l.b16 %v1072
        %v1708 = vunpack.c.h.b16 %v1072
        %v1709 = vunpack.c.l.b16 %v1073
        %v1710 = vunpack.c.h.b16 %v1073
        %v1711 = vunpack.c.l.b16 %v1074
        %v1712 = vunpack.c.h.b16 %v1074
        %v1713 = vunpack.c.l.b16 %v1075
        %v1714 = vunpack.c.h.b16 %v1075
        %v1715 = vunpack.c.l.b16 %v1076
        %v1716 = vunpack.c.h.b16 %v1076
        %v1717 = vunpack.c.l.b16 %v1077
        %v1718 = vunpack.c.h.b16 %v1077
        %v1719 = vunpack.c.l.b16 %v1078
        %v1720 = vunpack.c.h.b16 %v1078
        %v1721 = vunpack.c.l.b16 %v1079
        %v1722 = vunpack.c.h.b16 %v1079
        %v1723 = vunpack.c.l.b16 %v1080
        %v1724 = vunpack.c.h.b16 %v1080
        %v1725 = vunpack.c.l.b16 %v1081
        %v1726 = vunpack.c.h.b16 %v1081
        %v1727 = vunpack.c.l.b16 %v1082
        %v1728 = vunpack.c.h.b16 %v1082
        %v1729 = vunpack.c.l.b16 %v1083
        %v1730 = vunpack.c.h.b16 %v1083
        %v1731 = vunpack.c.l.b16 %v1084
        %v1732 = vunpack.c.h.b16 %v1084
        %v1733 = vunpack.c.l.b16 %v1085
        %v1734 = vunpack.c.h.b16 %v1085
        %v1735 = vunpack.c.l.b16 %v1086
        %v1736 = vunpack.c.h.b16 %v1086
        %v1737 = vunpack.c.l.b16 %v1087
        %v1738 = vunpack.c.h.b16 %v1087
        %v1739 = vunpack.c.l.b16 %v1088
        %v1740 = vunpack.c.h.b16 %v1088
        %v1741 = vunpack.c.l.b16 %v1089
        %v1742 = vunpack.c.h.b16 %v1089
        %v1743 = vunpack.c.l.b16 %v1090
        %v1744 = vunpack.c.h.b16 %v1090
        %v1745 = vunpack.c.l.b16 %v1091
        %v1746 = vunpack.c.h.b16 %v1091
        %v1747 = vunpack.c.l.b16 %v1092
        %v1748 = vunpack.c.h.b16 %v1092
        %v1749 = vunpack.c.l.b16 %v1093
        %v1750 = vunpack.c.h.b16 %v1093
        %v1751 = vunpack.c.l.b16 %v1094
        %v1752 = vunpack.c.h.b16 %v1094
        %v1753 = vunpack.c.l.b16 %v1095
        %v1754 = vunpack.c.h.b16 %v1095
        %v1755 = vunpack.c.l.b16 %v1096
        %v1756 = vunpack.c.h.b16 %v1096
        %v1757 = vunpack.c.l.b16 %v1097
        %v1758 = vunpack.c.h.b16 %v1097
        %v1759 = vunpack.c.l.b16 %v1098
        %v1760 = vunpack.c.h.b16 %v1098
        %v1761 = vunpack.c.l.b16 %v1099
        %v1762 = vunpack.c.h.b16 %v1099
        %v1763 = vunpack.c.l.b16 %v1100
        %v1764 = vunpack.c.h.b16 %v1100
        %v1765 = vunpack.c.l.b16 %v1101
        %v1766 = vunpack.c.h.b16 %v1101
        %v1767 = vunpack.c.l.b16 %v1102
        %v1768 = vunpack.c.h.b16 %v1102
        %v1769 = vunpack.c.l.b16 %v1103
        %v1770 = vunpack.c.h.b16 %v1103
        %v1771 = vunpack.c.l.b16 %v1104
        %v1772 = vunpack.c.h.b16 %v1104
        %v1773 = vunpack.c.l.b16 %v1105
        %v1774 = vunpack.c.h.b16 %v1105
        %v1775 = vunpack.c.l.b16 %v1106
        %v1776 = vunpack.c.h.b16 %v1106
        %v1777 = vunpack.c.l.b16 %v1107
        %v1778 = vunpack.c.h.b16 %v1107
        %v1779 = vunpack.c.l.b16 %v1108
        %v1780 = vunpack.c.h.b16 %v1108
        %v1781 = vunpack.c.l.b16 %v1109
        %v1782 = vunpack.c.h.b16 %v1109
        %v1783 = vunpack.c.l.b16 %v1110
        %v1784 = vunpack.c.h.b16 %v1110
        %v1785 = vunpack.c.l.b16 %v1111
        %v1786 = vunpack.c.h.b16 %v1111
        %v1787 = vunpack.c.l.b16 %v1112
        %v1788 = vunpack.c.h.b16 %v1112
        %v1789 = vunpack.c.l.b16 %v1113
        %v1790 = vunpack.c.h.b16 %v1113
        %v1791 = vunpack.c.l.b16 %v1114
        %v1792 = vunpack.c.h.b16 %v1114
        %v1793 = vunpack.c.l.b16 %v1115
        %v1794 = vunpack.c.h.b16 %v1115
        %v1795 = vunpack.c.l.b16 %v1116
        %v1796 = vunpack.c.h.b16 %v1116
        %v1797 = vunpack.c.l.b16 %v1117
        %v1798 = vunpack.c.h.b16 %v1117
        %v1799 = vunpack.c.l.b16 %v1118
        %v1800 = vunpack.c.h.b16 %v1118
        %v1801 = vunpack.c.l.b16 %v1119
        %v1802 = vunpack.c.h.b16 %v1119
        %v1803 = vunpack.c.l.b16 %v1120
        %v1804 = vunpack.c.h.b16 %v1120
        %v1805 = vunpack.c.l.b16 %v1121
        %v1806 = vunpack.c.h.b16 %v1121
        %v1807 = vunpack.c.l.b16 %v1122
        %v1808 = vunpack.c.h.b16 %v1122
        %v1809 = vunpack.c.l.b16 %v1123
        %v1810 = vunpack.c.h.b16 %v1123
        %v1811 = vunpack.c.l.b16 %v1124
        %v1812 = vunpack.c.h.b16 %v1124
        %v1813 = vunpack.c.l.b16 %v1125
        %v1814 = vunpack.c.h.b16 %v1125
        %v1815 = vunpack.c.l.b16 %v1126
        %v1816 = vunpack.c.h.b16 %v1126
        %v1817 = vunpack.c.l.b16 %v1127
        %v1818 = vunpack.c.h.b16 %v1127
        %v1819 = vunpack.c.l.b16 %v1128
        %v1820 = vunpack.c.h.b16 %v1128
        %v1821 = vunpack.c.l.b16 %v1129
        %v1822 = vunpack.c.h.b16 %v1129
        %v1823 = vunpack.c.l.b16 %v1130
        %v1824 = vunpack.c.h.b16 %v1130
        %v1825 = vunpack.c.l.b16 %v1131
        %v1826 = vunpack.c.h.b16 %v1131
        %v1827 = vunpack.c.l.b16 %v1132
        %v1828 = vunpack.c.h.b16 %v1132
        %v1829 = vunpack.c.l.b16 %v1133
        %v1830 = vunpack.c.h.b16 %v1133
        %v1831 = vunpack.c.l.b16 %v1134
        %v1832 = vunpack.c.h.b16 %v1134
        %v1833 = vunpack.c.l.b16 %v1135
        %v1834 = vunpack.c.h.b16 %v1135
        %v1835 = vunpack.c.l.b16 %v1136
        %v1836 = vunpack.c.h.b16 %v1136
        %v1837 = vunpack.c.l.b16 %v1137
        %v1838 = vunpack.c.h.b16 %v1137
        %v1839 = vunpack.c.l.b16 %v1138
        %v1840 = vunpack.c.h.b16 %v1138
        %v1841 = vunpack.c.l.b16 %v1139
        %v1842 = vunpack.c.h.b16 %v1139
        %v1843 = vunpack.c.l.b16 %v1140
        %v1844 = vunpack.c.h.b16 %v1140
        %v1845 = vunpack.c.l.b16 %v1141
        %v1846 = vunpack.c.h.b16 %v1141
        %v1847 = vunpack.c.l.b16 %v1142
        %v1848 = vunpack.c.h.b16 %v1142
        %v1849 = vunpack.c.l.b16 %v1143
        %v1850 = vunpack.c.h.b16 %v1143
        %v1851 = vunpack.c.l.b16 %v1144
        %v1852 = vunpack.c.h.b16 %v1144
        %v1853 = vunpack.c.l.b16 %v1145
        %v1854 = vunpack.c.h.b16 %v1145
        %v1855 = vunpack.c.l.b16 %v1146
        %v1856 = vunpack.c.h.b16 %v1146
        %v1857 = vpack.c.b16 %v1603, %v1601
        %v1858 = vpack.c.b16 %v1604, %v1602
        %v1859 = vpack.c.b16 %v1607, %v1605
        %v1860 = vpack.c.b16 %v1608, %v1606
        %v1861 = vpack.c.b16 %v1611, %v1609
        %v1862 = vpack.c.b16 %v1612, %v1610
        %v1863 = vpack.c.b16 %v1615, %v1613
        %v1864 = vpack.c.b16 %v1616, %v1614
        %v1865 = vpack.c.b16 %v1619, %v1617
        %v1866 = vpack.c.b16 %v1620, %v1618
        %v1867 = vpack.c.b16 %v1623, %v1621
        %v1868 = vpack.c.b16 %v1624, %v1622
        %v1869 = vpack.c.b16 %v1627, %v1625
        %v1870 = vpack.c.b16 %v1628, %v1626
        %v1871 = vpack.c.b16 %v1631, %v1629
        %v1872 = vpack.c.b16 %v1632, %v1630
        %v1873 = vpack.c.b16 %v1635, %v1633
        %v1874 = vpack.c.b16 %v1636, %v1634
        %v1875 = vpack.c.b16 %v1639, %v1637
        %v1876 = vpack.c.b16 %v1640, %v1638
        %v1877 = vpack.c.b16 %v1643, %v1641
        %v1878 = vpack.c.b16 %v1644, %v1642
        %v1879 = vpack.c.b16 %v1647, %v1645
        %v1880 = vpack.c.b16 %v1648, %v1646
        %v1881 = vpack.c.b16 %v1651, %v1649
        %v1882 = vpack.c.b16 %v1652, %v1650
        %v1883 = vpack.c.b16 %v1655, %v1653
        %v1884 = vpack.c.b16 %v1656, %v1654
        %v1885 = vpack.c.b16 %v1659, %v1657
        %v1886 = vpack.c.b16 %v1660, %v1658
        %v1887 = vpack.c.b16 %v1663, %v1661
        %v1888 = vpack.c.b16 %v1664, %v1662
        %v1889 = vpack.c.b16 %v1667, %v1665
        %v1890 = vpack.c.b16 %v1668, %v1666
        %v1891 = vpack.c.b16 %v1671, %v1669
        %v1892 = vpack.c.b16 %v1672, %v1670
        %v1893 = vpack.c.b16 %v1675, %v1673
        %v1894 = vpack.c.b16 %v1676, %v1674
        %v1895 = vpack.c.b16 %v1679, %v1677
        %v1896 = vpack.c.b16 %v1680, %v1678
        %v1897 = vpack.c.b16 %v1683, %v1681
        %v1898 = vpack.c.b16 %v1684, %v1682
        %v1899 = vpack.c.b16 %v1687, %v1685
        %v1900 = vpack.c.b16 %v1688, %v1686
        %v1901 = vpack.c.b16 %v1691, %v1689
        %v1902 = vpack.c.b16 %v1692, %v1690
        %v1903 = vpack.c.b16 %v1695, %v1693
        %v1904 = vpack.c.b16 %v1696, %v1694
        %v1905 = vpack.c.b16 %v1699, %v1697
        %v1906 = vpack.c.b16 %v1700, %v1698
        %v1907 = vpack.c.b16 %v1703, %v1701
        %v1908 = vpack.c.b16 %v1704, %v1702
        %v1909 = vpack.c.b16 %v1707, %v1705
        %v1910 = vpack.c.b16 %v1708, %v1706
        %v1911 = vpack.c.b16 %v1711, %v1709
        %v1912 = vpack.c.b16 %v1712, %v1710
        %v1913 = vpack.c.b16 %v1715, %v1713
        %v1914 = vpack.c.b16 %v1716, %v1714
        %v1915 = vpack.c.b16 %v1719, %v1717
        %v1916 = vpack.c.b16 %v1720, %v1718
        %v1917 = vpack.c.b16 %v1723, %v1721
        %v1918 = vpack.c.b16 %v1724, %v1722
        %v1919 = vpack.c.b16 %v1727, %v1725
        %v1920 = vpack.c.b16 %v1728, %v1726
        %v1921 = vpack.c.b16 %v1731, %v1729
        %v1922 = vpack.c.b16 %v1732, %v1730
        %v1923 = vpack.c.b16 %v1735, %v1733
        %v1924 = vpack.c.b16 %v1736, %v1734
        %v1925 = vpack.c.b16 %v1739, %v1737
        %v1926 = vpack.c.b16 %v1740, %v1738
        %v1927 = vpack.c.b16 %v1743, %v1741
        %v1928 = vpack.c.b16 %v1744, %v1742
        %v1929 = vpack.c.b16 %v1747, %v1745
        %v1930 = vpack.c.b16 %v1748, %v1746
        %v1931 = vpack.c.b16 %v1751, %v1749
        %v1932 = vpack.c.b16 %v1752, %v1750
        %v1933 = vpack.c.b16 %v1755, %v1753
        %v1934 = vpack.c.b16 %v1756, %v1754
        %v1935 = vpack.c.b16 %v1759, %v1757
        %v1936 = vpack.c.b16 %v1760, %v1758
        %v1937 = vpack.c.b16 %v1763, %v1761
        %v1938 = vpack.c.b16 %v1764, %v1762
        %v1939 = vpack.c.b16 %v1767, %v1765
        %v1940 = vpack.c.b16 %v1768, %v1766
        %v1941 = vpack.c.b16 %v1771, %v1769
        %v1942 = vpack.c.b16 %v1772, %v1770
        %v1943 = vpack.c.b16 %v1775, %v1773
        %v1944 = vpack.c.b16 %v1776, %v1774
        %v1945 = vpack.c.b16 %v1779, %v1777
        %v1946 = vpack.c.b16 %v1780, %v1778
        %v1947 = vpack.c.b16 %v1783, %v1781
        %v1948 = vpack.c.b16 %v1784, %v1782
        %v1949 = vpack.c.b16 %v1787, %v1785
        %v1950 = vpack.c.b16 %v1788, %v1786
        %v1951 = vpack.c.b16 %v1791, %v1789
        %v1952 = vpack.c.b16 %v1792, %v1790
        %v1953 = vpack.c.b16 %v1795, %v1793
        %v1954 = vpack.c.b16 %v1796, %v1794
        %v1955 = vpack.c.b16 %v1799, %v1797
        %v1956 = vpack.c.b16 %v1800, %v1798
        %v1957 = vpack.c.b16 %v1803, %v1801
        %v1958 = vpack.c.b16 %v1804, %v1802
        %v1959 = vpack.c.b16 %v1807, %v1805
        %v1960 = vpack.c.b16 %v1808, %v1806
        %v1961 = vpack.c.b16 %v1811, %v1809
        %v1962 = vpack.c.b16 %v1812, %v1810
        %v1963 = vpack.c.b16 %v1815, %v1813
        %v1964 = vpack.c.b16 %v1816, %v1814
        %v1965 = vpack.c.b16 %v1819, %v1817
        %v1966 = vpack.c.b16 %v1820, %v1818
        %v1967 = vpack.c.b16 %v1823, %v1821
        %v1968 = vpack.c.b16 %v1824, %v1822
        %v1969 = vpack.c.b16 %v1827, %v1825
        %v1970 = vpack.c.b16 %v1828, %v1826
        %v1971 = vpack.c.b16 %v1831, %v1829
        %v1972 = vpack.c.b16 %v1832, %v1830
        %v1973 = vpack.c.b16 %v1835, %v1833
        %v1974 = vpack.c.b16 %v1836, %v1834
        %v1975 = vpack.c.b16 %v1839, %v1837
        %v1976 = vpack.c.b16 %v1840, %v1838
        %v1977 = vpack.c.b16 %v1843, %v1841
        %v1978 = vpack.c.b16 %v1844, %v1842
        %v1979 = vpack.c.b16 %v1847, %v1845
        %v1980 = vpack.c.b16 %v1848, %v1846
        %v1981 = vpack.c.b16 %v1851, %v1849
        %v1982 = vpack.c.b16 %v1852, %v1850
        %v1983 = vpack.c.b16 %v1855, %v1853
        %v1984 = vpack.c.b16 %v1856, %v1854
        %2113 = vmatpush.bf16.msra.mxu0 %v1871
        %2114 = vmatpush.bf16.msra.mxu0 %v1869
        %2115 = vmatpush.bf16.msra.mxu0 %v1867
        %2116 = vmatpush.bf16.msra.mxu0 %v1865
        %2117 = vmatpush.bf16.msra.mxu0 %v1863
        %2118 = vmatpush.bf16.msra.mxu0 %v1861
        %2119 = vmatpush.bf16.msra.mxu0 %v1859
        %2120 = vmatpush.bf16.msra.mxu0 %v1857
        %2121 = vmatmul.bf16.gmra.mxu0 %v1345
        %v2122 = vpop.f32.mrf.mxu0
        %v2123 = vadd.f32 %v1149, %v2122
        %v2124 = vpop.f32.mrf.mxu0
        %v2125 = vadd.f32 %v1149, %v2124
        %2126 = vmatmul.bf16.gmra.mxu0 %v1353
        %v2127 = vpop.f32.mrf.mxu0
        %v2128 = vadd.f32 %v1149, %v2127
        %v2129 = vpop.f32.mrf.mxu0
        %v2130 = vadd.f32 %v1149, %v2129
        %2131 = vmatmul.bf16.gmra.mxu0 %v1361
        %v2132 = vpop.f32.mrf.mxu0
        %v2133 = vadd.f32 %v1149, %v2132
        %v2134 = vpop.f32.mrf.mxu0
        %v2135 = vadd.f32 %v1149, %v2134
        %2136 = vmatmul.bf16.gmra.mxu0 %v1369
        %v2137 = vpop.f32.mrf.mxu0
        %v2138 = vadd.f32 %v1149, %v2137
        %v2139 = vpop.f32.mrf.mxu0
        %v2140 = vadd.f32 %v1149, %v2139
        %2141 = vmatmul.bf16.gmra.mxu0 %v1377
        %v2142 = vpop.f32.mrf.mxu0
        %v2143 = vadd.f32 %v1149, %v2142
        %v2144 = vpop.f32.mrf.mxu0
        %v2145 = vadd.f32 %v1149, %v2144
        %2146 = vmatmul.bf16.gmra.mxu0 %v1385
        %v2147 = vpop.f32.mrf.mxu0
        %v2148 = vadd.f32 %v1149, %v2147
        %v2149 = vpop.f32.mrf.mxu0
        %v2150 = vadd.f32 %v1149, %v2149
        %2151 = vmatmul.bf16.gmra.mxu0 %v1393
        %v2152 = vpop.f32.mrf.mxu0
        %v2153 = vadd.f32 %v1149, %v2152
        %v2154 = vpop.f32.mrf.mxu0
        %v2155 = vadd.f32 %v1149, %v2154
        %2156 = vmatmul.bf16.gmra.mxu0 %v1401
        %v2157 = vpop.f32.mrf.mxu0
        %v2158 = vadd.f32 %v1149, %v2157
        %v2159 = vpop.f32.mrf.mxu0
        %v2160 = vadd.f32 %v1149, %v2159
        %2161 = vdwg.mxu0
        %2162 = vmatpush.bf16.msra.mxu0 %v1887
        %2163 = vmatpush.bf16.msra.mxu0 %v1885
        %2164 = vmatpush.bf16.msra.mxu0 %v1883
        %2165 = vmatpush.bf16.msra.mxu0 %v1881
        %2166 = vmatpush.bf16.msra.mxu0 %v1879
        %2167 = vmatpush.bf16.msra.mxu0 %v1877
        %2168 = vmatpush.bf16.msra.mxu0 %v1875
        %2169 = vmatpush.bf16.msra.mxu0 %v1873
        %2170 = vmatmul.bf16.gmra.mxu0 %v1346
        %v2171 = vpop.f32.mrf.mxu0
        %v2172 = vadd.f32 %v2123, %v2171
        %v2173 = vpop.f32.mrf.mxu0
        %v2174 = vadd.f32 %v2125, %v2173
        %2175 = vmatmul.bf16.gmra.mxu0 %v1354
        %v2176 = vpop.f32.mrf.mxu0
        %v2177 = vadd.f32 %v2128, %v2176
        %v2178 = vpop.f32.mrf.mxu0
        %v2179 = vadd.f32 %v2130, %v2178
        %2180 = vmatmul.bf16.gmra.mxu0 %v1362
        %v2181 = vpop.f32.mrf.mxu0
        %v2182 = vadd.f32 %v2133, %v2181
        %v2183 = vpop.f32.mrf.mxu0
        %v2184 = vadd.f32 %v2135, %v2183
        %2185 = vmatmul.bf16.gmra.mxu0 %v1370
        %v2186 = vpop.f32.mrf.mxu0
        %v2187 = vadd.f32 %v2138, %v2186
        %v2188 = vpop.f32.mrf.mxu0
        %v2189 = vadd.f32 %v2140, %v2188
        %2190 = vmatmul.bf16.gmra.mxu0 %v1378
        %v2191 = vpop.f32.mrf.mxu0
        %v2192 = vadd.f32 %v2143, %v2191
        %v2193 = vpop.f32.mrf.mxu0
        %v2194 = vadd.f32 %v2145, %v2193
        %2195 = vmatmul.bf16.gmra.mxu0 %v1386
        %v2196 = vpop.f32.mrf.mxu0
        %v2197 = vadd.f32 %v2148, %v2196
        %v2198 = vpop.f32.mrf.mxu0
        %v2199 = vadd.f32 %v2150, %v2198
        %2200 = vmatmul.bf16.gmra.mxu0 %v1394
        %v2201 = vpop.f32.mrf.mxu0
        %v2202 = vadd.f32 %v2153, %v2201
        %v2203 = vpop.f32.mrf.mxu0
        %v2204 = vadd.f32 %v2155, %v2203
        %2205 = vmatmul.bf16.gmra.mxu0 %v1402
        %v2206 = vpop.f32.mrf.mxu0
        %v2207 = vadd.f32 %v2158, %v2206
        %v2208 = vpop.f32.mrf.mxu0
        %v2209 = vadd.f32 %v2160, %v2208
        %2210 = vdwg.mxu0
        %2211 = vmatpush.bf16.msra.mxu0 %v1903
        %2212 = vmatpush.bf16.msra.mxu0 %v1901
        %2213 = vmatpush.bf16.msra.mxu0 %v1899
        %2214 = vmatpush.bf16.msra.mxu0 %v1897
        %2215 = vmatpush.bf16.msra.mxu0 %v1895
        %2216 = vmatpush.bf16.msra.mxu0 %v1893
        %2217 = vmatpush.bf16.msra.mxu0 %v1891
        %2218 = vmatpush.bf16.msra.mxu0 %v1889
        %2219 = vmatmul.bf16.gmra.mxu0 %v1347
        %v2220 = vpop.f32.mrf.mxu0
        %v2221 = vadd.f32 %v2172, %v2220
        %v2222 = vpop.f32.mrf.mxu0
        %v2223 = vadd.f32 %v2174, %v2222
        %2224 = vmatmul.bf16.gmra.mxu0 %v1355
        %v2225 = vpop.f32.mrf.mxu0
        %v2226 = vadd.f32 %v2177, %v2225
        %v2227 = vpop.f32.mrf.mxu0
        %v2228 = vadd.f32 %v2179, %v2227
        %2229 = vmatmul.bf16.gmra.mxu0 %v1363
        %v2230 = vpop.f32.mrf.mxu0
        %v2231 = vadd.f32 %v2182, %v2230
        %v2232 = vpop.f32.mrf.mxu0
        %v2233 = vadd.f32 %v2184, %v2232
        %2234 = vmatmul.bf16.gmra.mxu0 %v1371
        %v2235 = vpop.f32.mrf.mxu0
        %v2236 = vadd.f32 %v2187, %v2235
        %v2237 = vpop.f32.mrf.mxu0
        %v2238 = vadd.f32 %v2189, %v2237
        %2239 = vmatmul.bf16.gmra.mxu0 %v1379
        %v2240 = vpop.f32.mrf.mxu0
        %v2241 = vadd.f32 %v2192, %v2240
        %v2242 = vpop.f32.mrf.mxu0
        %v2243 = vadd.f32 %v2194, %v2242
        %2244 = vmatmul.bf16.gmra.mxu0 %v1387
        %v2245 = vpop.f32.mrf.mxu0
        %v2246 = vadd.f32 %v2197, %v2245
        %v2247 = vpop.f32.mrf.mxu0
        %v2248 = vadd.f32 %v2199, %v2247
        %2249 = vmatmul.bf16.gmra.mxu0 %v1395
        %v2250 = vpop.f32.mrf.mxu0
        %v2251 = vadd.f32 %v2202, %v2250
        %v2252 = vpop.f32.mrf.mxu0
        %v2253 = vadd.f32 %v2204, %v2252
        %2254 = vmatmul.bf16.gmra.mxu0 %v1403
        %v2255 = vpop.f32.mrf.mxu0
        %v2256 = vadd.f32 %v2207, %v2255
        %v2257 = vpop.f32.mrf.mxu0
        %v2258 = vadd.f32 %v2209, %v2257
        %2259 = vdwg.mxu0
        %2260 = vmatpush.bf16.msra.mxu0 %v1919
        %2261 = vmatpush.bf16.msra.mxu0 %v1917
        %2262 = vmatpush.bf16.msra.mxu0 %v1915
        %2263 = vmatpush.bf16.msra.mxu0 %v1913
        %2264 = vmatpush.bf16.msra.mxu0 %v1911
        %2265 = vmatpush.bf16.msra.mxu0 %v1909
        %2266 = vmatpush.bf16.msra.mxu0 %v1907
        %2267 = vmatpush.bf16.msra.mxu0 %v1905
        %2268 = vmatmul.bf16.gmra.mxu0 %v1348
        %v2269 = vpop.f32.mrf.mxu0
        %v2270 = vadd.f32 %v2221, %v2269
        %v2271 = vpop.f32.mrf.mxu0
        %v2272 = vadd.f32 %v2223, %v2271
        %2273 = vmatmul.bf16.gmra.mxu0 %v1356
        %v2274 = vpop.f32.mrf.mxu0
        %v2275 = vadd.f32 %v2226, %v2274
        %v2276 = vpop.f32.mrf.mxu0
        %v2277 = vadd.f32 %v2228, %v2276
        %2278 = vmatmul.bf16.gmra.mxu0 %v1364
        %v2279 = vpop.f32.mrf.mxu0
        %v2280 = vadd.f32 %v2231, %v2279
        %v2281 = vpop.f32.mrf.mxu0
        %v2282 = vadd.f32 %v2233, %v2281
        %2283 = vmatmul.bf16.gmra.mxu0 %v1372
        %v2284 = vpop.f32.mrf.mxu0
        %v2285 = vadd.f32 %v2236, %v2284
        %v2286 = vpop.f32.mrf.mxu0
        %v2287 = vadd.f32 %v2238, %v2286
        %2288 = vmatmul.bf16.gmra.mxu0 %v1380
        %v2289 = vpop.f32.mrf.mxu0
        %v2290 = vadd.f32 %v2241, %v2289
        %v2291 = vpop.f32.mrf.mxu0
        %v2292 = vadd.f32 %v2243, %v2291
        %2293 = vmatmul.bf16.gmra.mxu0 %v1388
        %v2294 = vpop.f32.mrf.mxu0
        %v2295 = vadd.f32 %v2246, %v2294
        %v2296 = vpop.f32.mrf.mxu0
        %v2297 = vadd.f32 %v2248, %v2296
        %2298 = vmatmul.bf16.gmra.mxu0 %v1396
        %v2299 = vpop.f32.mrf.mxu0
        %v2300 = vadd.f32 %v2251, %v2299
        %v2301 = vpop.f32.mrf.mxu0
        %v2302 = vadd.f32 %v2253, %v2301
        %2303 = vmatmul.bf16.gmra.mxu0 %v1404
        %v2304 = vpop.f32.mrf.mxu0
        %v2305 = vadd.f32 %v2256, %v2304
        %v2306 = vpop.f32.mrf.mxu0
        %v2307 = vadd.f32 %v2258, %v2306
        %2308 = vdwg.mxu0
        %2309 = vmatpush.bf16.msra.mxu0 %v1935
        %2310 = vmatpush.bf16.msra.mxu0 %v1933
        %2311 = vmatpush.bf16.msra.mxu0 %v1931
        %2312 = vmatpush.bf16.msra.mxu0 %v1929
        %2313 = vmatpush.bf16.msra.mxu0 %v1927
        %2314 = vmatpush.bf16.msra.mxu0 %v1925
        %2315 = vmatpush.bf16.msra.mxu0 %v1923
        %2316 = vmatpush.bf16.msra.mxu0 %v1921
        %2317 = vmatmul.bf16.gmra.mxu0 %v1349
        %v2318 = vpop.f32.mrf.mxu0
        %v2319 = vadd.f32 %v2270, %v2318
        %v2320 = vpop.f32.mrf.mxu0
        %v2321 = vadd.f32 %v2272, %v2320
        %2322 = vmatmul.bf16.gmra.mxu0 %v1357
        %v2323 = vpop.f32.mrf.mxu0
        %v2324 = vadd.f32 %v2275, %v2323
        %v2325 = vpop.f32.mrf.mxu0
        %v2326 = vadd.f32 %v2277, %v2325
        %2327 = vmatmul.bf16.gmra.mxu0 %v1365
        %v2328 = vpop.f32.mrf.mxu0
        %v2329 = vadd.f32 %v2280, %v2328
        %v2330 = vpop.f32.mrf.mxu0
        %v2331 = vadd.f32 %v2282, %v2330
        %2332 = vmatmul.bf16.gmra.mxu0 %v1373
        %v2333 = vpop.f32.mrf.mxu0
        %v2334 = vadd.f32 %v2285, %v2333
        %v2335 = vpop.f32.mrf.mxu0
        %v2336 = vadd.f32 %v2287, %v2335
        %2337 = vmatmul.bf16.gmra.mxu0 %v1381
        %v2338 = vpop.f32.mrf.mxu0
        %v2339 = vadd.f32 %v2290, %v2338
        %v2340 = vpop.f32.mrf.mxu0
        %v2341 = vadd.f32 %v2292, %v2340
        %2342 = vmatmul.bf16.gmra.mxu0 %v1389
        %v2343 = vpop.f32.mrf.mxu0
        %v2344 = vadd.f32 %v2295, %v2343
        %v2345 = vpop.f32.mrf.mxu0
        %v2346 = vadd.f32 %v2297, %v2345
        %2347 = vmatmul.bf16.gmra.mxu0 %v1397
        %v2348 = vpop.f32.mrf.mxu0
        %v2349 = vadd.f32 %v2300, %v2348
        %v2350 = vpop.f32.mrf.mxu0
        %v2351 = vadd.f32 %v2302, %v2350
        %2352 = vmatmul.bf16.gmra.mxu0 %v1405
        %v2353 = vpop.f32.mrf.mxu0
        %v2354 = vadd.f32 %v2305, %v2353
        %v2355 = vpop.f32.mrf.mxu0
        %v2356 = vadd.f32 %v2307, %v2355
        %2357 = vdwg.mxu0
        %2358 = vmatpush.bf16.msra.mxu0 %v1951
        %2359 = vmatpush.bf16.msra.mxu0 %v1949
        %2360 = vmatpush.bf16.msra.mxu0 %v1947
        %2361 = vmatpush.bf16.msra.mxu0 %v1945
        %2362 = vmatpush.bf16.msra.mxu0 %v1943
        %2363 = vmatpush.bf16.msra.mxu0 %v1941
        %2364 = vmatpush.bf16.msra.mxu0 %v1939
        %2365 = vmatpush.bf16.msra.mxu0 %v1937
        %2366 = vmatmul.bf16.gmra.mxu0 %v1350
        %v2367 = vpop.f32.mrf.mxu0
        %v2368 = vadd.f32 %v2319, %v2367
        %v2369 = vpop.f32.mrf.mxu0
        %v2370 = vadd.f32 %v2321, %v2369
        %2371 = vmatmul.bf16.gmra.mxu0 %v1358
        %v2372 = vpop.f32.mrf.mxu0
        %v2373 = vadd.f32 %v2324, %v2372
        %v2374 = vpop.f32.mrf.mxu0
        %v2375 = vadd.f32 %v2326, %v2374
        %2376 = vmatmul.bf16.gmra.mxu0 %v1366
        %v2377 = vpop.f32.mrf.mxu0
        %v2378 = vadd.f32 %v2329, %v2377
        %v2379 = vpop.f32.mrf.mxu0
        %v2380 = vadd.f32 %v2331, %v2379
        %2381 = vmatmul.bf16.gmra.mxu0 %v1374
        %v2382 = vpop.f32.mrf.mxu0
        %v2383 = vadd.f32 %v2334, %v2382
        %v2384 = vpop.f32.mrf.mxu0
        %v2385 = vadd.f32 %v2336, %v2384
        %2386 = vmatmul.bf16.gmra.mxu0 %v1382
        %v2387 = vpop.f32.mrf.mxu0
        %v2388 = vadd.f32 %v2339, %v2387
        %v2389 = vpop.f32.mrf.mxu0
        %v2390 = vadd.f32 %v2341, %v2389
        %2391 = vmatmul.bf16.gmra.mxu0 %v1390
        %v2392 = vpop.f32.mrf.mxu0
        %v2393 = vadd.f32 %v2344, %v2392
        %v2394 = vpop.f32.mrf.mxu0
        %v2395 = vadd.f32 %v2346, %v2394
        %2396 = vmatmul.bf16.gmra.mxu0 %v1398
        %v2397 = vpop.f32.mrf.mxu0
        %v2398 = vadd.f32 %v2349, %v2397
        %v2399 = vpop.f32.mrf.mxu0
        %v2400 = vadd.f32 %v2351, %v2399
        %2401 = vmatmul.bf16.gmra.mxu0 %v1406
        %v2402 = vpop.f32.mrf.mxu0
        %v2403 = vadd.f32 %v2354, %v2402
        %v2404 = vpop.f32.mrf.mxu0
        %v2405 = vadd.f32 %v2356, %v2404
        %2406 = vdwg.mxu0
        %2407 = vmatpush.bf16.msra.mxu0 %v1967
        %2408 = vmatpush.bf16.msra.mxu0 %v1965
        %2409 = vmatpush.bf16.msra.mxu0 %v1963
        %2410 = vmatpush.bf16.msra.mxu0 %v1961
        %2411 = vmatpush.bf16.msra.mxu0 %v1959
        %2412 = vmatpush.bf16.msra.mxu0 %v1957
        %2413 = vmatpush.bf16.msra.mxu0 %v1955
        %2414 = vmatpush.bf16.msra.mxu0 %v1953
        %2415 = vmatmul.bf16.gmra.mxu0 %v1351
        %v2416 = vpop.f32.mrf.mxu0
        %v2417 = vadd.f32 %v2368, %v2416
        %v2418 = vpop.f32.mrf.mxu0
        %v2419 = vadd.f32 %v2370, %v2418
        %2420 = vmatmul.bf16.gmra.mxu0 %v1359
        %v2421 = vpop.f32.mrf.mxu0
        %v2422 = vadd.f32 %v2373, %v2421
        %v2423 = vpop.f32.mrf.mxu0
        %v2424 = vadd.f32 %v2375, %v2423
        %2425 = vmatmul.bf16.gmra.mxu0 %v1367
        %v2426 = vpop.f32.mrf.mxu0
        %v2427 = vadd.f32 %v2378, %v2426
        %v2428 = vpop.f32.mrf.mxu0
        %v2429 = vadd.f32 %v2380, %v2428
        %2430 = vmatmul.bf16.gmra.mxu0 %v1375
        %v2431 = vpop.f32.mrf.mxu0
        %v2432 = vadd.f32 %v2383, %v2431
        %v2433 = vpop.f32.mrf.mxu0
        %v2434 = vadd.f32 %v2385, %v2433
        %2435 = vmatmul.bf16.gmra.mxu0 %v1383
        %v2436 = vpop.f32.mrf.mxu0
        %v2437 = vadd.f32 %v2388, %v2436
        %v2438 = vpop.f32.mrf.mxu0
        %v2439 = vadd.f32 %v2390, %v2438
        %2440 = vmatmul.bf16.gmra.mxu0 %v1391
        %v2441 = vpop.f32.mrf.mxu0
        %v2442 = vadd.f32 %v2393, %v2441
        %v2443 = vpop.f32.mrf.mxu0
        %v2444 = vadd.f32 %v2395, %v2443
        %2445 = vmatmul.bf16.gmra.mxu0 %v1399
        %v2446 = vpop.f32.mrf.mxu0
        %v2447 = vadd.f32 %v2398, %v2446
        %v2448 = vpop.f32.mrf.mxu0
        %v2449 = vadd.f32 %v2400, %v2448
        %2450 = vmatmul.bf16.gmra.mxu0 %v1407
        %v2451 = vpop.f32.mrf.mxu0
        %v2452 = vadd.f32 %v2403, %v2451
        %v2453 = vpop.f32.mrf.mxu0
        %v2454 = vadd.f32 %v2405, %v2453
        %2455 = vdwg.mxu0
        %2456 = vmatpush.bf16.msra.mxu0 %v1983
        %2457 = vmatpush.bf16.msra.mxu0 %v1981
        %2458 = vmatpush.bf16.msra.mxu0 %v1979
        %2459 = vmatpush.bf16.msra.mxu0 %v1977
        %2460 = vmatpush.bf16.msra.mxu0 %v1975
        %2461 = vmatpush.bf16.msra.mxu0 %v1973
        %2462 = vmatpush.bf16.msra.mxu0 %v1971
        %2463 = vmatpush.bf16.msra.mxu0 %v1969
        %2464 = vmatmul.bf16.gmra.mxu0 %v1352
        %v2465 = vpop.f32.mrf.mxu0
        %v2466 = vadd.f32 %v2417, %v2465
        %v2467 = vpop.f32.mrf.mxu0
        %v2468 = vadd.f32 %v2419, %v2467
        %2469 = vmatmul.bf16.gmra.mxu0 %v1360
        %v2470 = vpop.f32.mrf.mxu0
        %v2471 = vadd.f32 %v2422, %v2470
        %v2472 = vpop.f32.mrf.mxu0
        %v2473 = vadd.f32 %v2424, %v2472
        %2474 = vmatmul.bf16.gmra.mxu0 %v1368
        %v2475 = vpop.f32.mrf.mxu0
        %v2476 = vadd.f32 %v2427, %v2475
        %v2477 = vpop.f32.mrf.mxu0
        %v2478 = vadd.f32 %v2429, %v2477
        %2479 = vmatmul.bf16.gmra.mxu0 %v1376
        %v2480 = vpop.f32.mrf.mxu0
        %v2481 = vadd.f32 %v2432, %v2480
        %v2482 = vpop.f32.mrf.mxu0
        %v2483 = vadd.f32 %v2434, %v2482
        %2484 = vmatmul.bf16.gmra.mxu0 %v1384
        %v2485 = vpop.f32.mrf.mxu0
        %v2486 = vadd.f32 %v2437, %v2485
        %v2487 = vpop.f32.mrf.mxu0
        %v2488 = vadd.f32 %v2439, %v2487
        %2489 = vmatmul.bf16.gmra.mxu0 %v1392
        %v2490 = vpop.f32.mrf.mxu0
        %v2491 = vadd.f32 %v2442, %v2490
        %v2492 = vpop.f32.mrf.mxu0
        %v2493 = vadd.f32 %v2444, %v2492
        %2494 = vmatmul.bf16.gmra.mxu0 %v1400
        %v2495 = vpop.f32.mrf.mxu0
        %v2496 = vadd.f32 %v2447, %v2495
        %v2497 = vpop.f32.mrf.mxu0
        %v2498 = vadd.f32 %v2449, %v2497
        %2499 = vmatmul.bf16.gmra.mxu0 %v1408
        %v2500 = vpop.f32.mrf.mxu0
        %v2501 = vadd.f32 %v2452, %v2500
        %v2502 = vpop.f32.mrf.mxu0
        %v2503 = vadd.f32 %v2454, %v2502
        %2504 = vdwg.mxu0
        %2505 = vmatpush.bf16.msra.mxu0 %v1872
        %2506 = vmatpush.bf16.msra.mxu0 %v1870
        %2507 = vmatpush.bf16.msra.mxu0 %v1868
        %2508 = vmatpush.bf16.msra.mxu0 %v1866
        %2509 = vmatpush.bf16.msra.mxu0 %v1864
        %2510 = vmatpush.bf16.msra.mxu0 %v1862
        %2511 = vmatpush.bf16.msra.mxu0 %v1860
        %2512 = vmatpush.bf16.msra.mxu0 %v1858
        %2513 = vmatmul.bf16.gmra.mxu0 %v1345
        %v2514 = vpop.f32.mrf.mxu0
        %v2515 = vadd.f32 %v1150, %v2514
        %v2516 = vpop.f32.mrf.mxu0
        %v2517 = vadd.f32 %v1150, %v2516
        %2518 = vmatmul.bf16.gmra.mxu0 %v1353
        %v2519 = vpop.f32.mrf.mxu0
        %v2520 = vadd.f32 %v1150, %v2519
        %v2521 = vpop.f32.mrf.mxu0
        %v2522 = vadd.f32 %v1150, %v2521
        %2523 = vmatmul.bf16.gmra.mxu0 %v1361
        %v2524 = vpop.f32.mrf.mxu0
        %v2525 = vadd.f32 %v1150, %v2524
        %v2526 = vpop.f32.mrf.mxu0
        %v2527 = vadd.f32 %v1150, %v2526
        %2528 = vmatmul.bf16.gmra.mxu0 %v1369
        %v2529 = vpop.f32.mrf.mxu0
        %v2530 = vadd.f32 %v1150, %v2529
        %v2531 = vpop.f32.mrf.mxu0
        %v2532 = vadd.f32 %v1150, %v2531
        %2533 = vmatmul.bf16.gmra.mxu0 %v1377
        %v2534 = vpop.f32.mrf.mxu0
        %v2535 = vadd.f32 %v1150, %v2534
        %v2536 = vpop.f32.mrf.mxu0
        %v2537 = vadd.f32 %v1150, %v2536
        %2538 = vmatmul.bf16.gmra.mxu0 %v1385
        %v2539 = vpop.f32.mrf.mxu0
        %v2540 = vadd.f32 %v1150, %v2539
        %v2541 = vpop.f32.mrf.mxu0
        %v2542 = vadd.f32 %v1150, %v2541
        %2543 = vmatmul.bf16.gmra.mxu0 %v1393
        %v2544 = vpop.f32.mrf.mxu0
        %v2545 = vadd.f32 %v1150, %v2544
        %v2546 = vpop.f32.mrf.mxu0
        %v2547 = vadd.f32 %v1150, %v2546
        %2548 = vmatmul.bf16.gmra.mxu0 %v1401
        %v2549 = vpop.f32.mrf.mxu0
        %v2550 = vadd.f32 %v1150, %v2549
        %v2551 = vpop.f32.mrf.mxu0
        %v2552 = vadd.f32 %v1150, %v2551
        %2553 = vdwg.mxu0
        %2554 = vmatpush.bf16.msra.mxu0 %v1888
        %2555 = vmatpush.bf16.msra.mxu0 %v1886
        %2556 = vmatpush.bf16.msra.mxu0 %v1884
        %2557 = vmatpush.bf16.msra.mxu0 %v1882
        %2558 = vmatpush.bf16.msra.mxu0 %v1880
        %2559 = vmatpush.bf16.msra.mxu0 %v1878
        %2560 = vmatpush.bf16.msra.mxu0 %v1876
        %2561 = vmatpush.bf16.msra.mxu0 %v1874
        %2562 = vmatmul.bf16.gmra.mxu0 %v1346
        %v2563 = vpop.f32.mrf.mxu0
        %v2564 = vadd.f32 %v2515, %v2563
        %v2565 = vpop.f32.mrf.mxu0
        %v2566 = vadd.f32 %v2517, %v2565
        %2567 = vmatmul.bf16.gmra.mxu0 %v1354
        %v2568 = vpop.f32.mrf.mxu0
        %v2569 = vadd.f32 %v2520, %v2568
        %v2570 = vpop.f32.mrf.mxu0
        %v2571 = vadd.f32 %v2522, %v2570
        %2572 = vmatmul.bf16.gmra.mxu0 %v1362
        %v2573 = vpop.f32.mrf.mxu0
        %v2574 = vadd.f32 %v2525, %v2573
        %v2575 = vpop.f32.mrf.mxu0
        %v2576 = vadd.f32 %v2527, %v2575
        %2577 = vmatmul.bf16.gmra.mxu0 %v1370
        %v2578 = vpop.f32.mrf.mxu0
        %v2579 = vadd.f32 %v2530, %v2578
        %v2580 = vpop.f32.mrf.mxu0
        %v2581 = vadd.f32 %v2532, %v2580
        %2582 = vmatmul.bf16.gmra.mxu0 %v1378
        %v2583 = vpop.f32.mrf.mxu0
        %v2584 = vadd.f32 %v2535, %v2583
        %v2585 = vpop.f32.mrf.mxu0
        %v2586 = vadd.f32 %v2537, %v2585
        %2587 = vmatmul.bf16.gmra.mxu0 %v1386
        %v2588 = vpop.f32.mrf.mxu0
        %v2589 = vadd.f32 %v2540, %v2588
        %v2590 = vpop.f32.mrf.mxu0
        %v2591 = vadd.f32 %v2542, %v2590
        %2592 = vmatmul.bf16.gmra.mxu0 %v1394
        %v2593 = vpop.f32.mrf.mxu0
        %v2594 = vadd.f32 %v2545, %v2593
        %v2595 = vpop.f32.mrf.mxu0
        %v2596 = vadd.f32 %v2547, %v2595
        %2597 = vmatmul.bf16.gmra.mxu0 %v1402
        %v2598 = vpop.f32.mrf.mxu0
        %v2599 = vadd.f32 %v2550, %v2598
        %v2600 = vpop.f32.mrf.mxu0
        %v2601 = vadd.f32 %v2552, %v2600
        %2602 = vdwg.mxu0
        %2603 = vmatpush.bf16.msra.mxu0 %v1904
        %2604 = vmatpush.bf16.msra.mxu0 %v1902
        %2605 = vmatpush.bf16.msra.mxu0 %v1900
        %2606 = vmatpush.bf16.msra.mxu0 %v1898
        %2607 = vmatpush.bf16.msra.mxu0 %v1896
        %2608 = vmatpush.bf16.msra.mxu0 %v1894
        %2609 = vmatpush.bf16.msra.mxu0 %v1892
        %2610 = vmatpush.bf16.msra.mxu0 %v1890
        %2611 = vmatmul.bf16.gmra.mxu0 %v1347
        %v2612 = vpop.f32.mrf.mxu0
        %v2613 = vadd.f32 %v2564, %v2612
        %v2614 = vpop.f32.mrf.mxu0
        %v2615 = vadd.f32 %v2566, %v2614
        %2616 = vmatmul.bf16.gmra.mxu0 %v1355
        %v2617 = vpop.f32.mrf.mxu0
        %v2618 = vadd.f32 %v2569, %v2617
        %v2619 = vpop.f32.mrf.mxu0
        %v2620 = vadd.f32 %v2571, %v2619
        %2621 = vmatmul.bf16.gmra.mxu0 %v1363
        %v2622 = vpop.f32.mrf.mxu0
        %v2623 = vadd.f32 %v2574, %v2622
        %v2624 = vpop.f32.mrf.mxu0
        %v2625 = vadd.f32 %v2576, %v2624
        %2626 = vmatmul.bf16.gmra.mxu0 %v1371
        %v2627 = vpop.f32.mrf.mxu0
        %v2628 = vadd.f32 %v2579, %v2627
        %v2629 = vpop.f32.mrf.mxu0
        %v2630 = vadd.f32 %v2581, %v2629
        %2631 = vmatmul.bf16.gmra.mxu0 %v1379
        %v2632 = vpop.f32.mrf.mxu0
        %v2633 = vadd.f32 %v2584, %v2632
        %v2634 = vpop.f32.mrf.mxu0
        %v2635 = vadd.f32 %v2586, %v2634
        %2636 = vmatmul.bf16.gmra.mxu0 %v1387
        %v2637 = vpop.f32.mrf.mxu0
        %v2638 = vadd.f32 %v2589, %v2637
        %v2639 = vpop.f32.mrf.mxu0
        %v2640 = vadd.f32 %v2591, %v2639
        %2641 = vmatmul.bf16.gmra.mxu0 %v1395
        %v2642 = vpop.f32.mrf.mxu0
        %v2643 = vadd.f32 %v2594, %v2642
        %v2644 = vpop.f32.mrf.mxu0
        %v2645 = vadd.f32 %v2596, %v2644
        %2646 = vmatmul.bf16.gmra.mxu0 %v1403
        %v2647 = vpop.f32.mrf.mxu0
        %v2648 = vadd.f32 %v2599, %v2647
        %v2649 = vpop.f32.mrf.mxu0
        %v2650 = vadd.f32 %v2601, %v2649
        %2651 = vdwg.mxu0
        %2652 = vmatpush.bf16.msra.mxu0 %v1920
        %2653 = vmatpush.bf16.msra.mxu0 %v1918
        %2654 = vmatpush.bf16.msra.mxu0 %v1916
        %2655 = vmatpush.bf16.msra.mxu0 %v1914
        %2656 = vmatpush.bf16.msra.mxu0 %v1912
        %2657 = vmatpush.bf16.msra.mxu0 %v1910
        %2658 = vmatpush.bf16.msra.mxu0 %v1908
        %2659 = vmatpush.bf16.msra.mxu0 %v1906
        %2660 = vmatmul.bf16.gmra.mxu0 %v1348
        %v2661 = vpop.f32.mrf.mxu0
        %v2662 = vadd.f32 %v2613, %v2661
        %v2663 = vpop.f32.mrf.mxu0
        %v2664 = vadd.f32 %v2615, %v2663
        %2665 = vmatmul.bf16.gmra.mxu0 %v1356
        %v2666 = vpop.f32.mrf.mxu0
        %v2667 = vadd.f32 %v2618, %v2666
        %v2668 = vpop.f32.mrf.mxu0
        %v2669 = vadd.f32 %v2620, %v2668
        %2670 = vmatmul.bf16.gmra.mxu0 %v1364
        %v2671 = vpop.f32.mrf.mxu0
        %v2672 = vadd.f32 %v2623, %v2671
        %v2673 = vpop.f32.mrf.mxu0
        %v2674 = vadd.f32 %v2625, %v2673
        %2675 = vmatmul.bf16.gmra.mxu0 %v1372
        %v2676 = vpop.f32.mrf.mxu0
        %v2677 = vadd.f32 %v2628, %v2676
        %v2678 = vpop.f32.mrf.mxu0
        %v2679 = vadd.f32 %v2630, %v2678
        %2680 = vmatmul.bf16.gmra.mxu0 %v1380
        %v2681 = vpop.f32.mrf.mxu0
        %v2682 = vadd.f32 %v2633, %v2681
        %v2683 = vpop.f32.mrf.mxu0
        %v2684 = vadd.f32 %v2635, %v2683
        %2685 = vmatmul.bf16.gmra.mxu0 %v1388
        %v2686 = vpop.f32.mrf.mxu0
        %v2687 = vadd.f32 %v2638, %v2686
        %v2688 = vpop.f32.mrf.mxu0
        %v2689 = vadd.f32 %v2640, %v2688
        %2690 = vmatmul.bf16.gmra.mxu0 %v1396
        %v2691 = vpop.f32.mrf.mxu0
        %v2692 = vadd.f32 %v2643, %v2691
        %v2693 = vpop.f32.mrf.mxu0
        %v2694 = vadd.f32 %v2645, %v2693
        %2695 = vmatmul.bf16.gmra.mxu0 %v1404
        %v2696 = vpop.f32.mrf.mxu0
        %v2697 = vadd.f32 %v2648, %v2696
        %v2698 = vpop.f32.mrf.mxu0
        %v2699 = vadd.f32 %v2650, %v2698
        %2700 = vdwg.mxu0
        %2701 = vmatpush.bf16.msra.mxu0 %v1936
        %2702 = vmatpush.bf16.msra.mxu0 %v1934
        %2703 = vmatpush.bf16.msra.mxu0 %v1932
        %2704 = vmatpush.bf16.msra.mxu0 %v1930
        %2705 = vmatpush.bf16.msra.mxu0 %v1928
        %2706 = vmatpush.bf16.msra.mxu0 %v1926
        %2707 = vmatpush.bf16.msra.mxu0 %v1924
        %2708 = vmatpush.bf16.msra.mxu0 %v1922
        %2709 = vmatmul.bf16.gmra.mxu0 %v1349
        %v2710 = vpop.f32.mrf.mxu0
        %v2711 = vadd.f32 %v2662, %v2710
        %v2712 = vpop.f32.mrf.mxu0
        %v2713 = vadd.f32 %v2664, %v2712
        %2714 = vmatmul.bf16.gmra.mxu0 %v1357
        %v2715 = vpop.f32.mrf.mxu0
        %v2716 = vadd.f32 %v2667, %v2715
        %v2717 = vpop.f32.mrf.mxu0
        %v2718 = vadd.f32 %v2669, %v2717
        %2719 = vmatmul.bf16.gmra.mxu0 %v1365
        %v2720 = vpop.f32.mrf.mxu0
        %v2721 = vadd.f32 %v2672, %v2720
        %v2722 = vpop.f32.mrf.mxu0
        %v2723 = vadd.f32 %v2674, %v2722
        %2724 = vmatmul.bf16.gmra.mxu0 %v1373
        %v2725 = vpop.f32.mrf.mxu0
        %v2726 = vadd.f32 %v2677, %v2725
        %v2727 = vpop.f32.mrf.mxu0
        %v2728 = vadd.f32 %v2679, %v2727
        %2729 = vmatmul.bf16.gmra.mxu0 %v1381
        %v2730 = vpop.f32.mrf.mxu0
        %v2731 = vadd.f32 %v2682, %v2730
        %v2732 = vpop.f32.mrf.mxu0
        %v2733 = vadd.f32 %v2684, %v2732
        %2734 = vmatmul.bf16.gmra.mxu0 %v1389
        %v2735 = vpop.f32.mrf.mxu0
        %v2736 = vadd.f32 %v2687, %v2735
        %v2737 = vpop.f32.mrf.mxu0
        %v2738 = vadd.f32 %v2689, %v2737
        %2739 = vmatmul.bf16.gmra.mxu0 %v1397
        %v2740 = vpop.f32.mrf.mxu0
        %v2741 = vadd.f32 %v2692, %v2740
        %v2742 = vpop.f32.mrf.mxu0
        %v2743 = vadd.f32 %v2694, %v2742
        %2744 = vmatmul.bf16.gmra.mxu0 %v1405
        %v2745 = vpop.f32.mrf.mxu0
        %v2746 = vadd.f32 %v2697, %v2745
        %v2747 = vpop.f32.mrf.mxu0
        %v2748 = vadd.f32 %v2699, %v2747
        %2749 = vdwg.mxu0
        %2750 = vmatpush.bf16.msra.mxu0 %v1952
        %2751 = vmatpush.bf16.msra.mxu0 %v1950
        %2752 = vmatpush.bf16.msra.mxu0 %v1948
        %2753 = vmatpush.bf16.msra.mxu0 %v1946
        %2754 = vmatpush.bf16.msra.mxu0 %v1944
        %2755 = vmatpush.bf16.msra.mxu0 %v1942
        %2756 = vmatpush.bf16.msra.mxu0 %v1940
        %2757 = vmatpush.bf16.msra.mxu0 %v1938
        %2758 = vmatmul.bf16.gmra.mxu0 %v1350
        %v2759 = vpop.f32.mrf.mxu0
        %v2760 = vadd.f32 %v2711, %v2759
        %v2761 = vpop.f32.mrf.mxu0
        %v2762 = vadd.f32 %v2713, %v2761
        %2763 = vmatmul.bf16.gmra.mxu0 %v1358
        %v2764 = vpop.f32.mrf.mxu0
        %v2765 = vadd.f32 %v2716, %v2764
        %v2766 = vpop.f32.mrf.mxu0
        %v2767 = vadd.f32 %v2718, %v2766
        %2768 = vmatmul.bf16.gmra.mxu0 %v1366
        %v2769 = vpop.f32.mrf.mxu0
        %v2770 = vadd.f32 %v2721, %v2769
        %v2771 = vpop.f32.mrf.mxu0
        %v2772 = vadd.f32 %v2723, %v2771
        %2773 = vmatmul.bf16.gmra.mxu0 %v1374
        %v2774 = vpop.f32.mrf.mxu0
        %v2775 = vadd.f32 %v2726, %v2774
        %v2776 = vpop.f32.mrf.mxu0
        %v2777 = vadd.f32 %v2728, %v2776
        %2778 = vmatmul.bf16.gmra.mxu0 %v1382
        %v2779 = vpop.f32.mrf.mxu0
        %v2780 = vadd.f32 %v2731, %v2779
        %v2781 = vpop.f32.mrf.mxu0
        %v2782 = vadd.f32 %v2733, %v2781
        %2783 = vmatmul.bf16.gmra.mxu0 %v1390
        %v2784 = vpop.f32.mrf.mxu0
        %v2785 = vadd.f32 %v2736, %v2784
        %v2786 = vpop.f32.mrf.mxu0
        %v2787 = vadd.f32 %v2738, %v2786
        %2788 = vmatmul.bf16.gmra.mxu0 %v1398
        %v2789 = vpop.f32.mrf.mxu0
        %v2790 = vadd.f32 %v2741, %v2789
        %v2791 = vpop.f32.mrf.mxu0
        %v2792 = vadd.f32 %v2743, %v2791
        %2793 = vmatmul.bf16.gmra.mxu0 %v1406
        %v2794 = vpop.f32.mrf.mxu0
        %v2795 = vadd.f32 %v2746, %v2794
        %v2796 = vpop.f32.mrf.mxu0
        %v2797 = vadd.f32 %v2748, %v2796
        %2798 = vdwg.mxu0
        %2799 = vmatpush.bf16.msra.mxu0 %v1968
        %2800 = vmatpush.bf16.msra.mxu0 %v1966
        %2801 = vmatpush.bf16.msra.mxu0 %v1964
        %2802 = vmatpush.bf16.msra.mxu0 %v1962
        %2803 = vmatpush.bf16.msra.mxu0 %v1960
        %2804 = vmatpush.bf16.msra.mxu0 %v1958
        %2805 = vmatpush.bf16.msra.mxu0 %v1956
        %2806 = vmatpush.bf16.msra.mxu0 %v1954
        %2807 = vmatmul.bf16.gmra.mxu0 %v1351
        %v2808 = vpop.f32.mrf.mxu0
        %v2809 = vadd.f32 %v2760, %v2808
        %v2810 = vpop.f32.mrf.mxu0
        %v2811 = vadd.f32 %v2762, %v2810
        %2812 = vmatmul.bf16.gmra.mxu0 %v1359
        %v2813 = vpop.f32.mrf.mxu0
        %v2814 = vadd.f32 %v2765, %v2813
        %v2815 = vpop.f32.mrf.mxu0
        %v2816 = vadd.f32 %v2767, %v2815
        %2817 = vmatmul.bf16.gmra.mxu0 %v1367
        %v2818 = vpop.f32.mrf.mxu0
        %v2819 = vadd.f32 %v2770, %v2818
        %v2820 = vpop.f32.mrf.mxu0
        %v2821 = vadd.f32 %v2772, %v2820
        %2822 = vmatmul.bf16.gmra.mxu0 %v1375
        %v2823 = vpop.f32.mrf.mxu0
        %v2824 = vadd.f32 %v2775, %v2823
        %v2825 = vpop.f32.mrf.mxu0
        %v2826 = vadd.f32 %v2777, %v2825
        %2827 = vmatmul.bf16.gmra.mxu0 %v1383
        %v2828 = vpop.f32.mrf.mxu0
        %v2829 = vadd.f32 %v2780, %v2828
        %v2830 = vpop.f32.mrf.mxu0
        %v2831 = vadd.f32 %v2782, %v2830
        %2832 = vmatmul.bf16.gmra.mxu0 %v1391
        %v2833 = vpop.f32.mrf.mxu0
        %v2834 = vadd.f32 %v2785, %v2833
        %v2835 = vpop.f32.mrf.mxu0
        %v2836 = vadd.f32 %v2787, %v2835
        %2837 = vmatmul.bf16.gmra.mxu0 %v1399
        %v2838 = vpop.f32.mrf.mxu0
        %v2839 = vadd.f32 %v2790, %v2838
        %v2840 = vpop.f32.mrf.mxu0
        %v2841 = vadd.f32 %v2792, %v2840
        %2842 = vmatmul.bf16.gmra.mxu0 %v1407
        %v2843 = vpop.f32.mrf.mxu0
        %v2844 = vadd.f32 %v2795, %v2843
        %v2845 = vpop.f32.mrf.mxu0
        %v2846 = vadd.f32 %v2797, %v2845
        %2847 = vdwg.mxu0
        %2848 = vmatpush.bf16.msra.mxu0 %v1984
        %2849 = vmatpush.bf16.msra.mxu0 %v1982
        %2850 = vmatpush.bf16.msra.mxu0 %v1980
        %2851 = vmatpush.bf16.msra.mxu0 %v1978
        %2852 = vmatpush.bf16.msra.mxu0 %v1976
        %2853 = vmatpush.bf16.msra.mxu0 %v1974
        %2854 = vmatpush.bf16.msra.mxu0 %v1972
        %2855 = vmatpush.bf16.msra.mxu0 %v1970
        %2856 = vmatmul.bf16.gmra.mxu0 %v1352
        %v2857 = vpop.f32.mrf.mxu0
        %v2858 = vadd.f32 %v2809, %v2857
        %v2859 = vpop.f32.mrf.mxu0
        %v2860 = vadd.f32 %v2811, %v2859
        %2861 = vmatmul.bf16.gmra.mxu0 %v1360
        %v2862 = vpop.f32.mrf.mxu0
        %v2863 = vadd.f32 %v2814, %v2862
        %v2864 = vpop.f32.mrf.mxu0
        %v2865 = vadd.f32 %v2816, %v2864
        %2866 = vmatmul.bf16.gmra.mxu0 %v1368
        %v2867 = vpop.f32.mrf.mxu0
        %v2868 = vadd.f32 %v2819, %v2867
        %v2869 = vpop.f32.mrf.mxu0
        %v2870 = vadd.f32 %v2821, %v2869
        %2871 = vmatmul.bf16.gmra.mxu0 %v1376
        %v2872 = vpop.f32.mrf.mxu0
        %v2873 = vadd.f32 %v2824, %v2872
        %v2874 = vpop.f32.mrf.mxu0
        %v2875 = vadd.f32 %v2826, %v2874
        %2876 = vmatmul.bf16.gmra.mxu0 %v1384
        %v2877 = vpop.f32.mrf.mxu0
        %v2878 = vadd.f32 %v2829, %v2877
        %v2879 = vpop.f32.mrf.mxu0
        %v2880 = vadd.f32 %v2831, %v2879
        %2881 = vmatmul.bf16.gmra.mxu0 %v1392
        %v2882 = vpop.f32.mrf.mxu0
        %v2883 = vadd.f32 %v2834, %v2882
        %v2884 = vpop.f32.mrf.mxu0
        %v2885 = vadd.f32 %v2836, %v2884
        %2886 = vmatmul.bf16.gmra.mxu0 %v1400
        %v2887 = vpop.f32.mrf.mxu0
        %v2888 = vadd.f32 %v2839, %v2887
        %v2889 = vpop.f32.mrf.mxu0
        %v2890 = vadd.f32 %v2841, %v2889
        %2891 = vmatmul.bf16.gmra.mxu0 %v1408
        %v2892 = vpop.f32.mrf.mxu0
        %v2893 = vadd.f32 %v2844, %v2892
        %v2894 = vpop.f32.mrf.mxu0
        %v2895 = vadd.f32 %v2846, %v2894
        %2896 = vdwg.mxu0
        %v2897 = vmax.f32 %v2466, 0.0
        %v2898 = vmax.f32 %v2858, 0.0
        %v2899 = vmax.f32 %v2468, 0.0
        %v2900 = vmax.f32 %v2860, 0.0
        %v2901 = vmax.f32 %v2471, 0.0
        %v2902 = vmax.f32 %v2863, 0.0
        %v2903 = vmax.f32 %v2473, 0.0
        %v2904 = vmax.f32 %v2865, 0.0
        %v2905 = vmax.f32 %v2476, 0.0
        %v2906 = vmax.f32 %v2868, 0.0
        %v2907 = vmax.f32 %v2478, 0.0
        %v2908 = vmax.f32 %v2870, 0.0
        %v2909 = vmax.f32 %v2481, 0.0
        %v2910 = vmax.f32 %v2873, 0.0
        %v2911 = vmax.f32 %v2483, 0.0
        %v2912 = vmax.f32 %v2875, 0.0
        %v2913 = vmax.f32 %v2486, 0.0
        %v2914 = vmax.f32 %v2878, 0.0
        %v2915 = vmax.f32 %v2488, 0.0
        %v2916 = vmax.f32 %v2880, 0.0
        %v2917 = vmax.f32 %v2491, 0.0
        %v2918 = vmax.f32 %v2883, 0.0
        %v2919 = vmax.f32 %v2493, 0.0
        %v2920 = vmax.f32 %v2885, 0.0
        %v2921 = vmax.f32 %v2496, 0.0
        %v2922 = vmax.f32 %v2888, 0.0
        %v2923 = vmax.f32 %v2498, 0.0
        %v2924 = vmax.f32 %v2890, 0.0
        %v2925 = vmax.f32 %v2501, 0.0
        %v2926 = vmax.f32 %v2893, 0.0
        %v2927 = vmax.f32 %v2503, 0.0
        %v2928 = vmax.f32 %v2895, 0.0
        %v2929 = vld [vmem:[%s4] sm:$0xf]
        %v2930 = vld [vmem:[%s4 + $0x4] sm:$0xf]
        %v2931 = vld [vmem:[%s4 + $0x8] sm:$0xf]
        %v2932 = vld [vmem:[%s4 + $0xc] sm:$0xf]
        %v2933 = vld [vmem:[%s4 + $0x10] sm:$0xf]
        %v2934 = vld [vmem:[%s4 + $0x14] sm:$0xf]
        %v2935 = vld [vmem:[%s4 + $0x18] sm:$0xf]
        %v2936 = vld [vmem:[%s4 + $0x1c] sm:$0xf]
        %v2937 = vld [vmem:[%s4 + $0x20] sm:$0xf]
        %v2938 = vld [vmem:[%s4 + $0x24] sm:$0xf]
        %v2939 = vld [vmem:[%s4 + $0x28] sm:$0xf]
        %v2940 = vld [vmem:[%s4 + $0x2c] sm:$0xf]
        %v2941 = vld [vmem:[%s4 + $0x30] sm:$0xf]
        %v2942 = vld [vmem:[%s4 + $0x34] sm:$0xf]
        %v2943 = vld [vmem:[%s4 + $0x38] sm:$0xf]
        %v2944 = vld [vmem:[%s4 + $0x3c] sm:$0xf]
        %v2945 = vld [vmem:[%s4 + $0x40] sm:$0xf]
        %v2946 = vld [vmem:[%s4 + $0x44] sm:$0xf]
        %v2947 = vld [vmem:[%s4 + $0x48] sm:$0xf]
        %v2948 = vld [vmem:[%s4 + $0x4c] sm:$0xf]
        %v2949 = vld [vmem:[%s4 + $0x50] sm:$0xf]
        %v2950 = vld [vmem:[%s4 + $0x54] sm:$0xf]
        %v2951 = vld [vmem:[%s4 + $0x58] sm:$0xf]
        %v2952 = vld [vmem:[%s4 + $0x5c] sm:$0xf]
        %v2953 = vld [vmem:[%s4 + $0x60] sm:$0xf]
        %v2954 = vld [vmem:[%s4 + $0x64] sm:$0xf]
        %v2955 = vld [vmem:[%s4 + $0x68] sm:$0xf]
        %v2956 = vld [vmem:[%s4 + $0x6c] sm:$0xf]
        %v2957 = vld [vmem:[%s4 + $0x70] sm:$0xf]
        %v2958 = vld [vmem:[%s4 + $0x74] sm:$0xf]
        %v2959 = vld [vmem:[%s4 + $0x78] sm:$0xf]
        %v2960 = vld [vmem:[%s4 + $0x7c] sm:$0xf]
        %v2961 = vld [vmem:[%s4 + $0x80] sm:$0xf]
        %v2962 = vld [vmem:[%s4 + $0x84] sm:$0xf]
        %v2963 = vld [vmem:[%s4 + $0x88] sm:$0xf]
        %v2964 = vld [vmem:[%s4 + $0x8c] sm:$0xf]
        %v2965 = vld [vmem:[%s4 + $0x90] sm:$0xf]
        %v2966 = vld [vmem:[%s4 + $0x94] sm:$0xf]
        %v2967 = vld [vmem:[%s4 + $0x98] sm:$0xf]
        %v2968 = vld [vmem:[%s4 + $0x9c] sm:$0xf]
        %v2969 = vld [vmem:[%s4 + $0xa0] sm:$0xf]
        %v2970 = vld [vmem:[%s4 + $0xa4] sm:$0xf]
        %v2971 = vld [vmem:[%s4 + $0xa8] sm:$0xf]
        %v2972 = vld [vmem:[%s4 + $0xac] sm:$0xf]
        %v2973 = vld [vmem:[%s4 + $0xb0] sm:$0xf]
        %v2974 = vld [vmem:[%s4 + $0xb4] sm:$0xf]
        %v2975 = vld [vmem:[%s4 + $0xb8] sm:$0xf]
        %v2976 = vld [vmem:[%s4 + $0xbc] sm:$0xf]
        %v2977 = vld [vmem:[%s4 + $0xc0] sm:$0xf]
        %v2978 = vld [vmem:[%s4 + $0xc4] sm:$0xf]
        %v2979 = vld [vmem:[%s4 + $0xc8] sm:$0xf]
        %v2980 = vld [vmem:[%s4 + $0xcc] sm:$0xf]
        %v2981 = vld [vmem:[%s4 + $0xd0] sm:$0xf]
        %v2982 = vld [vmem:[%s4 + $0xd4] sm:$0xf]
        %v2983 = vld [vmem:[%s4 + $0xd8] sm:$0xf]
        %v2984 = vld [vmem:[%s4 + $0xdc] sm:$0xf]
        %v2985 = vld [vmem:[%s4 + $0xe0] sm:$0xf]
        %v2986 = vld [vmem:[%s4 + $0xe4] sm:$0xf]
        %v2987 = vld [vmem:[%s4 + $0xe8] sm:$0xf]
        %v2988 = vld [vmem:[%s4 + $0xec] sm:$0xf]
        %v2989 = vld [vmem:[%s4 + $0xf0] sm:$0xf]
        %v2990 = vld [vmem:[%s4 + $0xf4] sm:$0xf]
        %v2991 = vld [vmem:[%s4 + $0xf8] sm:$0xf]
        %v2992 = vld [vmem:[%s4 + $0xfc] sm:$0xf]
        %v2993 = vld [vmem:[%s4 + $0x100] sm:$0xf]
        %v2994 = vld [vmem:[%s4 + $0x104] sm:$0xf]
        %v2995 = vld [vmem:[%s4 + $0x108] sm:$0xf]
        %v2996 = vld [vmem:[%s4 + $0x10c] sm:$0xf]
        %v2997 = vld [vmem:[%s4 + $0x110] sm:$0xf]
        %v2998 = vld [vmem:[%s4 + $0x114] sm:$0xf]
        %v2999 = vld [vmem:[%s4 + $0x118] sm:$0xf]
        %v3000 = vld [vmem:[%s4 + $0x11c] sm:$0xf]
        %v3001 = vld [vmem:[%s4 + $0x120] sm:$0xf]
        %v3002 = vld [vmem:[%s4 + $0x124] sm:$0xf]
        %v3003 = vld [vmem:[%s4 + $0x128] sm:$0xf]
        %v3004 = vld [vmem:[%s4 + $0x12c] sm:$0xf]
        %v3005 = vld [vmem:[%s4 + $0x130] sm:$0xf]
        %v3006 = vld [vmem:[%s4 + $0x134] sm:$0xf]
        %v3007 = vld [vmem:[%s4 + $0x138] sm:$0xf]
        %v3008 = vld [vmem:[%s4 + $0x13c] sm:$0xf]
        %v3009 = vld [vmem:[%s4 + $0x140] sm:$0xf]
        %v3010 = vld [vmem:[%s4 + $0x144] sm:$0xf]
        %v3011 = vld [vmem:[%s4 + $0x148] sm:$0xf]
        %v3012 = vld [vmem:[%s4 + $0x14c] sm:$0xf]
        %v3013 = vld [vmem:[%s4 + $0x150] sm:$0xf]
        %v3014 = vld [vmem:[%s4 + $0x154] sm:$0xf]
        %v3015 = vld [vmem:[%s4 + $0x158] sm:$0xf]
        %v3016 = vld [vmem:[%s4 + $0x15c] sm:$0xf]
        %v3017 = vld [vmem:[%s4 + $0x160] sm:$0xf]
        %v3018 = vld [vmem:[%s4 + $0x164] sm:$0xf]
        %v3019 = vld [vmem:[%s4 + $0x168] sm:$0xf]
        %v3020 = vld [vmem:[%s4 + $0x16c] sm:$0xf]
        %v3021 = vld [vmem:[%s4 + $0x170] sm:$0xf]
        %v3022 = vld [vmem:[%s4 + $0x174] sm:$0xf]
        %v3023 = vld [vmem:[%s4 + $0x178] sm:$0xf]
        %v3024 = vld [vmem:[%s4 + $0x17c] sm:$0xf]
        %v3025 = vld [vmem:[%s4 + $0x180] sm:$0xf]
        %v3026 = vld [vmem:[%s4 + $0x184] sm:$0xf]
        %v3027 = vld [vmem:[%s4 + $0x188] sm:$0xf]
        %v3028 = vld [vmem:[%s4 + $0x18c] sm:$0xf]
        %v3029 = vld [vmem:[%s4 + $0x190] sm:$0xf]
        %v3030 = vld [vmem:[%s4 + $0x194] sm:$0xf]
        %v3031 = vld [vmem:[%s4 + $0x198] sm:$0xf]
        %v3032 = vld [vmem:[%s4 + $0x19c] sm:$0xf]
        %v3033 = vld [vmem:[%s4 + $0x1a0] sm:$0xf]
        %v3034 = vld [vmem:[%s4 + $0x1a4] sm:$0xf]
        %v3035 = vld [vmem:[%s4 + $0x1a8] sm:$0xf]
        %v3036 = vld [vmem:[%s4 + $0x1ac] sm:$0xf]
        %v3037 = vld [vmem:[%s4 + $0x1b0] sm:$0xf]
        %v3038 = vld [vmem:[%s4 + $0x1b4] sm:$0xf]
        %v3039 = vld [vmem:[%s4 + $0x1b8] sm:$0xf]
        %v3040 = vld [vmem:[%s4 + $0x1bc] sm:$0xf]
        %v3041 = vld [vmem:[%s4 + $0x1c0] sm:$0xf]
        %v3042 = vld [vmem:[%s4 + $0x1c4] sm:$0xf]
        %v3043 = vld [vmem:[%s4 + $0x1c8] sm:$0xf]
        %v3044 = vld [vmem:[%s4 + $0x1cc] sm:$0xf]
        %v3045 = vld [vmem:[%s4 + $0x1d0] sm:$0xf]
        %v3046 = vld [vmem:[%s4 + $0x1d4] sm:$0xf]
        %v3047 = vld [vmem:[%s4 + $0x1d8] sm:$0xf]
        %v3048 = vld [vmem:[%s4 + $0x1dc] sm:$0xf]
        %v3049 = vld [vmem:[%s4 + $0x1e0] sm:$0xf]
        %v3050 = vld [vmem:[%s4 + $0x1e4] sm:$0xf]
        %v3051 = vld [vmem:[%s4 + $0x1e8] sm:$0xf]
        %v3052 = vld [vmem:[%s4 + $0x1ec] sm:$0xf]
        %v3053 = vld [vmem:[%s4 + $0x1f0] sm:$0xf]
        %v3054 = vld [vmem:[%s4 + $0x1f4] sm:$0xf]
        %v3055 = vld [vmem:[%s4 + $0x1f8] sm:$0xf]
        %v3056 = vld [vmem:[%s4 + $0x1fc] sm:$0xf]
        %v3057 = vld [vmem:[#allocation6] sm:$0xff]
        %v3058 = vld [vmem:[#allocation6 + $0x8] sm:$0xff]
        %v3059 = vld [vmem:[#allocation6 + $0x10] sm:$0xff]
        %v3060 = vld [vmem:[#allocation6 + $0x18] sm:$0xff]
        %v3061 = vld [vmem:[#allocation6 + $0x20] sm:$0xff]
        %v3062 = vld [vmem:[#allocation6 + $0x28] sm:$0xff]
        %v3063 = vld [vmem:[#allocation6 + $0x30] sm:$0xff]
        %v3064 = vld [vmem:[#allocation6 + $0x38] sm:$0xff]
        %v3065 = vld [vmem:[#allocation6 + $0x40] sm:$0xff]
        %v3066 = vld [vmem:[#allocation6 + $0x48] sm:$0xff]
        %v3067 = vsel %vm938, %v569, 0
        %v3069 = vsel %vm938, %v570, 0
        %v3071 = vsel %vm938, %v571, 0
        %v3073 = vsel %vm938, %v572, 0
        %v3075 = vsel %vm938, %v573, 0
        %v3077 = vsel %vm938, %v574, 0
        %v3079 = vsel %vm938, %v575, 0
        %v3081 = vsel %vm938, %v576, 0
        %v3083 = vsel %vm938, %v577, 0
        %v3085 = vsel %vm938, %v578, 0
        %v3087 = vsel %vm938, %v579, 0
        %v3089 = vsel %vm938, %v580, 0
        %v3091 = vsel %vm938, %v581, 0
        %v3093 = vsel %vm938, %v582, 0
        %v3095 = vsel %vm938, %v583, 0
        %v3097 = vsel %vm938, %v584, 0
        %3099 = vmatpush.msra.mxu0 0.0
        %3100 = vmatpush.msra.mxu0 0.0
        %3101 = vmatpush.msra.mxu0 0.0
        %3102 = vmatpush.msra.mxu0 0.0
        %3103 = vmatpush.msra.mxu0 0.0
        %3104 = vmatpush.msra.mxu0 0.0
        %3105 = vmatpush.msra.mxu0 %v3066
        %3106 = vmatpush.msra.mxu0 %v3065
        %3107 = vmatpush.msra.mxu0 %v3064
        %3108 = vmatpush.msra.mxu0 %v3063
        %3109 = vmatpush.msra.mxu0 %v3062
        %3110 = vmatpush.msra.mxu0 %v3061
        %3111 = vmatpush.msra.mxu0 %v3060
        %3112 = vmatpush.msra.mxu0 %v3059
        %3113 = vmatpush.msra.mxu0 %v3058
        %3114 = vmatpush.msra.mxu0 %v3057
        %3115 = vmatmul.f32.gmra.mxu0 %v3067
        %v3116 = vpop.f32.mrf.mxu0
        %v3117 = vadd.f32 0.0, %v3116
        %3118 = vmatmul.f32.gmra.mxu0 %v3069
        %v3119 = vpop.f32.mrf.mxu0
        %v3120 = vadd.f32 0.0, %v3119
        %3121 = vmatmul.f32.gmra.mxu0 %v3071
        %v3122 = vpop.f32.mrf.mxu0
        %v3123 = vadd.f32 0.0, %v3122
        %3124 = vmatmul.f32.gmra.mxu0 %v3073
        %v3125 = vpop.f32.mrf.mxu0
        %v3126 = vadd.f32 0.0, %v3125
        %3127 = vmatmul.f32.gmra.mxu0 %v3075
        %v3128 = vpop.f32.mrf.mxu0
        %v3129 = vadd.f32 0.0, %v3128
        %3130 = vmatmul.f32.gmra.mxu0 %v3077
        %v3131 = vpop.f32.mrf.mxu0
        %v3132 = vadd.f32 0.0, %v3131
        %3133 = vmatmul.f32.gmra.mxu0 %v3079
        %v3134 = vpop.f32.mrf.mxu0
        %v3135 = vadd.f32 0.0, %v3134
        %3136 = vmatmul.f32.gmra.mxu0 %v3081
        %v3137 = vpop.f32.mrf.mxu0
        %v3138 = vadd.f32 0.0, %v3137
        %3139 = vmatmul.f32.gmra.mxu0 %v3083
        %v3140 = vpop.f32.mrf.mxu0
        %v3141 = vadd.f32 0.0, %v3140
        %3142 = vmatmul.f32.gmra.mxu0 %v3085
        %v3143 = vpop.f32.mrf.mxu0
        %v3144 = vadd.f32 0.0, %v3143
        %3145 = vmatmul.f32.gmra.mxu0 %v3087
        %v3146 = vpop.f32.mrf.mxu0
        %v3147 = vadd.f32 0.0, %v3146
        %3148 = vmatmul.f32.gmra.mxu0 %v3089
        %v3149 = vpop.f32.mrf.mxu0
        %v3150 = vadd.f32 0.0, %v3149
        %3151 = vmatmul.f32.gmra.mxu0 %v3091
        %v3152 = vpop.f32.mrf.mxu0
        %v3153 = vadd.f32 0.0, %v3152
        %3154 = vmatmul.f32.gmra.mxu0 %v3093
        %v3155 = vpop.f32.mrf.mxu0
        %v3156 = vadd.f32 0.0, %v3155
        %3157 = vmatmul.f32.gmra.mxu0 %v3095
        %v3158 = vpop.f32.mrf.mxu0
        %v3159 = vadd.f32 0.0, %v3158
        %3160 = vmatmul.f32.gmra.mxu0 %v3097
        %v3161 = vpop.f32.mrf.mxu0
        %v3162 = vadd.f32 0.0, %v3161
        %3163 = vdwg.mxu0
        %v3292 = vunpack.c.l.b16 %v2929
        %v3293 = vunpack.c.l.b16 %v2930
        %v3294 = vunpack.c.l.b16 %v2931
        %v3295 = vunpack.c.l.b16 %v2932
        %v3296 = vunpack.c.l.b16 %v2933
        %v3297 = vunpack.c.l.b16 %v2934
        %v3298 = vunpack.c.l.b16 %v2935
        %v3299 = vunpack.c.l.b16 %v2936
        %v3300 = vunpack.c.l.b16 %v2937
        %v3301 = vunpack.c.l.b16 %v2938
        %v3302 = vunpack.c.l.b16 %v2939
        %v3303 = vunpack.c.l.b16 %v2940
        %v3304 = vunpack.c.l.b16 %v2941
        %v3305 = vunpack.c.l.b16 %v2942
        %v3306 = vunpack.c.l.b16 %v2943
        %v3307 = vunpack.c.l.b16 %v2944
        %v3308 = vunpack.c.l.b16 %v2945
        %v3309 = vunpack.c.l.b16 %v2946
        %v3310 = vunpack.c.l.b16 %v2947
        %v3311 = vunpack.c.l.b16 %v2948
        %v3312 = vunpack.c.l.b16 %v2949
        %v3313 = vunpack.c.l.b16 %v2950
        %v3314 = vunpack.c.l.b16 %v2951
        %v3315 = vunpack.c.l.b16 %v2952
        %v3316 = vunpack.c.l.b16 %v2953
        %v3317 = vunpack.c.l.b16 %v2954
        %v3318 = vunpack.c.l.b16 %v2955
        %v3319 = vunpack.c.l.b16 %v2956
        %v3320 = vunpack.c.l.b16 %v2957
        %v3321 = vunpack.c.l.b16 %v2958
        %v3322 = vunpack.c.l.b16 %v2959
        %v3323 = vunpack.c.l.b16 %v2960
        %v3324 = vunpack.c.l.b16 %v2961
        %v3325 = vunpack.c.l.b16 %v2962
        %v3326 = vunpack.c.l.b16 %v2963
        %v3327 = vunpack.c.l.b16 %v2964
        %v3328 = vunpack.c.l.b16 %v2965
        %v3329 = vunpack.c.l.b16 %v2966
        %v3330 = vunpack.c.l.b16 %v2967
        %v3331 = vunpack.c.l.b16 %v2968
        %v3332 = vunpack.c.l.b16 %v2969
        %v3333 = vunpack.c.l.b16 %v2970
        %v3334 = vunpack.c.l.b16 %v2971
        %v3335 = vunpack.c.l.b16 %v2972
        %v3336 = vunpack.c.l.b16 %v2973
        %v3337 = vunpack.c.l.b16 %v2974
        %v3338 = vunpack.c.l.b16 %v2975
        %v3339 = vunpack.c.l.b16 %v2976
        %v3340 = vunpack.c.l.b16 %v2977
        %v3341 = vunpack.c.l.b16 %v2978
        %v3342 = vunpack.c.l.b16 %v2979
        %v3343 = vunpack.c.l.b16 %v2980
        %v3344 = vunpack.c.l.b16 %v2981
        %v3345 = vunpack.c.l.b16 %v2982
        %v3346 = vunpack.c.l.b16 %v2983
        %v3347 = vunpack.c.l.b16 %v2984
        %v3348 = vunpack.c.l.b16 %v2985
        %v3349 = vunpack.c.l.b16 %v2986
        %v3350 = vunpack.c.l.b16 %v2987
        %v3351 = vunpack.c.l.b16 %v2988
        %v3352 = vunpack.c.l.b16 %v2989
        %v3353 = vunpack.c.l.b16 %v2990
        %v3354 = vunpack.c.l.b16 %v2991
        %v3355 = vunpack.c.l.b16 %v2992
        %v3356 = vunpack.c.l.b16 %v2993
        %v3357 = vunpack.c.l.b16 %v2994
        %v3358 = vunpack.c.l.b16 %v2995
        %v3359 = vunpack.c.l.b16 %v2996
        %v3360 = vunpack.c.l.b16 %v2997
        %v3361 = vunpack.c.l.b16 %v2998
        %v3362 = vunpack.c.l.b16 %v2999
        %v3363 = vunpack.c.l.b16 %v3000
        %v3364 = vunpack.c.l.b16 %v3001
        %v3365 = vunpack.c.l.b16 %v3002
        %v3366 = vunpack.c.l.b16 %v3003
        %v3367 = vunpack.c.l.b16 %v3004
        %v3368 = vunpack.c.l.b16 %v3005
        %v3369 = vunpack.c.l.b16 %v3006
        %v3370 = vunpack.c.l.b16 %v3007
        %v3371 = vunpack.c.l.b16 %v3008
        %v3372 = vunpack.c.l.b16 %v3009
        %v3373 = vunpack.c.l.b16 %v3010
        %v3374 = vunpack.c.l.b16 %v3011
        %v3375 = vunpack.c.l.b16 %v3012
        %v3376 = vunpack.c.l.b16 %v3013
        %v3377 = vunpack.c.l.b16 %v3014
        %v3378 = vunpack.c.l.b16 %v3015
        %v3379 = vunpack.c.l.b16 %v3016
        %v3380 = vunpack.c.l.b16 %v3017
        %v3381 = vunpack.c.l.b16 %v3018
        %v3382 = vunpack.c.l.b16 %v3019
        %v3383 = vunpack.c.l.b16 %v3020
        %v3384 = vunpack.c.l.b16 %v3021
        %v3385 = vunpack.c.l.b16 %v3022
        %v3386 = vunpack.c.l.b16 %v3023
        %v3387 = vunpack.c.l.b16 %v3024
        %v3388 = vunpack.c.l.b16 %v3025
        %v3389 = vunpack.c.l.b16 %v3026
        %v3390 = vunpack.c.l.b16 %v3027
        %v3391 = vunpack.c.l.b16 %v3028
        %v3392 = vunpack.c.l.b16 %v3029
        %v3393 = vunpack.c.l.b16 %v3030
        %v3394 = vunpack.c.l.b16 %v3031
        %v3395 = vunpack.c.l.b16 %v3032
        %v3396 = vunpack.c.l.b16 %v3033
        %v3397 = vunpack.c.l.b16 %v3034
        %v3398 = vunpack.c.l.b16 %v3035
        %v3399 = vunpack.c.l.b16 %v3036
        %v3400 = vunpack.c.l.b16 %v3037
        %v3401 = vunpack.c.l.b16 %v3038
        %v3402 = vunpack.c.l.b16 %v3039
        %v3403 = vunpack.c.l.b16 %v3040
        %v3404 = vunpack.c.l.b16 %v3041
        %v3405 = vunpack.c.l.b16 %v3042
        %v3406 = vunpack.c.l.b16 %v3043
        %v3407 = vunpack.c.l.b16 %v3044
        %v3408 = vunpack.c.l.b16 %v3045
        %v3409 = vunpack.c.l.b16 %v3046
        %v3410 = vunpack.c.l.b16 %v3047
        %v3411 = vunpack.c.l.b16 %v3048
        %v3412 = vunpack.c.l.b16 %v3049
        %v3413 = vunpack.c.l.b16 %v3050
        %v3414 = vunpack.c.l.b16 %v3051
        %v3415 = vunpack.c.l.b16 %v3052
        %v3416 = vunpack.c.l.b16 %v3053
        %v3417 = vunpack.c.l.b16 %v3054
        %v3418 = vunpack.c.l.b16 %v3055
        %v3419 = vunpack.c.l.b16 %v3056
        %v3420 = vpack.c.b16 %v3293, %v3292
        %v3421 = vpack.c.b16 %v3295, %v3294
        %v3422 = vpack.c.b16 %v3297, %v3296
        %v3423 = vpack.c.b16 %v3299, %v3298
        %v3424 = vpack.c.b16 %v3301, %v3300
        %v3425 = vpack.c.b16 %v3303, %v3302
        %v3426 = vpack.c.b16 %v3305, %v3304
        %v3427 = vpack.c.b16 %v3307, %v3306
        %v3428 = vpack.c.b16 %v3309, %v3308
        %v3429 = vpack.c.b16 %v3311, %v3310
        %v3430 = vpack.c.b16 %v3313, %v3312
        %v3431 = vpack.c.b16 %v3315, %v3314
        %v3432 = vpack.c.b16 %v3317, %v3316
        %v3433 = vpack.c.b16 %v3319, %v3318
        %v3434 = vpack.c.b16 %v3321, %v3320
        %v3435 = vpack.c.b16 %v3323, %v3322
        %v3436 = vpack.c.b16 %v3325, %v3324
        %v3437 = vpack.c.b16 %v3327, %v3326
        %v3438 = vpack.c.b16 %v3329, %v3328
        %v3439 = vpack.c.b16 %v3331, %v3330
        %v3440 = vpack.c.b16 %v3333, %v3332
        %v3441 = vpack.c.b16 %v3335, %v3334
        %v3442 = vpack.c.b16 %v3337, %v3336
        %v3443 = vpack.c.b16 %v3339, %v3338
        %v3444 = vpack.c.b16 %v3341, %v3340
        %v3445 = vpack.c.b16 %v3343, %v3342
        %v3446 = vpack.c.b16 %v3345, %v3344
        %v3447 = vpack.c.b16 %v3347, %v3346
        %v3448 = vpack.c.b16 %v3349, %v3348
        %v3449 = vpack.c.b16 %v3351, %v3350
        %v3450 = vpack.c.b16 %v3353, %v3352
        %v3451 = vpack.c.b16 %v3355, %v3354
        %v3452 = vpack.c.b16 %v3357, %v3356
        %v3453 = vpack.c.b16 %v3359, %v3358
        %v3454 = vpack.c.b16 %v3361, %v3360
        %v3455 = vpack.c.b16 %v3363, %v3362
        %v3456 = vpack.c.b16 %v3365, %v3364
        %v3457 = vpack.c.b16 %v3367, %v3366
        %v3458 = vpack.c.b16 %v3369, %v3368
        %v3459 = vpack.c.b16 %v3371, %v3370
        %v3460 = vpack.c.b16 %v3373, %v3372
        %v3461 = vpack.c.b16 %v3375, %v3374
        %v3462 = vpack.c.b16 %v3377, %v3376
        %v3463 = vpack.c.b16 %v3379, %v3378
        %v3464 = vpack.c.b16 %v3381, %v3380
        %v3465 = vpack.c.b16 %v3383, %v3382
        %v3466 = vpack.c.b16 %v3385, %v3384
        %v3467 = vpack.c.b16 %v3387, %v3386
        %v3468 = vpack.c.b16 %v3389, %v3388
        %v3469 = vpack.c.b16 %v3391, %v3390
        %v3470 = vpack.c.b16 %v3393, %v3392
        %v3471 = vpack.c.b16 %v3395, %v3394
        %v3472 = vpack.c.b16 %v3397, %v3396
        %v3473 = vpack.c.b16 %v3399, %v3398
        %v3474 = vpack.c.b16 %v3401, %v3400
        %v3475 = vpack.c.b16 %v3403, %v3402
        %v3476 = vpack.c.b16 %v3405, %v3404
        %v3477 = vpack.c.b16 %v3407, %v3406
        %v3478 = vpack.c.b16 %v3409, %v3408
        %v3479 = vpack.c.b16 %v3411, %v3410
        %v3480 = vpack.c.b16 %v3413, %v3412
        %v3481 = vpack.c.b16 %v3415, %v3414
        %v3482 = vpack.c.b16 %v3417, %v3416
        %v3483 = vpack.c.b16 %v3419, %v3418
        %3548 = vmatpush.bf16.msra.mxu0 %v3427
        %3549 = vmatpush.bf16.msra.mxu0 %v3426
        %3550 = vmatpush.bf16.msra.mxu0 %v3425
        %3551 = vmatpush.bf16.msra.mxu0 %v3424
        %3552 = vmatpush.bf16.msra.mxu0 %v3423
        %3553 = vmatpush.bf16.msra.mxu0 %v3422
        %3554 = vmatpush.bf16.msra.mxu0 %v3421
        %3555 = vmatpush.bf16.msra.mxu0 %v3420
        %3556 = vmatmul.bf16.gmra.mxu0 %v1345
        %v3557 = vpop.f32.mrf.mxu0
        %v3558 = vadd.f32 %v3117, %v3557
        %v3559 = vpop.f32.mrf.mxu0
        %v3560 = vadd.f32 %v3120, %v3559
        %3561 = vmatmul.bf16.gmra.mxu0 %v1353
        %v3562 = vpop.f32.mrf.mxu0
        %v3563 = vadd.f32 %v3123, %v3562
        %v3564 = vpop.f32.mrf.mxu0
        %v3565 = vadd.f32 %v3126, %v3564
        %3566 = vmatmul.bf16.gmra.mxu0 %v1361
        %v3567 = vpop.f32.mrf.mxu0
        %v3568 = vadd.f32 %v3129, %v3567
        %v3569 = vpop.f32.mrf.mxu0
        %v3570 = vadd.f32 %v3132, %v3569
        %3571 = vmatmul.bf16.gmra.mxu0 %v1369
        %v3572 = vpop.f32.mrf.mxu0
        %v3573 = vadd.f32 %v3135, %v3572
        %v3574 = vpop.f32.mrf.mxu0
        %v3575 = vadd.f32 %v3138, %v3574
        %3576 = vmatmul.bf16.gmra.mxu0 %v1377
        %v3577 = vpop.f32.mrf.mxu0
        %v3578 = vadd.f32 %v3141, %v3577
        %v3579 = vpop.f32.mrf.mxu0
        %v3580 = vadd.f32 %v3144, %v3579
        %3581 = vmatmul.bf16.gmra.mxu0 %v1385
        %v3582 = vpop.f32.mrf.mxu0
        %v3583 = vadd.f32 %v3147, %v3582
        %v3584 = vpop.f32.mrf.mxu0
        %v3585 = vadd.f32 %v3150, %v3584
        %3586 = vmatmul.bf16.gmra.mxu0 %v1393
        %v3587 = vpop.f32.mrf.mxu0
        %v3588 = vadd.f32 %v3153, %v3587
        %v3589 = vpop.f32.mrf.mxu0
        %v3590 = vadd.f32 %v3156, %v3589
        %3591 = vmatmul.bf16.gmra.mxu0 %v1401
        %v3592 = vpop.f32.mrf.mxu0
        %v3593 = vadd.f32 %v3159, %v3592
        %v3594 = vpop.f32.mrf.mxu0
        %v3595 = vadd.f32 %v3162, %v3594
        %3596 = vdwg.mxu0
        %3597 = vmatpush.bf16.msra.mxu0 %v3435
        %3598 = vmatpush.bf16.msra.mxu0 %v3434
        %3599 = vmatpush.bf16.msra.mxu0 %v3433
        %3600 = vmatpush.bf16.msra.mxu0 %v3432
        %3601 = vmatpush.bf16.msra.mxu0 %v3431
        %3602 = vmatpush.bf16.msra.mxu0 %v3430
        %3603 = vmatpush.bf16.msra.mxu0 %v3429
        %3604 = vmatpush.bf16.msra.mxu0 %v3428
        %3605 = vmatmul.bf16.gmra.mxu0 %v1346
        %v3606 = vpop.f32.mrf.mxu0
        %v3607 = vadd.f32 %v3558, %v3606
        %v3608 = vpop.f32.mrf.mxu0
        %v3609 = vadd.f32 %v3560, %v3608
        %3610 = vmatmul.bf16.gmra.mxu0 %v1354
        %v3611 = vpop.f32.mrf.mxu0
        %v3612 = vadd.f32 %v3563, %v3611
        %v3613 = vpop.f32.mrf.mxu0
        %v3614 = vadd.f32 %v3565, %v3613
        %3615 = vmatmul.bf16.gmra.mxu0 %v1362
        %v3616 = vpop.f32.mrf.mxu0
        %v3617 = vadd.f32 %v3568, %v3616
        %v3618 = vpop.f32.mrf.mxu0
        %v3619 = vadd.f32 %v3570, %v3618
        %3620 = vmatmul.bf16.gmra.mxu0 %v1370
        %v3621 = vpop.f32.mrf.mxu0
        %v3622 = vadd.f32 %v3573, %v3621
        %v3623 = vpop.f32.mrf.mxu0
        %v3624 = vadd.f32 %v3575, %v3623
        %3625 = vmatmul.bf16.gmra.mxu0 %v1378
        %v3626 = vpop.f32.mrf.mxu0
        %v3627 = vadd.f32 %v3578, %v3626
        %v3628 = vpop.f32.mrf.mxu0
        %v3629 = vadd.f32 %v3580, %v3628
        %3630 = vmatmul.bf16.gmra.mxu0 %v1386
        %v3631 = vpop.f32.mrf.mxu0
        %v3632 = vadd.f32 %v3583, %v3631
        %v3633 = vpop.f32.mrf.mxu0
        %v3634 = vadd.f32 %v3585, %v3633
        %3635 = vmatmul.bf16.gmra.mxu0 %v1394
        %v3636 = vpop.f32.mrf.mxu0
        %v3637 = vadd.f32 %v3588, %v3636
        %v3638 = vpop.f32.mrf.mxu0
        %v3639 = vadd.f32 %v3590, %v3638
        %3640 = vmatmul.bf16.gmra.mxu0 %v1402
        %v3641 = vpop.f32.mrf.mxu0
        %v3642 = vadd.f32 %v3593, %v3641
        %v3643 = vpop.f32.mrf.mxu0
        %v3644 = vadd.f32 %v3595, %v3643
        %3645 = vdwg.mxu0
        %3646 = vmatpush.bf16.msra.mxu0 %v3443
        %3647 = vmatpush.bf16.msra.mxu0 %v3442
        %3648 = vmatpush.bf16.msra.mxu0 %v3441
        %3649 = vmatpush.bf16.msra.mxu0 %v3440
        %3650 = vmatpush.bf16.msra.mxu0 %v3439
        %3651 = vmatpush.bf16.msra.mxu0 %v3438
        %3652 = vmatpush.bf16.msra.mxu0 %v3437
        %3653 = vmatpush.bf16.msra.mxu0 %v3436
        %3654 = vmatmul.bf16.gmra.mxu0 %v1347
        %v3655 = vpop.f32.mrf.mxu0
        %v3656 = vadd.f32 %v3607, %v3655
        %v3657 = vpop.f32.mrf.mxu0
        %v3658 = vadd.f32 %v3609, %v3657
        %3659 = vmatmul.bf16.gmra.mxu0 %v1355
        %v3660 = vpop.f32.mrf.mxu0
        %v3661 = vadd.f32 %v3612, %v3660
        %v3662 = vpop.f32.mrf.mxu0
        %v3663 = vadd.f32 %v3614, %v3662
        %3664 = vmatmul.bf16.gmra.mxu0 %v1363
        %v3665 = vpop.f32.mrf.mxu0
        %v3666 = vadd.f32 %v3617, %v3665
        %v3667 = vpop.f32.mrf.mxu0
        %v3668 = vadd.f32 %v3619, %v3667
        %3669 = vmatmul.bf16.gmra.mxu0 %v1371
        %v3670 = vpop.f32.mrf.mxu0
        %v3671 = vadd.f32 %v3622, %v3670
        %v3672 = vpop.f32.mrf.mxu0
        %v3673 = vadd.f32 %v3624, %v3672
        %3674 = vmatmul.bf16.gmra.mxu0 %v1379
        %v3675 = vpop.f32.mrf.mxu0
        %v3676 = vadd.f32 %v3627, %v3675
        %v3677 = vpop.f32.mrf.mxu0
        %v3678 = vadd.f32 %v3629, %v3677
        %3679 = vmatmul.bf16.gmra.mxu0 %v1387
        %v3680 = vpop.f32.mrf.mxu0
        %v3681 = vadd.f32 %v3632, %v3680
        %v3682 = vpop.f32.mrf.mxu0
        %v3683 = vadd.f32 %v3634, %v3682
        %3684 = vmatmul.bf16.gmra.mxu0 %v1395
        %v3685 = vpop.f32.mrf.mxu0
        %v3686 = vadd.f32 %v3637, %v3685
        %v3687 = vpop.f32.mrf.mxu0
        %v3688 = vadd.f32 %v3639, %v3687
        %3689 = vmatmul.bf16.gmra.mxu0 %v1403
        %v3690 = vpop.f32.mrf.mxu0
        %v3691 = vadd.f32 %v3642, %v3690
        %v3692 = vpop.f32.mrf.mxu0
        %v3693 = vadd.f32 %v3644, %v3692
        %3694 = vdwg.mxu0
        %3695 = vmatpush.bf16.msra.mxu0 %v3451
        %3696 = vmatpush.bf16.msra.mxu0 %v3450
        %3697 = vmatpush.bf16.msra.mxu0 %v3449
        %3698 = vmatpush.bf16.msra.mxu0 %v3448
        %3699 = vmatpush.bf16.msra.mxu0 %v3447
        %3700 = vmatpush.bf16.msra.mxu0 %v3446
        %3701 = vmatpush.bf16.msra.mxu0 %v3445
        %3702 = vmatpush.bf16.msra.mxu0 %v3444
        %3703 = vmatmul.bf16.gmra.mxu0 %v1348
        %v3704 = vpop.f32.mrf.mxu0
        %v3705 = vadd.f32 %v3656, %v3704
        %v3706 = vpop.f32.mrf.mxu0
        %v3707 = vadd.f32 %v3658, %v3706
        %3708 = vmatmul.bf16.gmra.mxu0 %v1356
        %v3709 = vpop.f32.mrf.mxu0
        %v3710 = vadd.f32 %v3661, %v3709
        %v3711 = vpop.f32.mrf.mxu0
        %v3712 = vadd.f32 %v3663, %v3711
        %3713 = vmatmul.bf16.gmra.mxu0 %v1364
        %v3714 = vpop.f32.mrf.mxu0
        %v3715 = vadd.f32 %v3666, %v3714
        %v3716 = vpop.f32.mrf.mxu0
        %v3717 = vadd.f32 %v3668, %v3716
        %3718 = vmatmul.bf16.gmra.mxu0 %v1372
        %v3719 = vpop.f32.mrf.mxu0
        %v3720 = vadd.f32 %v3671, %v3719
        %v3721 = vpop.f32.mrf.mxu0
        %v3722 = vadd.f32 %v3673, %v3721
        %3723 = vmatmul.bf16.gmra.mxu0 %v1380
        %v3724 = vpop.f32.mrf.mxu0
        %v3725 = vadd.f32 %v3676, %v3724
        %v3726 = vpop.f32.mrf.mxu0
        %v3727 = vadd.f32 %v3678, %v3726
        %3728 = vmatmul.bf16.gmra.mxu0 %v1388
        %v3729 = vpop.f32.mrf.mxu0
        %v3730 = vadd.f32 %v3681, %v3729
        %v3731 = vpop.f32.mrf.mxu0
        %v3732 = vadd.f32 %v3683, %v3731
        %3733 = vmatmul.bf16.gmra.mxu0 %v1396
        %v3734 = vpop.f32.mrf.mxu0
        %v3735 = vadd.f32 %v3686, %v3734
        %v3736 = vpop.f32.mrf.mxu0
        %v3737 = vadd.f32 %v3688, %v3736
        %3738 = vmatmul.bf16.gmra.mxu0 %v1404
        %v3739 = vpop.f32.mrf.mxu0
        %v3740 = vadd.f32 %v3691, %v3739
        %v3741 = vpop.f32.mrf.mxu0
        %v3742 = vadd.f32 %v3693, %v3741
        %3743 = vdwg.mxu0
        %3744 = vmatpush.bf16.msra.mxu0 %v3459
        %3745 = vmatpush.bf16.msra.mxu0 %v3458
        %3746 = vmatpush.bf16.msra.mxu0 %v3457
        %3747 = vmatpush.bf16.msra.mxu0 %v3456
        %3748 = vmatpush.bf16.msra.mxu0 %v3455
        %3749 = vmatpush.bf16.msra.mxu0 %v3454
        %3750 = vmatpush.bf16.msra.mxu0 %v3453
        %3751 = vmatpush.bf16.msra.mxu0 %v3452
        %3752 = vmatmul.bf16.gmra.mxu0 %v1349
        %v3753 = vpop.f32.mrf.mxu0
        %v3754 = vadd.f32 %v3705, %v3753
        %v3755 = vpop.f32.mrf.mxu0
        %v3756 = vadd.f32 %v3707, %v3755
        %3757 = vmatmul.bf16.gmra.mxu0 %v1357
        %v3758 = vpop.f32.mrf.mxu0
        %v3759 = vadd.f32 %v3710, %v3758
        %v3760 = vpop.f32.mrf.mxu0
        %v3761 = vadd.f32 %v3712, %v3760
        %3762 = vmatmul.bf16.gmra.mxu0 %v1365
        %v3763 = vpop.f32.mrf.mxu0
        %v3764 = vadd.f32 %v3715, %v3763
        %v3765 = vpop.f32.mrf.mxu0
        %v3766 = vadd.f32 %v3717, %v3765
        %3767 = vmatmul.bf16.gmra.mxu0 %v1373
        %v3768 = vpop.f32.mrf.mxu0
        %v3769 = vadd.f32 %v3720, %v3768
        %v3770 = vpop.f32.mrf.mxu0
        %v3771 = vadd.f32 %v3722, %v3770
        %3772 = vmatmul.bf16.gmra.mxu0 %v1381
        %v3773 = vpop.f32.mrf.mxu0
        %v3774 = vadd.f32 %v3725, %v3773
        %v3775 = vpop.f32.mrf.mxu0
        %v3776 = vadd.f32 %v3727, %v3775
        %3777 = vmatmul.bf16.gmra.mxu0 %v1389
        %v3778 = vpop.f32.mrf.mxu0
        %v3779 = vadd.f32 %v3730, %v3778
        %v3780 = vpop.f32.mrf.mxu0
        %v3781 = vadd.f32 %v3732, %v3780
        %3782 = vmatmul.bf16.gmra.mxu0 %v1397
        %v3783 = vpop.f32.mrf.mxu0
        %v3784 = vadd.f32 %v3735, %v3783
        %v3785 = vpop.f32.mrf.mxu0
        %v3786 = vadd.f32 %v3737, %v3785
        %3787 = vmatmul.bf16.gmra.mxu0 %v1405
        %v3788 = vpop.f32.mrf.mxu0
        %v3789 = vadd.f32 %v3740, %v3788
        %v3790 = vpop.f32.mrf.mxu0
        %v3791 = vadd.f32 %v3742, %v3790
        %3792 = vdwg.mxu0
        %3793 = vmatpush.bf16.msra.mxu0 %v3467
        %3794 = vmatpush.bf16.msra.mxu0 %v3466
        %3795 = vmatpush.bf16.msra.mxu0 %v3465
        %3796 = vmatpush.bf16.msra.mxu0 %v3464
        %3797 = vmatpush.bf16.msra.mxu0 %v3463
        %3798 = vmatpush.bf16.msra.mxu0 %v3462
        %3799 = vmatpush.bf16.msra.mxu0 %v3461
        %3800 = vmatpush.bf16.msra.mxu0 %v3460
        %3801 = vmatmul.bf16.gmra.mxu0 %v1350
        %v3802 = vpop.f32.mrf.mxu0
        %v3803 = vadd.f32 %v3754, %v3802
        %v3804 = vpop.f32.mrf.mxu0
        %v3805 = vadd.f32 %v3756, %v3804
        %3806 = vmatmul.bf16.gmra.mxu0 %v1358
        %v3807 = vpop.f32.mrf.mxu0
        %v3808 = vadd.f32 %v3759, %v3807
        %v3809 = vpop.f32.mrf.mxu0
        %v3810 = vadd.f32 %v3761, %v3809
        %3811 = vmatmul.bf16.gmra.mxu0 %v1366
        %v3812 = vpop.f32.mrf.mxu0
        %v3813 = vadd.f32 %v3764, %v3812
        %v3814 = vpop.f32.mrf.mxu0
        %v3815 = vadd.f32 %v3766, %v3814
        %3816 = vmatmul.bf16.gmra.mxu0 %v1374
        %v3817 = vpop.f32.mrf.mxu0
        %v3818 = vadd.f32 %v3769, %v3817
        %v3819 = vpop.f32.mrf.mxu0
        %v3820 = vadd.f32 %v3771, %v3819
        %3821 = vmatmul.bf16.gmra.mxu0 %v1382
        %v3822 = vpop.f32.mrf.mxu0
        %v3823 = vadd.f32 %v3774, %v3822
        %v3824 = vpop.f32.mrf.mxu0
        %v3825 = vadd.f32 %v3776, %v3824
        %3826 = vmatmul.bf16.gmra.mxu0 %v1390
        %v3827 = vpop.f32.mrf.mxu0
        %v3828 = vadd.f32 %v3779, %v3827
        %v3829 = vpop.f32.mrf.mxu0
        %v3830 = vadd.f32 %v3781, %v3829
        %3831 = vmatmul.bf16.gmra.mxu0 %v1398
        %v3832 = vpop.f32.mrf.mxu0
        %v3833 = vadd.f32 %v3784, %v3832
        %v3834 = vpop.f32.mrf.mxu0
        %v3835 = vadd.f32 %v3786, %v3834
        %3836 = vmatmul.bf16.gmra.mxu0 %v1406
        %v3837 = vpop.f32.mrf.mxu0
        %v3838 = vadd.f32 %v3789, %v3837
        %v3839 = vpop.f32.mrf.mxu0
        %v3840 = vadd.f32 %v3791, %v3839
        %3841 = vdwg.mxu0
        %3842 = vmatpush.bf16.msra.mxu0 %v3475
        %3843 = vmatpush.bf16.msra.mxu0 %v3474
        %3844 = vmatpush.bf16.msra.mxu0 %v3473
        %3845 = vmatpush.bf16.msra.mxu0 %v3472
        %3846 = vmatpush.bf16.msra.mxu0 %v3471
        %3847 = vmatpush.bf16.msra.mxu0 %v3470
        %3848 = vmatpush.bf16.msra.mxu0 %v3469
        %3849 = vmatpush.bf16.msra.mxu0 %v3468
        %3850 = vmatmul.bf16.gmra.mxu0 %v1351
        %v3851 = vpop.f32.mrf.mxu0
        %v3852 = vadd.f32 %v3803, %v3851
        %v3853 = vpop.f32.mrf.mxu0
        %v3854 = vadd.f32 %v3805, %v3853
        %3855 = vmatmul.bf16.gmra.mxu0 %v1359
        %v3856 = vpop.f32.mrf.mxu0
        %v3857 = vadd.f32 %v3808, %v3856
        %v3858 = vpop.f32.mrf.mxu0
        %v3859 = vadd.f32 %v3810, %v3858
        %3860 = vmatmul.bf16.gmra.mxu0 %v1367
        %v3861 = vpop.f32.mrf.mxu0
        %v3862 = vadd.f32 %v3813, %v3861
        %v3863 = vpop.f32.mrf.mxu0
        %v3864 = vadd.f32 %v3815, %v3863
        %3865 = vmatmul.bf16.gmra.mxu0 %v1375
        %v3866 = vpop.f32.mrf.mxu0
        %v3867 = vadd.f32 %v3818, %v3866
        %v3868 = vpop.f32.mrf.mxu0
        %v3869 = vadd.f32 %v3820, %v3868
        %3870 = vmatmul.bf16.gmra.mxu0 %v1383
        %v3871 = vpop.f32.mrf.mxu0
        %v3872 = vadd.f32 %v3823, %v3871
        %v3873 = vpop.f32.mrf.mxu0
        %v3874 = vadd.f32 %v3825, %v3873
        %3875 = vmatmul.bf16.gmra.mxu0 %v1391
        %v3876 = vpop.f32.mrf.mxu0
        %v3877 = vadd.f32 %v3828, %v3876
        %v3878 = vpop.f32.mrf.mxu0
        %v3879 = vadd.f32 %v3830, %v3878
        %3880 = vmatmul.bf16.gmra.mxu0 %v1399
        %v3881 = vpop.f32.mrf.mxu0
        %v3882 = vadd.f32 %v3833, %v3881
        %v3883 = vpop.f32.mrf.mxu0
        %v3884 = vadd.f32 %v3835, %v3883
        %3885 = vmatmul.bf16.gmra.mxu0 %v1407
        %v3886 = vpop.f32.mrf.mxu0
        %v3887 = vadd.f32 %v3838, %v3886
        %v3888 = vpop.f32.mrf.mxu0
        %v3889 = vadd.f32 %v3840, %v3888
        %3890 = vdwg.mxu0
        %3891 = vmatpush.bf16.msra.mxu0 %v3483
        %3892 = vmatpush.bf16.msra.mxu0 %v3482
        %3893 = vmatpush.bf16.msra.mxu0 %v3481
        %3894 = vmatpush.bf16.msra.mxu0 %v3480
        %3895 = vmatpush.bf16.msra.mxu0 %v3479
        %3896 = vmatpush.bf16.msra.mxu0 %v3478
        %3897 = vmatpush.bf16.msra.mxu0 %v3477
        %3898 = vmatpush.bf16.msra.mxu0 %v3476
        %3899 = vmatmul.bf16.gmra.mxu0 %v1352
        %v3900 = vpop.f32.mrf.mxu0
        %v3901 = vadd.f32 %v3852, %v3900
        %v3902 = vpop.f32.mrf.mxu0
        %v3903 = vadd.f32 %v3854, %v3902
        %3904 = vmatmul.bf16.gmra.mxu0 %v1360
        %v3905 = vpop.f32.mrf.mxu0
        %v3906 = vadd.f32 %v3857, %v3905
        %v3907 = vpop.f32.mrf.mxu0
        %v3908 = vadd.f32 %v3859, %v3907
        %3909 = vmatmul.bf16.gmra.mxu0 %v1368
        %v3910 = vpop.f32.mrf.mxu0
        %v3911 = vadd.f32 %v3862, %v3910
        %v3912 = vpop.f32.mrf.mxu0
        %v3913 = vadd.f32 %v3864, %v3912
        %3914 = vmatmul.bf16.gmra.mxu0 %v1376
        %v3915 = vpop.f32.mrf.mxu0
        %v3916 = vadd.f32 %v3867, %v3915
        %v3917 = vpop.f32.mrf.mxu0
        %v3918 = vadd.f32 %v3869, %v3917
        %3919 = vmatmul.bf16.gmra.mxu0 %v1384
        %v3920 = vpop.f32.mrf.mxu0
        %v3921 = vadd.f32 %v3872, %v3920
        %v3922 = vpop.f32.mrf.mxu0
        %v3923 = vadd.f32 %v3874, %v3922
        %3924 = vmatmul.bf16.gmra.mxu0 %v1392
        %v3925 = vpop.f32.mrf.mxu0
        %v3926 = vadd.f32 %v3877, %v3925
        %v3927 = vpop.f32.mrf.mxu0
        %v3928 = vadd.f32 %v3879, %v3927
        %3929 = vmatmul.bf16.gmra.mxu0 %v1400
        %v3930 = vpop.f32.mrf.mxu0
        %v3931 = vadd.f32 %v3882, %v3930
        %v3932 = vpop.f32.mrf.mxu0
        %v3933 = vadd.f32 %v3884, %v3932
        %3934 = vmatmul.bf16.gmra.mxu0 %v1408
        %v3935 = vpop.f32.mrf.mxu0
        %v3936 = vadd.f32 %v3887, %v3935
        %v3937 = vpop.f32.mrf.mxu0
        %v3938 = vadd.f32 %v3889, %v3937
        %3939 = vdwg.mxu0
        %v3940 = vld [vmem:[%s6] sm:$0x1]
        %v3942 = vperm.slane %v3940, 0
        %v3944 = vadd.f32 %v3901, %v3942
        %v3945 = vadd.f32 %v3903, %v3942
        %v3946 = vadd.f32 %v3906, %v3942
        %v3947 = vadd.f32 %v3908, %v3942
        %v3948 = vadd.f32 %v3911, %v3942
        %v3949 = vadd.f32 %v3913, %v3942
        %v3950 = vadd.f32 %v3916, %v3942
        %v3951 = vadd.f32 %v3918, %v3942
        %v3952 = vadd.f32 %v3921, %v3942
        %v3953 = vadd.f32 %v3923, %v3942
        %v3954 = vadd.f32 %v3926, %v3942
        %v3955 = vadd.f32 %v3928, %v3942
        %v3956 = vadd.f32 %v3931, %v3942
        %v3957 = vadd.f32 %v3933, %v3942
        %v3958 = vadd.f32 %v3936, %v3942
        %v3959 = vadd.f32 %v3938, %v3942
        %v3960 = vmax.f32 %v3944, 0.0
        %v3961 = vmax.f32 %v3945, 0.0
        %v3962 = vmax.f32 %v3946, 0.0
        %v3963 = vmax.f32 %v3947, 0.0
        %v3964 = vmax.f32 %v3948, 0.0
        %v3965 = vmax.f32 %v3949, 0.0
        %v3966 = vmax.f32 %v3950, 0.0
        %v3967 = vmax.f32 %v3951, 0.0
        %v3968 = vmax.f32 %v3952, 0.0
        %v3969 = vmax.f32 %v3953, 0.0
        %v3970 = vmax.f32 %v3954, 0.0
        %v3971 = vmax.f32 %v3955, 0.0
        %v3972 = vmax.f32 %v3956, 0.0
        %v3973 = vmax.f32 %v3957, 0.0
        %v3974 = vmax.f32 %v3958, 0.0
        %v3975 = vmax.f32 %v3959, 0.0
        %v3976 = vld [vmem:[%s7] sm:$0xff]
        %v3977 = vld [vmem:[%s7 + $0x8] sm:$0xff]
        %v3978 = vld [vmem:[%s7 + $0x10] sm:$0xff]
        %v3979 = vld [vmem:[%s7 + $0x18] sm:$0xff]
        %v3980 = vld [vmem:[%s7 + $0x20] sm:$0xff]
        %v3981 = vld [vmem:[%s7 + $0x28] sm:$0xff]
        %v3982 = vld [vmem:[%s7 + $0x30] sm:$0xff]
        %v3983 = vld [vmem:[%s7 + $0x38] sm:$0xff]
        %v3984 = vld [vmem:[%s7 + $0x40] sm:$0xff]
        %v3985 = vld [vmem:[%s7 + $0x48] sm:$0xff]
        %v3986 = vld [vmem:[%s7 + $0x50] sm:$0xff]
        %v3987 = vld [vmem:[%s7 + $0x58] sm:$0xff]
        %v3988 = vld [vmem:[%s8] sm:$0x1]
        %v3990 = vperm.slane %v3988, 0
        %vm3992 = vcmask 785408
        %v3994 = vsel %vm3992, %v3960, 0
        %v3997 = vsel %vm3992, %v3961, 0
        %v4000 = vsel %vm3992, %v3962, 0
        %v4003 = vsel %vm3992, %v3963, 0
        %v4006 = vsel %vm3992, %v3964, 0
        %v4009 = vsel %vm3992, %v3965, 0
        %v4012 = vsel %vm3992, %v3966, 0
        %v4015 = vsel %vm3992, %v3967, 0
        %v4018 = vsel %vm3992, %v3968, 0
        %v4021 = vsel %vm3992, %v3969, 0
        %v4024 = vsel %vm3992, %v3970, 0
        %v4027 = vsel %vm3992, %v3971, 0
        %v4030 = vsel %vm3992, %v3972, 0
        %v4033 = vsel %vm3992, %v3973, 0
        %v4036 = vsel %vm3992, %v3974, 0
        %v4039 = vsel %vm3992, %v3975, 0
        %4041 = vmatpush.msra.mxu0 0.0
        %4042 = vmatpush.msra.mxu0 0.0
        %4043 = vmatpush.msra.mxu0 0.0
        %4044 = vmatpush.msra.mxu0 0.0
        %4045 = vmatpush.msra.mxu0 %v3987
        %4046 = vmatpush.msra.mxu0 %v3986
        %4047 = vmatpush.msra.mxu0 %v3985
        %4048 = vmatpush.msra.mxu0 %v3984
        %4049 = vmatpush.msra.mxu0 %v3983
        %4050 = vmatpush.msra.mxu0 %v3982
        %4051 = vmatpush.msra.mxu0 %v3981
        %4052 = vmatpush.msra.mxu0 %v3980
        %4053 = vmatpush.msra.mxu0 %v3979
        %4054 = vmatpush.msra.mxu0 %v3978
        %4055 = vmatpush.msra.mxu0 %v3977
        %4056 = vmatpush.msra.mxu0 %v3976
        %4057 = vmatmul.f32.gmra.mxu0 %v3994
        %v4058 = vpop.f32.mrf.mxu0
        %v4059 = vadd.f32 %v3990, %v4058
        %4060 = vmatmul.f32.gmra.mxu0 %v3997
        %v4061 = vpop.f32.mrf.mxu0
        %v4062 = vadd.f32 %v3990, %v4061
        %4063 = vmatmul.f32.gmra.mxu0 %v4000
        %v4064 = vpop.f32.mrf.mxu0
        %v4065 = vadd.f32 %v3990, %v4064
        %4066 = vmatmul.f32.gmra.mxu0 %v4003
        %v4067 = vpop.f32.mrf.mxu0
        %v4068 = vadd.f32 %v3990, %v4067
        %4069 = vmatmul.f32.gmra.mxu0 %v4006
        %v4070 = vpop.f32.mrf.mxu0
        %v4071 = vadd.f32 %v3990, %v4070
        %4072 = vmatmul.f32.gmra.mxu0 %v4009
        %v4073 = vpop.f32.mrf.mxu0
        %v4074 = vadd.f32 %v3990, %v4073
        %4075 = vmatmul.f32.gmra.mxu0 %v4012
        %v4076 = vpop.f32.mrf.mxu0
        %v4077 = vadd.f32 %v3990, %v4076
        %4078 = vmatmul.f32.gmra.mxu0 %v4015
        %v4079 = vpop.f32.mrf.mxu0
        %v4080 = vadd.f32 %v3990, %v4079
        %4081 = vmatmul.f32.gmra.mxu0 %v4018
        %v4082 = vpop.f32.mrf.mxu0
        %v4083 = vadd.f32 %v3990, %v4082
        %4084 = vmatmul.f32.gmra.mxu0 %v4021
        %v4085 = vpop.f32.mrf.mxu0
        %v4086 = vadd.f32 %v3990, %v4085
        %4087 = vmatmul.f32.gmra.mxu0 %v4024
        %v4088 = vpop.f32.mrf.mxu0
        %v4089 = vadd.f32 %v3990, %v4088
        %4090 = vmatmul.f32.gmra.mxu0 %v4027
        %v4091 = vpop.f32.mrf.mxu0
        %v4092 = vadd.f32 %v3990, %v4091
        %4093 = vmatmul.f32.gmra.mxu0 %v4030
        %v4094 = vpop.f32.mrf.mxu0
        %v4095 = vadd.f32 %v3990, %v4094
        %4096 = vmatmul.f32.gmra.mxu0 %v4033
        %v4097 = vpop.f32.mrf.mxu0
        %v4098 = vadd.f32 %v3990, %v4097
        %4099 = vmatmul.f32.gmra.mxu0 %v4036
        %v4100 = vpop.f32.mrf.mxu0
        %v4101 = vadd.f32 %v3990, %v4100
        %4102 = vmatmul.f32.gmra.mxu0 %v4039
        %v4103 = vpop.f32.mrf.mxu0
        %v4104 = vadd.f32 %v3990, %v4103
        %4105 = vdwg.mxu0
        %v4106 = vmax.f32 %v4059, 0.0
        %v4107 = vmax.f32 %v4062, 0.0
        %v4108 = vmax.f32 %v4065, 0.0
        %v4109 = vmax.f32 %v4068, 0.0
        %v4110 = vmax.f32 %v4071, 0.0
        %v4111 = vmax.f32 %v4074, 0.0
        %v4112 = vmax.f32 %v4077, 0.0
        %v4113 = vmax.f32 %v4080, 0.0
        %v4114 = vmax.f32 %v4083, 0.0
        %v4115 = vmax.f32 %v4086, 0.0
        %v4116 = vmax.f32 %v4089, 0.0
        %v4117 = vmax.f32 %v4092, 0.0
        %v4118 = vmax.f32 %v4095, 0.0
        %v4119 = vmax.f32 %v4098, 0.0
        %v4120 = vmax.f32 %v4101, 0.0
        %v4121 = vmax.f32 %v4104, 0.0
        %v4122 = vld [vmem:[%s9] sm:$0x3]
        %v4124 = vperm.slane %v4122, 0
        %v4125 = vperm.slane %v4122, 1
        %v4128 = vmul.f32 %v2897, %v4124
        %v4129 = vmul.f32 %v2898, %v4125
        %v4130 = vmul.f32 %v2899, %v4124
        %v4131 = vmul.f32 %v2900, %v4125
        %v4132 = vmul.f32 %v2901, %v4124
        %v4133 = vmul.f32 %v2902, %v4125
        %v4134 = vmul.f32 %v2903, %v4124
        %v4135 = vmul.f32 %v2904, %v4125
        %v4136 = vmul.f32 %v2905, %v4124
        %v4137 = vmul.f32 %v2906, %v4125
        %v4138 = vmul.f32 %v2907, %v4124
        %v4139 = vmul.f32 %v2908, %v4125
        %v4140 = vmul.f32 %v2909, %v4124
        %v4141 = vmul.f32 %v2910, %v4125
        %v4142 = vmul.f32 %v2911, %v4124
        %v4143 = vmul.f32 %v2912, %v4125
        %v4144 = vmul.f32 %v2913, %v4124
        %v4145 = vmul.f32 %v2914, %v4125
        %v4146 = vmul.f32 %v2915, %v4124
        %v4147 = vmul.f32 %v2916, %v4125
        %v4148 = vmul.f32 %v2917, %v4124
        %v4149 = vmul.f32 %v2918, %v4125
        %v4150 = vmul.f32 %v2919, %v4124
        %v4151 = vmul.f32 %v2920, %v4125
        %v4152 = vmul.f32 %v2921, %v4124
        %v4153 = vmul.f32 %v2922, %v4125
        %v4154 = vmul.f32 %v2923, %v4124
        %v4155 = vmul.f32 %v2924, %v4125
        %v4156 = vmul.f32 %v2925, %v4124
        %v4157 = vmul.f32 %v2926, %v4125
        %v4158 = vmul.f32 %v2927, %v4124
        %v4159 = vmul.f32 %v2928, %v4125
        %v4160 = vadd.f32 %v4128, %v4129
        %4161 = vadd.xlane.f32.xlu0 %v4160
        %v4162 = vpop.xlane.xlu0 %4161
        %v4163 = vadd.f32 %v4130, %v4131
        %4164 = vadd.xlane.f32.xlu0 %v4163
        %v4165 = vpop.xlane.xlu0 %4164
        %v4166 = vadd.f32 %v4132, %v4133
        %4167 = vadd.xlane.f32.xlu0 %v4166
        %v4168 = vpop.xlane.xlu0 %4167
        %v4169 = vadd.f32 %v4134, %v4135
        %4170 = vadd.xlane.f32.xlu0 %v4169
        %v4171 = vpop.xlane.xlu0 %4170
        %v4172 = vadd.f32 %v4136, %v4137
        %4173 = vadd.xlane.f32.xlu0 %v4172
        %v4174 = vpop.xlane.xlu0 %4173
        %v4175 = vadd.f32 %v4138, %v4139
        %4176 = vadd.xlane.f32.xlu0 %v4175
        %v4177 = vpop.xlane.xlu0 %4176
        %v4178 = vadd.f32 %v4140, %v4141
        %4179 = vadd.xlane.f32.xlu0 %v4178
        %v4180 = vpop.xlane.xlu0 %4179
        %v4181 = vadd.f32 %v4142, %v4143
        %4182 = vadd.xlane.f32.xlu0 %v4181
        %v4183 = vpop.xlane.xlu0 %4182
        %v4184 = vadd.f32 %v4144, %v4145
        %4185 = vadd.xlane.f32.xlu0 %v4184
        %v4186 = vpop.xlane.xlu0 %4185
        %v4187 = vadd.f32 %v4146, %v4147
        %4188 = vadd.xlane.f32.xlu0 %v4187
        %v4189 = vpop.xlane.xlu0 %4188
        %v4190 = vadd.f32 %v4148, %v4149
        %4191 = vadd.xlane.f32.xlu0 %v4190
        %v4192 = vpop.xlane.xlu0 %4191
        %v4193 = vadd.f32 %v4150, %v4151
        %4194 = vadd.xlane.f32.xlu0 %v4193
        %v4195 = vpop.xlane.xlu0 %4194
        %v4196 = vadd.f32 %v4152, %v4153
        %4197 = vadd.xlane.f32.xlu0 %v4196
        %v4198 = vpop.xlane.xlu0 %4197
        %v4199 = vadd.f32 %v4154, %v4155
        %4200 = vadd.xlane.f32.xlu0 %v4199
        %v4201 = vpop.xlane.xlu0 %4200
        %v4202 = vadd.f32 %v4156, %v4157
        %4203 = vadd.xlane.f32.xlu0 %v4202
        %v4204 = vpop.xlane.xlu0 %4203
        %v4205 = vadd.f32 %v4158, %v4159
        %4206 = vadd.xlane.f32.xlu0 %v4205
        %v4207 = vpop.xlane.xlu0 %4206
        %s4208 = sld [smem:[#allocation2]]
        %v4209 = vstv %s4208
        %v4210 = vmul.f32 %v1003, %v4209
        %v4211 = vmul.f32 %v1004, %v4209
        %v4212 = vmul.f32 %v1005, %v4209
        %v4213 = vmul.f32 %v1006, %v4209
        %v4214 = vmul.f32 %v1007, %v4209
        %v4215 = vmul.f32 %v1008, %v4209
        %v4216 = vmul.f32 %v1009, %v4209
        %v4217 = vmul.f32 %v1010, %v4209
        %v4218 = vmul.f32 %v1011, %v4209
        %v4219 = vmul.f32 %v1012, %v4209
        %v4220 = vmul.f32 %v1013, %v4209
        %v4221 = vmul.f32 %v1014, %v4209
        %v4222 = vmul.f32 %v1015, %v4209
        %v4223 = vmul.f32 %v1016, %v4209
        %v4224 = vmul.f32 %v1017, %v4209
        %v4225 = vmul.f32 %v1018, %v4209
        %v4226 = vadd.f32 %v4162, %v4210
        %v4227 = vadd.f32 %v4165, %v4211
        %v4228 = vadd.f32 %v4168, %v4212
        %v4229 = vadd.f32 %v4171, %v4213
        %v4230 = vadd.f32 %v4174, %v4214
        %v4231 = vadd.f32 %v4177, %v4215
        %v4232 = vadd.f32 %v4180, %v4216
        %v4233 = vadd.f32 %v4183, %v4217
        %v4234 = vadd.f32 %v4186, %v4218
        %v4235 = vadd.f32 %v4189, %v4219
        %v4236 = vadd.f32 %v4192, %v4220
        %v4237 = vadd.f32 %v4195, %v4221
        %v4238 = vadd.f32 %v4198, %v4222
        %v4239 = vadd.f32 %v4201, %v4223
        %v4240 = vadd.f32 %v4204, %v4224
        %v4241 = vadd.f32 %v4207, %v4225
        %v4242 = vld [vmem:[%s10] sm:$0x1]
        %v4244 = vperm.slane %v4242, 0
        %v4246 = vmul.f32 %v4106, %v4244
        %v4247 = vmul.f32 %v4107, %v4244
        %v4248 = vmul.f32 %v4108, %v4244
        %v4249 = vmul.f32 %v4109, %v4244
        %v4250 = vmul.f32 %v4110, %v4244
        %v4251 = vmul.f32 %v4111, %v4244
        %v4252 = vmul.f32 %v4112, %v4244
        %v4253 = vmul.f32 %v4113, %v4244
        %v4254 = vmul.f32 %v4114, %v4244
        %v4255 = vmul.f32 %v4115, %v4244
        %v4256 = vmul.f32 %v4116, %v4244
        %v4257 = vmul.f32 %v4117, %v4244
        %v4258 = vmul.f32 %v4118, %v4244
        %v4259 = vmul.f32 %v4119, %v4244
        %v4260 = vmul.f32 %v4120, %v4244
        %v4261 = vmul.f32 %v4121, %v4244
        %vm4262 = vcmask 261120
        %v4263 = vsel %vm4262, %v4246, 0.0
        %4264 = vadd.xlane.f32.xlu0 %v4263
        %v4265 = vpop.xlane.xlu0 %4264
        %v4266 = vsel %vm4262, %v4247, 0.0
        %4267 = vadd.xlane.f32.xlu0 %v4266
        %v4268 = vpop.xlane.xlu0 %4267
        %v4269 = vsel %vm4262, %v4248, 0.0
        %4270 = vadd.xlane.f32.xlu0 %v4269
        %v4271 = vpop.xlane.xlu0 %4270
        %v4272 = vsel %vm4262, %v4249, 0.0
        %4273 = vadd.xlane.f32.xlu0 %v4272
        %v4274 = vpop.xlane.xlu0 %4273
        %v4275 = vsel %vm4262, %v4250, 0.0
        %4276 = vadd.xlane.f32.xlu0 %v4275
        %v4277 = vpop.xlane.xlu0 %4276
        %v4278 = vsel %vm4262, %v4251, 0.0
        %4279 = vadd.xlane.f32.xlu0 %v4278
        %v4280 = vpop.xlane.xlu0 %4279
        %v4281 = vsel %vm4262, %v4252, 0.0
        %4282 = vadd.xlane.f32.xlu0 %v4281
        %v4283 = vpop.xlane.xlu0 %4282
        %v4284 = vsel %vm4262, %v4253, 0.0
        %4285 = vadd.xlane.f32.xlu0 %v4284
        %v4286 = vpop.xlane.xlu0 %4285
        %v4287 = vsel %vm4262, %v4254, 0.0
        %4288 = vadd.xlane.f32.xlu0 %v4287
        %v4289 = vpop.xlane.xlu0 %4288
        %v4290 = vsel %vm4262, %v4255, 0.0
        %4291 = vadd.xlane.f32.xlu0 %v4290
        %v4292 = vpop.xlane.xlu0 %4291
        %v4293 = vsel %vm4262, %v4256, 0.0
        %4294 = vadd.xlane.f32.xlu0 %v4293
        %v4295 = vpop.xlane.xlu0 %4294
        %v4296 = vsel %vm4262, %v4257, 0.0
        %4297 = vadd.xlane.f32.xlu0 %v4296
        %v4298 = vpop.xlane.xlu0 %4297
        %v4299 = vsel %vm4262, %v4258, 0.0
        %4300 = vadd.xlane.f32.xlu0 %v4299
        %v4301 = vpop.xlane.xlu0 %4300
        %v4302 = vsel %vm4262, %v4259, 0.0
        %4303 = vadd.xlane.f32.xlu0 %v4302
        %v4304 = vpop.xlane.xlu0 %4303
        %v4305 = vsel %vm4262, %v4260, 0.0
        %4306 = vadd.xlane.f32.xlu0 %v4305
        %v4307 = vpop.xlane.xlu0 %4306
        %v4308 = vsel %vm4262, %v4261, 0.0
        %4309 = vadd.xlane.f32.xlu0 %v4308
        %v4310 = vpop.xlane.xlu0 %4309
        %v4311 = vadd.f32 %v4226, %v4265
        %v4312 = vadd.f32 %v4227, %v4268
        %v4313 = vadd.f32 %v4228, %v4271
        %v4314 = vadd.f32 %v4229, %v4274
        %v4315 = vadd.f32 %v4230, %v4277
        %v4316 = vadd.f32 %v4231, %v4280
        %v4317 = vadd.f32 %v4232, %v4283
        %v4318 = vadd.f32 %v4233, %v4286
        %v4319 = vadd.f32 %v4234, %v4289
        %v4320 = vadd.f32 %v4235, %v4292
        %v4321 = vadd.f32 %v4236, %v4295
        %v4322 = vadd.f32 %v4237, %v4298
        %v4323 = vadd.f32 %v4238, %v4301
        %v4324 = vadd.f32 %v4239, %v4304
        %v4325 = vadd.f32 %v4240, %v4307
        %v4326 = vadd.f32 %v4241, %v4310
        %s4327 = sld [smem:[#allocation3]]
        %v4328 = vstv %s4327
        %v4329 = vadd.f32 %v4311, %v4328
        %v4330 = vadd.f32 %v4312, %v4328
        %v4331 = vadd.f32 %v4313, %v4328
        %v4332 = vadd.f32 %v4314, %v4328
        %v4333 = vadd.f32 %v4315, %v4328
        %v4334 = vadd.f32 %v4316, %v4328
        %v4335 = vadd.f32 %v4317, %v4328
        %v4336 = vadd.f32 %v4318, %v4328
        %v4337 = vadd.f32 %v4319, %v4328
        %v4338 = vadd.f32 %v4320, %v4328
        %v4339 = vadd.f32 %v4321, %v4328
        %v4340 = vadd.f32 %v4322, %v4328
        %v4341 = vadd.f32 %v4323, %v4328
        %v4342 = vadd.f32 %v4324, %v4328
        %v4343 = vadd.f32 %v4325, %v4328
        %v4344 = vadd.f32 %v4326, %v4328
        %v4345 = vxor.u32 %v4329, 2147483648
        %v4346 = vxor.u32 %v4330, 2147483648
        %v4347 = vxor.u32 %v4331, 2147483648
        %v4348 = vxor.u32 %v4332, 2147483648
        %v4349 = vxor.u32 %v4333, 2147483648
        %v4350 = vxor.u32 %v4334, 2147483648
        %v4351 = vxor.u32 %v4335, 2147483648
        %v4352 = vxor.u32 %v4336, 2147483648
        %v4353 = vxor.u32 %v4337, 2147483648
        %v4354 = vxor.u32 %v4338, 2147483648
        %v4355 = vxor.u32 %v4339, 2147483648
        %v4356 = vxor.u32 %v4340, 2147483648
        %v4357 = vxor.u32 %v4341, 2147483648
        %v4358 = vxor.u32 %v4342, 2147483648
        %v4359 = vxor.u32 %v4343, 2147483648
        %v4360 = vxor.u32 %v4344, 2147483648
        %v4361 = vmul.f32 %v4345, 1.442695
        %v4362 = vpow.pop %v4361
        %v4363 = vmul.f32 %v4346, 1.442695
        %v4364 = vpow.pop %v4363
        %v4365 = vmul.f32 %v4347, 1.442695
        %v4366 = vpow.pop %v4365
        %v4367 = vmul.f32 %v4348, 1.442695
        %v4368 = vpow.pop %v4367
        %v4369 = vmul.f32 %v4349, 1.442695
        %v4370 = vpow.pop %v4369
        %v4371 = vmul.f32 %v4350, 1.442695
        %v4372 = vpow.pop %v4371
        %v4373 = vmul.f32 %v4351, 1.442695
        %v4374 = vpow.pop %v4373
        %v4375 = vmul.f32 %v4352, 1.442695
        %v4376 = vpow.pop %v4375
        %v4377 = vmul.f32 %v4353, 1.442695
        %v4378 = vpow.pop %v4377
        %v4379 = vmul.f32 %v4354, 1.442695
        %v4380 = vpow.pop %v4379
        %v4381 = vmul.f32 %v4355, 1.442695
        %v4382 = vpow.pop %v4381
        %v4383 = vmul.f32 %v4356, 1.442695
        %v4384 = vpow.pop %v4383
        %v4385 = vmul.f32 %v4357, 1.442695
        %v4386 = vpow.pop %v4385
        %v4387 = vmul.f32 %v4358, 1.442695
        %v4388 = vpow.pop %v4387
        %v4389 = vmul.f32 %v4359, 1.442695
        %v4390 = vpow.pop %v4389
        %v4391 = vmul.f32 %v4360, 1.442695
        %v4392 = vpow.pop %v4391
        %v4393 = vadd.f32 %v4362, 1.0
        %v4394 = vadd.f32 %v4364, 1.0
        %v4395 = vadd.f32 %v4366, 1.0
        %v4396 = vadd.f32 %v4368, 1.0
        %v4397 = vadd.f32 %v4370, 1.0
        %v4398 = vadd.f32 %v4372, 1.0
        %v4399 = vadd.f32 %v4374, 1.0
        %v4400 = vadd.f32 %v4376, 1.0
        %v4401 = vadd.f32 %v4378, 1.0
        %v4402 = vadd.f32 %v4380, 1.0
        %v4403 = vadd.f32 %v4382, 1.0
        %v4404 = vadd.f32 %v4384, 1.0
        %v4405 = vadd.f32 %v4386, 1.0
        %v4406 = vadd.f32 %v4388, 1.0
        %v4407 = vadd.f32 %v4390, 1.0
        %v4408 = vadd.f32 %v4392, 1.0
        %v4409 = vrcp.pop %v4393
        %v4410 = vmul.f32 %v4393, %v4409
        %v4411 = vsub.f32 1.0, %v4410
        %v4412 = vmul.f32 %v4409, %v4411
        %v4413 = vadd.f32 %v4409, %v4412
        %vm4414 = vweird.f32 %v4393
        %vm4415 = vweird.f32 %v4409
        %vm4416 = vmor %vm4414, %vm4415
        %v4417 = vsel %vm4416, %v4409, %v4413
        %v4418 = vand.u32 2147483647, %v4393
        %vm4419 = vcmp.eq.f32.partialorder %v4418, 8.507059e+37
        %v4420 = vand.u32 %v4393, 2147483648
        %v4421 = vor.u32 1.1754944e-38, %v4420
        %v4422 = vsel %vm4419, %v4421, %v4417
        %v4423 = vmul.f32 1.0, %v4422
        %v4424 = vrcp.pop %v4394
        %v4425 = vmul.f32 %v4394, %v4424
        %v4426 = vsub.f32 1.0, %v4425
        %v4427 = vmul.f32 %v4424, %v4426
        %v4428 = vadd.f32 %v4424, %v4427
        %vm4429 = vweird.f32 %v4394
        %vm4430 = vweird.f32 %v4424
        %vm4431 = vmor %vm4429, %vm4430
        %v4432 = vsel %vm4431, %v4424, %v4428
        %v4433 = vand.u32 2147483647, %v4394
        %vm4434 = vcmp.eq.f32.partialorder %v4433, 8.507059e+37
        %v4435 = vand.u32 %v4394, 2147483648
        %v4436 = vor.u32 1.1754944e-38, %v4435
        %v4437 = vsel %vm4434, %v4436, %v4432
        %v4438 = vmul.f32 1.0, %v4437
        %v4439 = vrcp.pop %v4395
        %v4440 = vmul.f32 %v4395, %v4439
        %v4441 = vsub.f32 1.0, %v4440
        %v4442 = vmul.f32 %v4439, %v4441
        %v4443 = vadd.f32 %v4439, %v4442
        %vm4444 = vweird.f32 %v4395
        %vm4445 = vweird.f32 %v4439
        %vm4446 = vmor %vm4444, %vm4445
        %v4447 = vsel %vm4446, %v4439, %v4443
        %v4448 = vand.u32 2147483647, %v4395
        %vm4449 = vcmp.eq.f32.partialorder %v4448, 8.507059e+37
        %v4450 = vand.u32 %v4395, 2147483648
        %v4451 = vor.u32 1.1754944e-38, %v4450
        %v4452 = vsel %vm4449, %v4451, %v4447
        %v4453 = vmul.f32 1.0, %v4452
        %v4454 = vrcp.pop %v4396
        %v4455 = vmul.f32 %v4396, %v4454
        %v4456 = vsub.f32 1.0, %v4455
        %v4457 = vmul.f32 %v4454, %v4456
        %v4458 = vadd.f32 %v4454, %v4457
        %vm4459 = vweird.f32 %v4396
        %vm4460 = vweird.f32 %v4454
        %vm4461 = vmor %vm4459, %vm4460
        %v4462 = vsel %vm4461, %v4454, %v4458
        %v4463 = vand.u32 2147483647, %v4396
        %vm4464 = vcmp.eq.f32.partialorder %v4463, 8.507059e+37
        %v4465 = vand.u32 %v4396, 2147483648
        %v4466 = vor.u32 1.1754944e-38, %v4465
        %v4467 = vsel %vm4464, %v4466, %v4462
        %v4468 = vmul.f32 1.0, %v4467
        %v4469 = vrcp.pop %v4397
        %v4470 = vmul.f32 %v4397, %v4469
        %v4471 = vsub.f32 1.0, %v4470
        %v4472 = vmul.f32 %v4469, %v4471
        %v4473 = vadd.f32 %v4469, %v4472
        %vm4474 = vweird.f32 %v4397
        %vm4475 = vweird.f32 %v4469
        %vm4476 = vmor %vm4474, %vm4475
        %v4477 = vsel %vm4476, %v4469, %v4473
        %v4478 = vand.u32 2147483647, %v4397
        %vm4479 = vcmp.eq.f32.partialorder %v4478, 8.507059e+37
        %v4480 = vand.u32 %v4397, 2147483648
        %v4481 = vor.u32 1.1754944e-38, %v4480
        %v4482 = vsel %vm4479, %v4481, %v4477
        %v4483 = vmul.f32 1.0, %v4482
        %v4484 = vrcp.pop %v4398
        %v4485 = vmul.f32 %v4398, %v4484
        %v4486 = vsub.f32 1.0, %v4485
        %v4487 = vmul.f32 %v4484, %v4486
        %v4488 = vadd.f32 %v4484, %v4487
        %vm4489 = vweird.f32 %v4398
        %vm4490 = vweird.f32 %v4484
        %vm4491 = vmor %vm4489, %vm4490
        %v4492 = vsel %vm4491, %v4484, %v4488
        %v4493 = vand.u32 2147483647, %v4398
        %vm4494 = vcmp.eq.f32.partialorder %v4493, 8.507059e+37
        %v4495 = vand.u32 %v4398, 2147483648
        %v4496 = vor.u32 1.1754944e-38, %v4495
        %v4497 = vsel %vm4494, %v4496, %v4492
        %v4498 = vmul.f32 1.0, %v4497
        %v4499 = vrcp.pop %v4399
        %v4500 = vmul.f32 %v4399, %v4499
        %v4501 = vsub.f32 1.0, %v4500
        %v4502 = vmul.f32 %v4499, %v4501
        %v4503 = vadd.f32 %v4499, %v4502
        %vm4504 = vweird.f32 %v4399
        %vm4505 = vweird.f32 %v4499
        %vm4506 = vmor %vm4504, %vm4505
        %v4507 = vsel %vm4506, %v4499, %v4503
        %v4508 = vand.u32 2147483647, %v4399
        %vm4509 = vcmp.eq.f32.partialorder %v4508, 8.507059e+37
        %v4510 = vand.u32 %v4399, 2147483648
        %v4511 = vor.u32 1.1754944e-38, %v4510
        %v4512 = vsel %vm4509, %v4511, %v4507
        %v4513 = vmul.f32 1.0, %v4512
        %v4514 = vrcp.pop %v4400
        %v4515 = vmul.f32 %v4400, %v4514
        %v4516 = vsub.f32 1.0, %v4515
        %v4517 = vmul.f32 %v4514, %v4516
        %v4518 = vadd.f32 %v4514, %v4517
        %vm4519 = vweird.f32 %v4400
        %vm4520 = vweird.f32 %v4514
        %vm4521 = vmor %vm4519, %vm4520
        %v4522 = vsel %vm4521, %v4514, %v4518
        %v4523 = vand.u32 2147483647, %v4400
        %vm4524 = vcmp.eq.f32.partialorder %v4523, 8.507059e+37
        %v4525 = vand.u32 %v4400, 2147483648
        %v4526 = vor.u32 1.1754944e-38, %v4525
        %v4527 = vsel %vm4524, %v4526, %v4522
        %v4528 = vmul.f32 1.0, %v4527
        %v4529 = vrcp.pop %v4401
        %v4530 = vmul.f32 %v4401, %v4529
        %v4531 = vsub.f32 1.0, %v4530
        %v4532 = vmul.f32 %v4529, %v4531
        %v4533 = vadd.f32 %v4529, %v4532
        %vm4534 = vweird.f32 %v4401
        %vm4535 = vweird.f32 %v4529
        %vm4536 = vmor %vm4534, %vm4535
        %v4537 = vsel %vm4536, %v4529, %v4533
        %v4538 = vand.u32 2147483647, %v4401
        %vm4539 = vcmp.eq.f32.partialorder %v4538, 8.507059e+37
        %v4540 = vand.u32 %v4401, 2147483648
        %v4541 = vor.u32 1.1754944e-38, %v4540
        %v4542 = vsel %vm4539, %v4541, %v4537
        %v4543 = vmul.f32 1.0, %v4542
        %v4544 = vrcp.pop %v4402
        %v4545 = vmul.f32 %v4402, %v4544
        %v4546 = vsub.f32 1.0, %v4545
        %v4547 = vmul.f32 %v4544, %v4546
        %v4548 = vadd.f32 %v4544, %v4547
        %vm4549 = vweird.f32 %v4402
        %vm4550 = vweird.f32 %v4544
        %vm4551 = vmor %vm4549, %vm4550
        %v4552 = vsel %vm4551, %v4544, %v4548
        %v4553 = vand.u32 2147483647, %v4402
        %vm4554 = vcmp.eq.f32.partialorder %v4553, 8.507059e+37
        %v4555 = vand.u32 %v4402, 2147483648
        %v4556 = vor.u32 1.1754944e-38, %v4555
        %v4557 = vsel %vm4554, %v4556, %v4552
        %v4558 = vmul.f32 1.0, %v4557
        %v4559 = vrcp.pop %v4403
        %v4560 = vmul.f32 %v4403, %v4559
        %v4561 = vsub.f32 1.0, %v4560
        %v4562 = vmul.f32 %v4559, %v4561
        %v4563 = vadd.f32 %v4559, %v4562
        %vm4564 = vweird.f32 %v4403
        %vm4565 = vweird.f32 %v4559
        %vm4566 = vmor %vm4564, %vm4565
        %v4567 = vsel %vm4566, %v4559, %v4563
        %v4568 = vand.u32 2147483647, %v4403
        %vm4569 = vcmp.eq.f32.partialorder %v4568, 8.507059e+37
        %v4570 = vand.u32 %v4403, 2147483648
        %v4571 = vor.u32 1.1754944e-38, %v4570
        %v4572 = vsel %vm4569, %v4571, %v4567
        %v4573 = vmul.f32 1.0, %v4572
        %v4574 = vrcp.pop %v4404
        %v4575 = vmul.f32 %v4404, %v4574
        %v4576 = vsub.f32 1.0, %v4575
        %v4577 = vmul.f32 %v4574, %v4576
        %v4578 = vadd.f32 %v4574, %v4577
        %vm4579 = vweird.f32 %v4404
        %vm4580 = vweird.f32 %v4574
        %vm4581 = vmor %vm4579, %vm4580
        %v4582 = vsel %vm4581, %v4574, %v4578
        %v4583 = vand.u32 2147483647, %v4404
        %vm4584 = vcmp.eq.f32.partialorder %v4583, 8.507059e+37
        %v4585 = vand.u32 %v4404, 2147483648
        %v4586 = vor.u32 1.1754944e-38, %v4585
        %v4587 = vsel %vm4584, %v4586, %v4582
        %v4588 = vmul.f32 1.0, %v4587
        %v4589 = vrcp.pop %v4405
        %v4590 = vmul.f32 %v4405, %v4589
        %v4591 = vsub.f32 1.0, %v4590
        %v4592 = vmul.f32 %v4589, %v4591
        %v4593 = vadd.f32 %v4589, %v4592
        %vm4594 = vweird.f32 %v4405
        %vm4595 = vweird.f32 %v4589
        %vm4596 = vmor %vm4594, %vm4595
        %v4597 = vsel %vm4596, %v4589, %v4593
        %v4598 = vand.u32 2147483647, %v4405
        %vm4599 = vcmp.eq.f32.partialorder %v4598, 8.507059e+37
        %v4600 = vand.u32 %v4405, 2147483648
        %v4601 = vor.u32 1.1754944e-38, %v4600
        %v4602 = vsel %vm4599, %v4601, %v4597
        %v4603 = vmul.f32 1.0, %v4602
        %v4604 = vrcp.pop %v4406
        %v4605 = vmul.f32 %v4406, %v4604
        %v4606 = vsub.f32 1.0, %v4605
        %v4607 = vmul.f32 %v4604, %v4606
        %v4608 = vadd.f32 %v4604, %v4607
        %vm4609 = vweird.f32 %v4406
        %vm4610 = vweird.f32 %v4604
        %vm4611 = vmor %vm4609, %vm4610
        %v4612 = vsel %vm4611, %v4604, %v4608
        %v4613 = vand.u32 2147483647, %v4406
        %vm4614 = vcmp.eq.f32.partialorder %v4613, 8.507059e+37
        %v4615 = vand.u32 %v4406, 2147483648
        %v4616 = vor.u32 1.1754944e-38, %v4615
        %v4617 = vsel %vm4614, %v4616, %v4612
        %v4618 = vmul.f32 1.0, %v4617
        %v4619 = vrcp.pop %v4407
        %v4620 = vmul.f32 %v4407, %v4619
        %v4621 = vsub.f32 1.0, %v4620
        %v4622 = vmul.f32 %v4619, %v4621
        %v4623 = vadd.f32 %v4619, %v4622
        %vm4624 = vweird.f32 %v4407
        %vm4625 = vweird.f32 %v4619
        %vm4626 = vmor %vm4624, %vm4625
        %v4627 = vsel %vm4626, %v4619, %v4623
        %v4628 = vand.u32 2147483647, %v4407
        %vm4629 = vcmp.eq.f32.partialorder %v4628, 8.507059e+37
        %v4630 = vand.u32 %v4407, 2147483648
        %v4631 = vor.u32 1.1754944e-38, %v4630
        %v4632 = vsel %vm4629, %v4631, %v4627
        %v4633 = vmul.f32 1.0, %v4632
        %v4634 = vrcp.pop %v4408
        %v4635 = vmul.f32 %v4408, %v4634
        %v4636 = vsub.f32 1.0, %v4635
        %v4637 = vmul.f32 %v4634, %v4636
        %v4638 = vadd.f32 %v4634, %v4637
        %vm4639 = vweird.f32 %v4408
        %vm4640 = vweird.f32 %v4634
        %vm4641 = vmor %vm4639, %vm4640
        %v4642 = vsel %vm4641, %v4634, %v4638
        %v4643 = vand.u32 2147483647, %v4408
        %vm4644 = vcmp.eq.f32.partialorder %v4643, 8.507059e+37
        %v4645 = vand.u32 %v4408, 2147483648
        %v4646 = vor.u32 1.1754944e-38, %v4645
        %v4647 = vsel %vm4644, %v4646, %v4642
        %v4648 = vmul.f32 1.0, %v4647
        %vm4649 = vcmask 7168
        %4650 = vst.msk [vmem:[%s503] sm:$0xff] %vm4649, %v4423
        %4651 = vst.msk [vmem:[%s503 + $0x8] sm:$0xff] %vm4649, %v4438
        %4652 = vst.msk [vmem:[%s503 + $0x10] sm:$0xff] %vm4649, %v4453
        %4653 = vst.msk [vmem:[%s503 + $0x18] sm:$0xff] %vm4649, %v4468
        %4654 = vst.msk [vmem:[%s503 + $0x20] sm:$0xff] %vm4649, %v4483
        %4655 = vst.msk [vmem:[%s503 + $0x28] sm:$0xff] %vm4649, %v4498
        %4656 = vst.msk [vmem:[%s503 + $0x30] sm:$0xff] %vm4649, %v4513
        %4657 = vst.msk [vmem:[%s503 + $0x38] sm:$0xff] %vm4649, %v4528
        %4658 = vst.msk [vmem:[%s503 + $0x40] sm:$0xff] %vm4649, %v4543
        %4659 = vst.msk [vmem:[%s503 + $0x48] sm:$0xff] %vm4649, %v4558
        %4660 = vst.msk [vmem:[%s503 + $0x50] sm:$0xff] %vm4649, %v4573
        %4661 = vst.msk [vmem:[%s503 + $0x58] sm:$0xff] %vm4649, %v4588
        %4662 = vst.msk [vmem:[%s503 + $0x60] sm:$0xff] %vm4649, %v4603
        %4663 = vst.msk [vmem:[%s503 + $0x68] sm:$0xff] %vm4649, %v4618
        %4664 = vst.msk [vmem:[%s503 + $0x70] sm:$0xff] %vm4649, %v4633
        %4665 = vst.msk [vmem:[%s503 + $0x78] sm:$0xff] %vm4649, %v4648
        %s4666 = smul.u32 16, %s28
        %p4667 = scmp.lt.s32.totalorder %s4666, 31
        %s4668 = scalar_select %p4667, %s4666, 31
        %s4669 = smul.addr %s4668, 8
        %s4670 = scalar_lea.vmem %s13, %s4669
        // Predicated region
        $region81: #{tpu_custom_call.1} parent=71 // pred_check
          %p4671 = pneg %p329
        $region82: #{tpu_custom_call.1} parent=71 // pred_check_branch
          %4673 = sbr.rel (%p4671) target = $region84
        $region83: #{tpu_custom_call.1} parent=71 // pred_region
          %s4674 = smul.u32 16, %s28
        $region84: #{tpu_custom_call.1} parent=71 // pred_fallthru
          _
      $region72: #{tpu_custom_call.1} parent=5 // pred_fallthru
        _
      %p4675 = scmp.le.s32.totalorder 2, %s23
      // Predicated region
      $region85: #{tpu_custom_call.1} parent=5 // pred_check
        %p4676 = pneg %p4675
      $region86: #{tpu_custom_call.1} parent=5 // pred_check_branch
        %4678 = sbr.rel (%p4676) target = $region88
      $region87: #{tpu_custom_call.1} parent=5 // pred_region
        %s4679 = ssub.s32 %s23, 2
        // Predicated region
        $region89: #{tpu_custom_call.1} parent=87 // pred_check
          %p4680 = pneg %p335
        $region90: #{tpu_custom_call.1} parent=87 // pred_check_branch
          %4682 = sbr.rel (%p4680) target = $region92
        $region91: #{tpu_custom_call.1} parent=87 // pred_region
          %s4683 = smul.u32 16, %s29
          %p4684 = scmp.lt.s32.totalorder %s4683, 31
          %s4685 = scalar_select %p4684, %s4683, 31
          %s4686 = smul.addr %s4685, 8
          %s4687 = scalar_lea.vmem %s13, %s4686
        $region92: #{tpu_custom_call.1} parent=87 // pred_fallthru
          _
      $region88: #{tpu_custom_call.1} parent=5 // pred_fallthru
        _
    $region6: #{tpu_custom_call.1} parent=1 // loop_footer
      %s27 = sadd.s32 1, %s23
    $region7: #{tpu_custom_call.1} parent=1 // loop_footer_branch
      %22 = sbr.rel target = $region3
    $region8: #{tpu_custom_call.1} parent=1 // loop_exit
      _
    %4688 = vsyncpa [#allocation5], 1
    %s4689 = scalar_lea.sflag [#allocation5], 1
    %4690 = vsyncpa %s4689, 1
    %4691 = vsyncpa [#allocation7], 1

</llo_original>
